<compile_context>
chip_gen: v7x
topology: tpu7x:2x2x1
jax: 0.10.0
libtpu: 0.0.40
codegen_flags: <defaults>
</compile_context>

<pallas_src>
import functools

import jax
import jax.numpy as jnp
from jax import lax
from jax.experimental import pallas as pl
from jax.experimental.pallas import tpu as pltpu

_MASK = -1e30  # finite "-inf" so padded rows never produce inf-inf NaNs


def clam_mb_kernel(h_ref, w1_ref, b1_ref, wab_ref, bab_ref, wct_ref, bct_ref,
                   wbagt_ref, bbagt_ref,
                   araw_ref, logits_ref, yprob_ref, m_ref,
                   m_sc, l_sc, macc_sc,
                   *, n_valid, tile_n, dim_d):
    i = pl.program_id(0)

    @pl.when(i == 0)
    def _init():
        m_sc[...] = jnp.full(m_sc.shape, -jnp.inf, jnp.float32)
        l_sc[...] = jnp.zeros(l_sc.shape, jnp.float32)
        macc_sc[...] = jnp.zeros(macc_sc.shape, jnp.float32)

    # ---- per-tile projections (bf16 MXU inputs, f32 accumulation) -----------
    h_bf = h_ref[...].astype(jnp.bfloat16)                              # [tN, E]
    h1 = jnp.dot(h_bf, w1_ref[...],
                 preferred_element_type=jnp.float32) + b1_ref[...]
    h1 = jnp.maximum(h1, 0.0)                                           # [tN, H1] f32

    # fused gated attention: one [H1, 2D] matmul, split into tanh / sigmoid
    ab = jnp.dot(h1.astype(jnp.bfloat16), wab_ref[...],
                 preferred_element_type=jnp.float32) + bab_ref[...]     # [tN, 2D]
    a = jnp.tanh(ab[:, :dim_d])
    b = jax.nn.sigmoid(ab[:, dim_d:])
    gated = (a * b).astype(jnp.bfloat16)                                # [tN, D]

    # attention logits directly in lane-dense [C, tN] layout:
    #   attn_t[c, n] = sum_d wc[d, c] * gated[n, d] + bc[c]
    attn_t = lax.dot_general(
        wct_ref[...], gated,
        dimension_numbers=(((1,), (1,)), ((), ())),
        preferred_element_type=jnp.float32) + bct_ref[...]              # [C, tN]

    araw_ref[...] = attn_t       # pre-softmax attention, unmasked, lane-dense

    # mask padded instances so they do not contribute to the softmax
    col = i * tile_n + lax.broadcasted_iota(jnp.int32, (1, tile_n), 1)
    attn_t = jnp.where(col < n_valid, attn_t, _MASK)

    # ---- online softmax over the instance axis (flash-style) ----------------
    m_old = m_sc[...]                                                   # [C, 1]
    m_new = jnp.maximum(m_old, jnp.max(attn_t, axis=1, keepdims=True))  # [C, 1]
    corr = jnp.exp(m_old - m_new)                                       # [C, 1]
    p = jnp.exp(attn_t - m_new)                                         # [C, tN]
    l_sc[...] = corr * l_sc[...] + jnp.sum(p, axis=1, keepdims=True)
    macc_sc[...] = corr * macc_sc[...] + jnp.dot(
        p, h1, preferred_element_type=jnp.float32)                      # [C, H1]
    m_sc[...] = m_new

    # ---- epilogue: bag features, per-class bag classifiers, softmax ---------
    @pl.when(i == pl.num_programs(0) - 1)
    def _finalize():
        m_bag = macc_sc[...] * (1.0 / l_sc[...])                        # [C, H1]
        m_ref[...] = m_bag
        # logits[c] = M[c] . wbag[:, c] + bbag[c]   (column layout [C, 1])
        lg = jnp.sum(m_bag * wbagt_ref[...], axis=1,
                     keepdims=True) + bbagt_ref[...]                    # [C, 1]
        logits_ref[...] = lg
        lmax = jnp.max(lg, axis=0, keepdims=True)
        le = jnp.exp(lg - lmax)
        yprob_ref[...] = le / jnp.sum(le, axis=0, keepdims=True)


def clam_mb_forward(h, params, tile_n=1024):
    assert tile_n % 128 == 0, "tile_n must be a multiple of 128"
    N, E = h.shape
    H1 = params['w1'].shape[1]
    D = params['wa'].shape[1]
    C = params['wc'].shape[1]

    n_pad = pl.cdiv(N, tile_n) * tile_n
    if n_pad != N:
        h = jnp.pad(h, ((0, n_pad - N), (0, 0)))
    grid = (n_pad // tile_n,)

    # Fuse gate projections, pre-transpose the tiny class-major tensors, and
    # store the big matmul weights as bf16 (f32 accumulation in-kernel).
    wab = jnp.concatenate([params['wa'], params['wb']], axis=1)          # [H1, 2D]
    bab = jnp.concatenate([params['ba'], params['bb']], axis=1)          # [1, 2D]
    w1_bf = params['w1'].astype(jnp.bfloat16)                            # [E, H1]
    wab_bf = wab.astype(jnp.bfloat16)
    wct_bf = params['wc'].T.astype(jnp.bfloat16)                         # [C, D]
    bc_t = params['bc'].T                                                # [C, 1]
    wbag_t = params['wbag'].T                                            # [C, H1]
    bbag_t = params['bbag'].T                                            # [C, 1]

    const = lambda i: (0, 0)
    in_specs = [
        pl.BlockSpec((tile_n, E), lambda i: (i, 0)),   # h (streamed per tile)
        pl.BlockSpec((E, H1), const),                  # w1        (resident)
        pl.BlockSpec((1, H1), const),                  # b1
        pl.BlockSpec((H1, 2 * D), const),              # wab (fused)
        pl.BlockSpec((1, 2 * D), const),               # bab
        pl.BlockSpec((C, D), const),                   # wc^T
        pl.BlockSpec((C, 1), const),                   # bc^T
        pl.BlockSpec((C, H1), const),                  # wbag^T
        pl.BlockSpec((C, 1), const),                   # bbag^T
    ]
    out_specs = (
        pl.BlockSpec((C, tile_n), lambda i: (0, i)),   # A_raw, lane-dense [C, N]
        pl.BlockSpec((C, 1), const),                   # logits (column)
        pl.BlockSpec((C, 1), const),                   # Y_prob (column)
        pl.BlockSpec((C, H1), const),                  # M bag features
    )
    out_shapes = (
        jax.ShapeDtypeStruct((C, n_pad), jnp.float32),
        jax.ShapeDtypeStruct((C, 1), jnp.float32),
        jax.ShapeDtypeStruct((C, 1), jnp.float32),
        jax.ShapeDtypeStruct((C, H1), jnp.float32),
    )

    kernel = functools.partial(clam_mb_kernel, n_valid=N, tile_n=tile_n, dim_d=D)
    araw_pad, logits_col, yprob_col, M = pl.pallas_call(
        kernel,
        out_shape=out_shapes,
        grid_spec=pltpu.PrefetchScalarGridSpec(
            num_scalar_prefetch=0,
            grid=grid,
            in_specs=in_specs,
            out_specs=out_specs,
            scratch_shapes=[pltpu.VMEM((C, 1), jnp.float32),    # running max
                            pltpu.VMEM((C, 1), jnp.float32),    # running sum
                            pltpu.VMEM((C, H1), jnp.float32)],  # M accumulator
        ),
        compiler_params=pltpu.CompilerParams(
            dimension_semantics=("arbitrary",)),
    )(h, w1_bf, params['b1'], wab_bf, bab, wct_bf, bc_t, wbag_t, bbag_t)

    A_raw = araw_pad[:, :N]                                   # [C, N]
    logits = logits_col.T                                     # [1, C]
    Y_prob = yprob_col.T                                      # [1, C]
    Y_hat = jnp.argmax(logits, axis=1, keepdims=True)         # torch.topk(logits,1)[1]
    results_dict = {'features': M}
    return logits, Y_prob, Y_hat, A_raw, results_dict


def init_params(key, embed_dim=256, H1=512, D=256, C=2):
    """Deterministic PyTorch-Linear-style init (U[-1/sqrt(fan_in), 1/sqrt(fan_in)])."""
    def lin(k, fin, fout):
        bound = 1.0 / float(fin) ** 0.5
        kw, kb = jax.random.split(k)
        w = jax.random.uniform(kw, (fin, fout), jnp.float32, -bound, bound)
        b = jax.random.uniform(kb, (1, fout), jnp.float32, -bound, bound)
        return w, b

    ks = jax.random.split(key, 4 + C)
    w1, b1 = lin(ks[0], embed_dim, H1)
    wa, ba = lin(ks[1], H1, D)
    wb, bb = lin(ks[2], H1, D)
    wc, bc = lin(ks[3], D, C)
    wbag_cols, bbag_cols = [], []
    for c in range(C):                     # n_classes separate Linear(H1, 1) bag classifiers
        w, b = lin(ks[4 + c], H1, 1)
        wbag_cols.append(w)
        bbag_cols.append(b)
    wbag = jnp.concatenate(wbag_cols, axis=1)   # [H1, C]
    bbag = jnp.concatenate(bbag_cols, axis=1)   # [1, C]
    return dict(w1=w1, b1=b1, wa=wa, ba=ba, wb=wb, bb=bb,
                wc=wc, bc=bc, wbag=wbag, bbag=bbag)


def reference_forward(h, p, bf16_matmuls=False):
    """Pure-JAX reference mirroring the PyTorch forward.

    With bf16_matmuls=True the big matmul inputs are cast to bf16 (f32 accum),
    mirroring the kernel's MXU precision exactly.
    """
    def mm(x, w):
        if bf16_matmuls:
            return jnp.dot(x.astype(jnp.bfloat16), w.astype(jnp.bfloat16),
                           preferred_element_type=jnp.float32)
        return jnp.dot(x, w, preferred_element_type=jnp.float32)

    h1 = jnp.maximum(mm(h, p['w1']) + p['b1'], 0.0)
    a = jnp.tanh(mm(h1, p['wa']) + p['ba'])
    b = jax.nn.sigmoid(mm(h1, p['wb']) + p['bb'])
    A = mm(a * b, p['wc']) + p['bc']
    A_raw = A.T
    A_soft = jax.nn.softmax(A_raw, axis=1)
    M = jnp.dot(A_soft, h1, preferred_element_type=jnp.float32)
    logits = jnp.sum(M * p['wbag'].T, axis=1)[None, :] + p['bbag']
    Y_prob = jax.nn.softmax(logits, axis=1)
    Y_hat = jnp.argmax(logits, axis=1, keepdims=True)
    return logits, Y_prob, Y_hat, A_raw, M


if __name__ == "__main__":
    key = jax.random.PRNGKey(0)
    k_h, k_p = jax.random.split(key)

    # small but multi-tile: 1000 instances -> padded to 1024, 4 grid steps @ 256
    N, embed_dim, n_classes = 1000, 256, 2
    h = jax.random.normal(k_h, (N, embed_dim), jnp.float32)
    params = init_params(k_p, embed_dim=embed_dim, H1=512, D=256, C=n_classes)

    logits, y_prob, y_hat, a_raw, results = jax.block_until_ready(
        clam_mb_forward(h, params, tile_n=256))

    # exact-math mirror (bf16 matmul inputs, f32 accumulation) — tight tolerance
    b_logits, b_prob, b_hat, b_araw, b_M = reference_forward(h, params, bf16_matmuls=True)
    assert jnp.allclose(logits, b_logits, atol=2e-3, rtol=2e-3)
    assert jnp.allclose(y_prob, b_prob, atol=2e-3, rtol=2e-3)
    assert jnp.allclose(a_raw, b_araw, atol=2e-3, rtol=2e-3)
    assert jnp.allclose(results['features'], b_M, atol=2e-3, rtol=2e-3)
    assert jnp.array_equal(y_hat, b_hat)

    # full-precision reference — loose tolerance (bf16 MXU inputs)
    r_logits, r_prob, _, r_araw, r_M = reference_forward(h, params, bf16_matmuls=False)
    assert jnp.allclose(logits, r_logits, atol=5e-2, rtol=5e-2)
    assert jnp.allclose(y_prob, r_prob, atol=5e-2, rtol=5e-2)
    assert jnp.allclose(a_raw, r_araw, atol=5e-2, rtol=5e-2)
    assert jnp.allclose(results['features'], r_M, atol=5e-2, rtol=5e-2)

    print("KERNEL_OK")
</pallas_src>

<mosaic_0001>
module attributes {stable_mosaic.version = 11 : i64} {
  func.func @clam_mb_kernel(%arg0: i32, %arg1: memref<256x256xf32, #tpu.memory_space<vmem>>, %arg2: memref<256x512xbf16, #tpu.memory_space<vmem>>, %arg3: memref<1x512xf32, #tpu.memory_space<vmem>>, %arg4: memref<512x512xbf16, #tpu.memory_space<vmem>>, %arg5: memref<1x512xf32, #tpu.memory_space<vmem>>, %arg6: memref<2x256xbf16, #tpu.memory_space<vmem>>, %arg7: memref<2x1xf32, #tpu.memory_space<vmem>>, %arg8: memref<2x512xf32, #tpu.memory_space<vmem>>, %arg9: memref<2x1xf32, #tpu.memory_space<vmem>>, %arg10: memref<2x256xf32, #tpu.memory_space<vmem>>, %arg11: memref<2x1xf32, #tpu.memory_space<vmem>>, %arg12: memref<2x1xf32, #tpu.memory_space<vmem>>, %arg13: memref<2x512xf32, #tpu.memory_space<vmem>>, %arg14: memref<2x1xf32, #tpu.memory_space<vmem>>, %arg15: memref<2x1xf32, #tpu.memory_space<vmem>>, %arg16: memref<2x512xf32, #tpu.memory_space<vmem>>) attributes {dimension_semantics = [#tpu.dimension_semantics<arbitrary>], iteration_bounds = array<i64: 4>, scalar_prefetch = 0 : i64, scratch_operands = 3 : i64, tpu.core_type = #tpu.core_type<tc>, window_params = [{transform_indices = @transform_0, window_bounds = array<i64: 256, 256>}, {pipeline_mode = #tpu.pipeline_mode<synchronous>, transform_indices = @transform_1, window_bounds = array<i64: 256, 512>}, {pipeline_mode = #tpu.pipeline_mode<synchronous>, transform_indices = @transform_2, window_bounds = array<i64: 1, 512>}, {pipeline_mode = #tpu.pipeline_mode<synchronous>, transform_indices = @transform_3, window_bounds = array<i64: 512, 512>}, {pipeline_mode = #tpu.pipeline_mode<synchronous>, transform_indices = @transform_4, window_bounds = array<i64: 1, 512>}, {pipeline_mode = #tpu.pipeline_mode<synchronous>, transform_indices = @transform_5, window_bounds = array<i64: 2, 256>}, {pipeline_mode = #tpu.pipeline_mode<synchronous>, transform_indices = @transform_6, window_bounds = array<i64: 2, 1>}, {pipeline_mode = #tpu.pipeline_mode<synchronous>, transform_indices = @transform_7, window_bounds = array<i64: 2, 512>}, {pipeline_mode = #tpu.pipeline_mode<synchronous>, transform_indices = @transform_8, window_bounds = array<i64: 2, 1>}, {transform_indices = @transform_9, window_bounds = array<i64: 2, 256>}, {pipeline_mode = #tpu.pipeline_mode<synchronous>, transform_indices = @transform_10, window_bounds = array<i64: 2, 1>}, {pipeline_mode = #tpu.pipeline_mode<synchronous>, transform_indices = @transform_11, window_bounds = array<i64: 2, 1>}, {pipeline_mode = #tpu.pipeline_mode<synchronous>, transform_indices = @transform_12, window_bounds = array<i64: 2, 512>}]} {
    %c0_i32 = arith.constant 0 : i32
    %0 = arith.cmpi eq, %arg0, %c0_i32 : i32
    %1 = arith.extui %0 : i1 to i32
    %c0_i32_0 = arith.constant 0 : i32
    %2 = arith.cmpi ne, %1, %c0_i32_0 : i32
    scf.if %2 {
      %cst_37 = arith.constant 0xFF800000 : f32
      %69 = vector.broadcast %cst_37 : f32 to vector<2x1xf32>
      %c0_38 = arith.constant 0 : index
      %c0_39 = arith.constant 0 : index
      %70 = vector.load %arg14[%c0_38, %c0_39] : memref<2x1xf32, #tpu.memory_space<vmem>>, vector<2x1xf32>
      tpu.vector_store %arg14[%c0_38, %c0_39], %69 {strides = array<i32>} : memref<2x1xf32, #tpu.memory_space<vmem>>, vector<2x1xf32>,
      %cst_40 = arith.constant 0.000000e+00 : f32
      %71 = vector.broadcast %cst_40 : f32 to vector<2x1xf32>
      %c0_41 = arith.constant 0 : index
      %c0_42 = arith.constant 0 : index
      %72 = vector.load %arg15[%c0_41, %c0_42] : memref<2x1xf32, #tpu.memory_space<vmem>>, vector<2x1xf32>
      tpu.vector_store %arg15[%c0_41, %c0_42], %71 {strides = array<i32>} : memref<2x1xf32, #tpu.memory_space<vmem>>, vector<2x1xf32>,
      %cst_43 = arith.constant 0.000000e+00 : f32
      %73 = vector.broadcast %cst_43 : f32 to vector<2x512xf32>
      %c0_44 = arith.constant 0 : index
      %c0_45 = arith.constant 0 : index
      %74 = vector.load %arg16[%c0_44, %c0_45] : memref<2x512xf32, #tpu.memory_space<vmem>>, vector<2x512xf32>
      tpu.vector_store %arg16[%c0_44, %c0_45], %73 {strides = array<i32>} : memref<2x512xf32, #tpu.memory_space<vmem>>, vector<2x512xf32>,
    } else {
    }
    %c0 = arith.constant 0 : index
    %c0_1 = arith.constant 0 : index
    %3 = vector.load %arg1[%c0, %c0_1] : memref<256x256xf32, #tpu.memory_space<vmem>>, vector<256x256xf32>
    %4 = arith.truncf %3 : vector<256x256xf32> to vector<256x256xbf16>
    %c0_2 = arith.constant 0 : index
    %c0_3 = arith.constant 0 : index
    %5 = vector.load %arg2[%c0_2, %c0_3] : memref<256x512xbf16, #tpu.memory_space<vmem>>, vector<256x512xbf16>
    %cst = arith.constant dense<0.000000e+00> : vector<256x512xf32>
    %6 = tpu.matmul %4, %5, %cst {dimension_numbers = #tpu.dot_dimension_numbers<[1], [0], [0], [1], [0, 0, 1, 1], [], []>} : vector<256x256xbf16>, vector<256x512xbf16>, vector<256x512xf32> -> vector<256x512xf32>
    %c0_4 = arith.constant 0 : index
    %c0_5 = arith.constant 0 : index
    %7 = vector.load %arg3[%c0_4, %c0_5] : memref<1x512xf32, #tpu.memory_space<vmem>>, vector<1x512xf32>
    %8 = vector.broadcast %7 : vector<1x512xf32> to vector<256x512xf32>
    %9 = arith.addf %6, %8 : vector<256x512xf32>
    %cst_6 = arith.constant 0.000000e+00 : f32
    %10 = vector.broadcast %cst_6 : f32 to vector<256x512xf32>
    %11 = arith.maximumf %9, %10 : vector<256x512xf32>
    %12 = arith.truncf %11 : vector<256x512xf32> to vector<256x512xbf16>
    %c0_7 = arith.constant 0 : index
    %c0_8 = arith.constant 0 : index
    %13 = vector.load %arg4[%c0_7, %c0_8] : memref<512x512xbf16, #tpu.memory_space<vmem>>, vector<512x512xbf16>
    %cst_9 = arith.constant dense<0.000000e+00> : vector<256x512xf32>
    %14 = tpu.matmul %12, %13, %cst_9 {dimension_numbers = #tpu.dot_dimension_numbers<[1], [0], [0], [1], [0, 0, 1, 1], [], []>} : vector<256x512xbf16>, vector<512x512xbf16>, vector<256x512xf32> -> vector<256x512xf32>
    %c0_10 = arith.constant 0 : index
    %c0_11 = arith.constant 0 : index
    %15 = vector.load %arg5[%c0_10, %c0_11] : memref<1x512xf32, #tpu.memory_space<vmem>>, vector<1x512xf32>
    %16 = vector.broadcast %15 : vector<1x512xf32> to vector<256x512xf32>
    %17 = arith.addf %14, %16 : vector<256x512xf32>
    %18 = vector.extract_strided_slice %17 {offsets = [0, 0], sizes = [256, 256], strides = [1, 1]} : vector<256x512xf32> to vector<256x256xf32>
    %19 = math.tanh %18 : vector<256x256xf32>
    %20 = vector.extract_strided_slice %17 {offsets = [0, 256], sizes = [256, 256], strides = [1, 1]} : vector<256x512xf32> to vector<256x256xf32>
    %21 = arith.negf %20 : vector<256x256xf32>
    %22 = math.exp %21 : vector<256x256xf32>
    %cst_12 = arith.constant 1.000000e+00 : f32
    %23 = vector.broadcast %cst_12 : f32 to vector<256x256xf32>
    %24 = arith.addf %23, %22 : vector<256x256xf32>
    %25 = arith.divf %23, %24 : vector<256x256xf32>
    %26 = arith.mulf %19, %25 : vector<256x256xf32>
    %27 = arith.truncf %26 : vector<256x256xf32> to vector<256x256xbf16>
    %c0_13 = arith.constant 0 : index
    %c0_14 = arith.constant 0 : index
    %28 = vector.load %arg6[%c0_13, %c0_14] : memref<2x256xbf16, #tpu.memory_space<vmem>>, vector<2x256xbf16>
    %cst_15 = arith.constant dense<0.000000e+00> : vector<2x256xf32>
    %29 = tpu.matmul %28, %27, %cst_15 {dimension_numbers = #tpu.dot_dimension_numbers<[1], [1], [0], [0], [0, 0, 1, 0], [], []>} : vector<2x256xbf16>, vector<256x256xbf16>, vector<2x256xf32> -> vector<2x256xf32>
    %c0_16 = arith.constant 0 : index
    %c0_17 = arith.constant 0 : index
    %30 = vector.load %arg7[%c0_16, %c0_17] : memref<2x1xf32, #tpu.memory_space<vmem>>, vector<2x1xf32>
    %31 = vector.broadcast %30 : vector<2x1xf32> to vector<2x256xf32>
    %32 = arith.addf %29, %31 : vector<2x256xf32>
    %c0_18 = arith.constant 0 : index
    %c0_19 = arith.constant 0 : index
    %33 = vector.load %arg10[%c0_18, %c0_19] : memref<2x256xf32, #tpu.memory_space<vmem>>, vector<2x256xf32>
    tpu.vector_store %arg10[%c0_18, %c0_19], %32 {strides = array<i32>} : memref<2x256xf32, #tpu.memory_space<vmem>>, vector<2x256xf32>,
    %c256_i32 = arith.constant 256 : i32
    %34 = arith.muli %arg0, %c256_i32 : i32
    %35 = tpu.iota {dimensions = array<i32: 1>} : vector<1x256xi32>
    %36 = vector.broadcast %34 : i32 to vector<1x256xi32>
    %37 = arith.addi %36, %35 : vector<1x256xi32>
    %c1000_i32 = arith.constant 1000 : i32
    %38 = vector.broadcast %c1000_i32 : i32 to vector<1x256xi32>
    %39 = arith.cmpi slt, %37, %38 : vector<1x256xi32>
    %cst_20 = arith.constant -1.000000e+30 : f32
    %40 = vector.shape_cast %39 : vector<1x256xi1> to vector<1x256xi1>
    %41 = vector.broadcast %40 : vector<1x256xi1> to vector<2x256xi1>
    %42 = vector.broadcast %cst_20 : f32 to vector<2x256xf32>
    %43 = arith.select %41, %32, %42 : vector<2x256xi1>, vector<2x256xf32>
    %c0_21 = arith.constant 0 : index
    %c0_22 = arith.constant 0 : index
    %44 = vector.load %arg14[%c0_21, %c0_22] : memref<2x1xf32, #tpu.memory_space<vmem>>, vector<2x1xf32>
    %cst_23 = arith.constant dense<0xFF800000> : vector<2xf32>
    %45 = vector.multi_reduction <maximumf>, %43, %cst_23 [1] : vector<2x256xf32> to vector<2xf32>
    %46 = vector.shape_cast %45 : vector<2xf32> to vector<2x1xf32>
    %47 = arith.maximumf %44, %46 : vector<2x1xf32>
    %48 = arith.subf %44, %47 : vector<2x1xf32>
    %49 = math.exp %48 : vector<2x1xf32>
    %50 = vector.broadcast %47 : vector<2x1xf32> to vector<2x256xf32>
    %51 = arith.subf %43, %50 : vector<2x256xf32>
    %52 = math.exp %51 : vector<2x256xf32>
    %c0_24 = arith.constant 0 : index
    %c0_25 = arith.constant 0 : index
    %53 = vector.load %arg15[%c0_24, %c0_25] : memref<2x1xf32, #tpu.memory_space<vmem>>, vector<2x1xf32>
    %54 = arith.mulf %49, %53 : vector<2x1xf32>
    %cst_26 = arith.constant dense<0.000000e+00> : vector<2xf32>
    %55 = vector.multi_reduction <add>, %52, %cst_26 [1] : vector<2x256xf32> to vector<2xf32>
    %56 = vector.shape_cast %55 : vector<2xf32> to vector<2x1xf32>
    %57 = arith.addf %54, %56 : vector<2x1xf32>
    %c0_27 = arith.constant 0 : index
    %c0_28 = arith.constant 0 : index
    %58 = vector.load %arg15[%c0_27, %c0_28] : memref<2x1xf32, #tpu.memory_space<vmem>>, vector<2x1xf32>
    tpu.vector_store %arg15[%c0_27, %c0_28], %57 {strides = array<i32>} : memref<2x1xf32, #tpu.memory_space<vmem>>, vector<2x1xf32>,
    %c0_29 = arith.constant 0 : index
    %c0_30 = arith.constant 0 : index
    %59 = vector.load %arg16[%c0_29, %c0_30] : memref<2x512xf32, #tpu.memory_space<vmem>>, vector<2x512xf32>
    %60 = vector.broadcast %49 : vector<2x1xf32> to vector<2x512xf32>
    %61 = arith.mulf %60, %59 : vector<2x512xf32>
    %cst_31 = arith.constant dense<0.000000e+00> : vector<2x512xf32>
    %62 = tpu.matmul %52, %11, %cst_31 {dimension_numbers = #tpu.dot_dimension_numbers<[1], [0], [0], [1], [0, 0, 1, 1], [], []>} : vector<2x256xf32>, vector<256x512xf32>, vector<2x512xf32> -> vector<2x512xf32>
    %63 = arith.addf %61, %62 : vector<2x512xf32>
    %c0_32 = arith.constant 0 : index
    %c0_33 = arith.constant 0 : index
    %64 = vector.load %arg16[%c0_32, %c0_33] : memref<2x512xf32, #tpu.memory_space<vmem>>, vector<2x512xf32>
    tpu.vector_store %arg16[%c0_32, %c0_33], %63 {strides = array<i32>} : memref<2x512xf32, #tpu.memory_space<vmem>>, vector<2x512xf32>,
    %c0_34 = arith.constant 0 : index
    %c0_35 = arith.constant 0 : index
    %65 = vector.load %arg14[%c0_34, %c0_35] : memref<2x1xf32, #tpu.memory_space<vmem>>, vector<2x1xf32>
    tpu.vector_store %arg14[%c0_34, %c0_35], %47 {strides = array<i32>} : memref<2x1xf32, #tpu.memory_space<vmem>>, vector<2x1xf32>,
    %c3_i32 = arith.constant 3 : i32
    %66 = arith.cmpi eq, %arg0, %c3_i32 : i32
    %67 = arith.extui %66 : i1 to i32
    %c0_i32_36 = arith.constant 0 : i32
    %68 = arith.cmpi ne, %67, %c0_i32_36 : i32
    scf.if %68 {
      %c0_37 = arith.constant 0 : index
      %c0_38 = arith.constant 0 : index
      %69 = vector.load %arg16[%c0_37, %c0_38] : memref<2x512xf32, #tpu.memory_space<vmem>>, vector<2x512xf32>
      %c0_39 = arith.constant 0 : index
      %c0_40 = arith.constant 0 : index
      %70 = vector.load %arg15[%c0_39, %c0_40] : memref<2x1xf32, #tpu.memory_space<vmem>>, vector<2x1xf32>
      %cst_41 = arith.constant 1.000000e+00 : f32
      %71 = vector.broadcast %cst_41 : f32 to vector<2x1xf32>
      %72 = arith.divf %71, %70 : vector<2x1xf32>
      %73 = vector.broadcast %72 : vector<2x1xf32> to vector<2x512xf32>
      %74 = arith.mulf %69, %73 : vector<2x512xf32>
      %c0_42 = arith.constant 0 : index
      %c0_43 = arith.constant 0 : index
      %75 = vector.load %arg13[%c0_42, %c0_43] : memref<2x512xf32, #tpu.memory_space<vmem>>, vector<2x512xf32>
      tpu.vector_store %arg13[%c0_42, %c0_43], %74 {strides = array<i32>} : memref<2x512xf32, #tpu.memory_space<vmem>>, vector<2x512xf32>,
      %c0_44 = arith.constant 0 : index
      %c0_45 = arith.constant 0 : index
      %76 = vector.load %arg8[%c0_44, %c0_45] : memref<2x512xf32, #tpu.memory_space<vmem>>, vector<2x512xf32>
      %77 = arith.mulf %74, %76 : vector<2x512xf32>
      %cst_46 = arith.constant dense<0.000000e+00> : vector<2xf32>
      %78 = vector.multi_reduction <add>, %77, %cst_46 [1] : vector<2x512xf32> to vector<2xf32>
      %79 = vector.shape_cast %78 : vector<2xf32> to vector<2x1xf32>
      %c0_47 = arith.constant 0 : index
      %c0_48 = arith.constant 0 : index
      %80 = vector.load %arg9[%c0_47, %c0_48] : memref<2x1xf32, #tpu.memory_space<vmem>>, vector<2x1xf32>
      %81 = arith.addf %79, %80 : vector<2x1xf32>
      %c0_49 = arith.constant 0 : index
      %c0_50 = arith.constant 0 : index
      %82 = vector.load %arg11[%c0_49, %c0_50] : memref<2x1xf32, #tpu.memory_space<vmem>>, vector<2x1xf32>
      tpu.vector_store %arg11[%c0_49, %c0_50], %81 {strides = array<i32>} : memref<2x1xf32, #tpu.memory_space<vmem>>, vector<2x1xf32>,
      %cst_51 = arith.constant dense<0xFF800000> : vector<1xf32>
      %83 = vector.multi_reduction <maximumf>, %81, %cst_51 [0] : vector<2x1xf32> to vector<1xf32>
      %84 = vector.shape_cast %83 : vector<1xf32> to vector<1x1xf32>
      %85 = vector.broadcast %84 : vector<1x1xf32> to vector<2x1xf32>
      %86 = arith.subf %81, %85 : vector<2x1xf32>
      %87 = math.exp %86 : vector<2x1xf32>
      %cst_52 = arith.constant dense<0.000000e+00> : vector<1xf32>
      %88 = vector.multi_reduction <add>, %87, %cst_52 [0] : vector<2x1xf32> to vector<1xf32>
      %89 = vector.shape_cast %88 : vector<1xf32> to vector<1x1xf32>
      %90 = vector.broadcast %89 : vector<1x1xf32> to vector<2x1xf32>
      %91 = arith.divf %87, %90 : vector<2x1xf32>
      %c0_53 = arith.constant 0 : index
      %c0_54 = arith.constant 0 : index
      %92 = vector.load %arg12[%c0_53, %c0_54] : memref<2x1xf32, #tpu.memory_space<vmem>>, vector<2x1xf32>
      tpu.vector_store %arg12[%c0_53, %c0_54], %91 {strides = array<i32>} : memref<2x1xf32, #tpu.memory_space<vmem>>, vector<2x1xf32>,
    } else {
    }
    return
  }
  func.func @transform_0(%arg0: i32) -> (i32, i32) {
    %c0_i32 = arith.constant 0 : i32
    %c0_i32_0 = arith.constant 0 : i32
    return %arg0, %c0_i32 : i32, i32
  }
  func.func @transform_1(%arg0: i32) -> (i32, i32) {
    %c0_i32 = arith.constant 0 : i32
    %c0_i32_0 = arith.constant 0 : i32
    %c0_i32_1 = arith.constant 0 : i32
    return %c0_i32, %c0_i32_0 : i32, i32
  }
  func.func @transform_2(%arg0: i32) -> (i32, i32) {
    %c0_i32 = arith.constant 0 : i32
    %c0_i32_0 = arith.constant 0 : i32
    %c0_i32_1 = arith.constant 0 : i32
    return %c0_i32, %c0_i32_0 : i32, i32
  }
  func.func @transform_3(%arg0: i32) -> (i32, i32) {
    %c0_i32 = arith.constant 0 : i32
    %c0_i32_0 = arith.constant 0 : i32
    %c0_i32_1 = arith.constant 0 : i32
    return %c0_i32, %c0_i32_0 : i32, i32
  }
  func.func @transform_4(%arg0: i32) -> (i32, i32) {
    %c0_i32 = arith.constant 0 : i32
    %c0_i32_0 = arith.constant 0 : i32
    %c0_i32_1 = arith.constant 0 : i32
    return %c0_i32, %c0_i32_0 : i32, i32
  }
  func.func @transform_5(%arg0: i32) -> (i32, i32) {
    %c0_i32 = arith.constant 0 : i32
    %c0_i32_0 = arith.constant 0 : i32
    %c0_i32_1 = arith.constant 0 : i32
    return %c0_i32, %c0_i32_0 : i32, i32
  }
  func.func @transform_6(%arg0: i32) -> (i32, i32) {
    %c0_i32 = arith.constant 0 : i32
    %c0_i32_0 = arith.constant 0 : i32
    %c0_i32_1 = arith.constant 0 : i32
    return %c0_i32, %c0_i32_0 : i32, i32
  }
  func.func @transform_7(%arg0: i32) -> (i32, i32) {
    %c0_i32 = arith.constant 0 : i32
    %c0_i32_0 = arith.constant 0 : i32
    %c0_i32_1 = arith.constant 0 : i32
    return %c0_i32, %c0_i32_0 : i32, i32
  }
  func.func @transform_8(%arg0: i32) -> (i32, i32) {
    %c0_i32 = arith.constant 0 : i32
    %c0_i32_0 = arith.constant 0 : i32
    %c0_i32_1 = arith.constant 0 : i32
    return %c0_i32, %c0_i32_0 : i32, i32
  }
  func.func @transform_9(%arg0: i32) -> (i32, i32) {
    %c0_i32 = arith.constant 0 : i32
    %c0_i32_0 = arith.constant 0 : i32
    return %c0_i32, %arg0 : i32, i32
  }
  func.func @transform_10(%arg0: i32) -> (i32, i32) {
    %c0_i32 = arith.constant 0 : i32
    %c0_i32_0 = arith.constant 0 : i32
    %c0_i32_1 = arith.constant 0 : i32
    return %c0_i32, %c0_i32_0 : i32, i32
  }
  func.func @transform_11(%arg0: i32) -> (i32, i32) {
    %c0_i32 = arith.constant 0 : i32
    %c0_i32_0 = arith.constant 0 : i32
    %c0_i32_1 = arith.constant 0 : i32
    return %c0_i32, %c0_i32_0 : i32, i32
  }
  func.func @transform_12(%arg0: i32) -> (i32, i32) {
    %c0_i32 = arith.constant 0 : i32
    %c0_i32_0 = arith.constant 0 : i32
    %c0_i32_1 = arith.constant 0 : i32
    return %c0_i32, %c0_i32_0 : i32, i32
  }
}

</mosaic_0001>

<llo_original>
// kernel: tpu_custom_call.1
$region0: #{tpu_custom_call.1}
  #allocation0 [shape = 'u32[]', space=smem, size = 0x4, offset = 0x4, fixed_abs, tag = 'smem constant byte address 0x4 - core index']
  #allocation1 [shape = 'u32[144,128]{1,0:T(1,128)}', space=vmem, size = 0x12000, scoped, tag = 'internal scratch']
  #allocation2 [shape = 'f32[2,1]{1,0:T(2,128)}', space=vmem, size = 0x400, scoped, tag = 'scratch operand']
  #allocation3 [shape = 'f32[2,1]{1,0:T(2,128)}', space=vmem, size = 0x400, scoped, tag = 'scratch operand']
  #allocation4 [shape = 'f32[2,512]{1,0:T(2,128)}', space=vmem, size = 0x1000, scoped, tag = 'scratch operand']
  %s0 = inlined_call_operand.hbm [shape: f32[1024,256], index: 0, kind: input, shape index: {}]
  %s1 = inlined_call_operand.hbm [shape: bf16[256,512], index: 1, kind: input, shape index: {}]
  %s2 = inlined_call_operand.vmem [shape: f32[1,512], index: 2, kind: input, shape index: {}]
  %s3 = inlined_call_operand.hbm [shape: bf16[512,512], index: 3, kind: input, shape index: {}]
  %s4 = inlined_call_operand.vmem [shape: f32[1,512], index: 4, kind: input, shape index: {}]
  %s5 = inlined_call_operand.vmem [shape: bf16[2,256], index: 5, kind: input, shape index: {}]
  %s6 = inlined_call_operand.vmem [shape: f32[2,1], index: 6, kind: input, shape index: {}]
  %s7 = inlined_call_operand.vmem [shape: f32[2,512], index: 7, kind: input, shape index: {}]
  %s8 = inlined_call_operand.vmem [shape: f32[2,1], index: 8, kind: input, shape index: {}]
  %s9 = inlined_call_operand.hbm [shape: f32[2,1024], index: 9, kind: output, shape index: {0}]
  %s10 = inlined_call_operand.vmem [shape: f32[2,1], index: 10, kind: output, shape index: {1}]
  %s11 = inlined_call_operand.vmem [shape: f32[2,1], index: 11, kind: output, shape index: {2}]
  %s12 = inlined_call_operand.hbm [shape: f32[2,512], index: 12, kind: output, shape index: {3}]
  %13 = xla_tuple %s9, %s10, %s11, %s12
  %s14 = sld [smem:[#allocation0]]
  $region113: #{tpu_custom_call.1} parent=0
    _
  %s16 = ssub.s32 1, %s14
  %s17 = scalar_select 0, %s16, %s14
  $region1: #{tpu_custom_call.1} parent=0
    #allocation5 [shape = 'u8[524288]{0}', space=vmem, size = 0x80000, scoped, tag = 'input window, operand 0']
    #allocation6 [shape = 's32[2]{0}', space=sflag, size = 0x8, scoped, tag = 'scoped memory for tpu_custom_call.1']
    #allocation7 [shape = 's32[2]{0}', space=sflag, size = 0x8, scoped, tag = 'scoped memory for tpu_custom_call.1']
    #allocation8 [shape = 'u8[262144]{0}', space=vmem, size = 0x40000, scoped, tag = 'input window, operand 1, single buffered']
    #allocation9 [shape = 's32[1]{0}', space=sflag, size = 0x4, scoped, tag = 'scoped memory for tpu_custom_call.1']
    #allocation10 [shape = 'u8[524288]{0}', space=vmem, size = 0x80000, scoped, tag = 'input window, operand 3, single buffered']
    #allocation11 [shape = 'u8[4096]{0}', space=vmem, size = 0x1000, scoped, tag = 'output window, operand 0']
    #allocation12 [shape = 'u8[4096]{0}', space=vmem, size = 0x1000, scoped, tag = 'output window, operand 3, single buffered']
    #allocation13 [shape = 's32[1]{0}', space=sflag, size = 0x4, scoped, tag = 'scoped memory for tpu_custom_call.1']
    %18 = vsyncpa [#allocation6], 0
    %s19 = scalar_lea.sflag [#allocation6], 1
    %20 = vsyncpa %s19, 0
    %21 = vsyncpa [#allocation9], 0
    %22 = vsyncpa [#allocation7], 0
    %s23 = scalar_lea.sflag [#allocation7], 1
    %24 = vsyncpa %s23, 0
    %25 = vsyncpa [#allocation13], 0
    loop: start=0, step=1, limit=6
    $region2: #{tpu_custom_call.1} parent=1 // loop_pre_header
      _
    $region3: #{tpu_custom_call.1} parent=1 // loop_header
      %s27 = sphi 0, %s31
      %p28 = scmp.ge.s32.totalorder %s27, 6
      %s37 = sphi 0, %s39
      %s40 = sphi 0, %s37
      %s41 = sphi 0, %s40
      %s57 = sphi 0, %s41
      %s61 = sphi 0, %s61
      %s63 = sphi 0, %s61
      %s64 = sphi 0, %s63
      %s78 = sphi 0, %s64
      %s82 = sphi 0, %s82
      %s84 = sphi 0, %s82
      %s85 = sphi 0, %s84
      %s99 = sphi 0, %s85
      %s103 = sphi 0, %s103
      %s105 = sphi 0, %s103
      %s106 = sphi 0, %s105
      %s120 = sphi 0, %s106
      %s124 = sphi 0, %s124
      %s126 = sphi 0, %s124
      %s127 = sphi 0, %s126
      %s141 = sphi 0, %s127
      %s145 = sphi 0, %s145
      %s147 = sphi 0, %s145
      %s148 = sphi 0, %s147
      %s162 = sphi 0, %s148
      %s166 = sphi 0, %s166
      %s168 = sphi 0, %s166
      %s169 = sphi 0, %s168
      %s183 = sphi 0, %s169
      %s187 = sphi 0, %s187
      %s189 = sphi 0, %s187
      %s190 = sphi 0, %s189
      %s204 = sphi 0, %s190
      %s208 = sphi 0, %s208
      %s210 = sphi 0, %s208
      %s211 = sphi 0, %s210
      %s225 = sphi 0, %s211
      %s231 = sphi 0, %s233
      %s234 = sphi 0, %s231
      %s235 = sphi 0, %s234
      %s251 = sphi 0, %s235
      %s255 = sphi 0, %s255
      %s257 = sphi 0, %s255
      %s258 = sphi 0, %s257
      %s272 = sphi 0, %s258
      %s276 = sphi 0, %s276
      %s278 = sphi 0, %s276
      %s279 = sphi 0, %s278
      %s293 = sphi 0, %s279
      %s297 = sphi 0, %s297
      %s299 = sphi 0, %s297
      %s300 = sphi 0, %s299
      %s314 = sphi 0, %s300
    $region4: #{tpu_custom_call.1} parent=1 // loop_header_branch
      %30 = sbr.rel (%p28) target = $region8
    $region5: #{tpu_custom_call.1} parent=1 // loop_body
      %s32 = ssub.s32 %s27, 1
      %s33 = ssub.s32 %s27, 2
      %s34 = sadd.s32 %s27, 1
      %s35 = ssub.s32 %s27, %s34
      %p36 = scmp.eq.s32.totalorder %s35, 0
      %s38 = sadd.s32 %s37, 1
      %s39 = scalar_select %p36, %s37, %s38
      %p42 = pneg %p36
      %p43 = scmp.eq.s32.totalorder %s27, 3
      %p44 = por %p42, %p43
      %p45 = scmp.ne.s32.totalorder %s37, %s40
      %p46 = scmp.eq.s32.totalorder %s27, 0
      %p47 = por %p45, %p46
      %p48 = scmp.ne.s32.totalorder %s37, %s40
      %p49 = scmp.eq.s32.totalorder %s32, 3
      %p50 = por %p48, %p49
      %p51 = scmp.ne.s32.totalorder %s40, %s41
      %p52 = scmp.eq.s32.totalorder %s32, 0
      %p53 = por %p51, %p52
      %p54 = scmp.ne.s32.totalorder %s40, %s41
      %p55 = scmp.eq.s32.totalorder %s33, 3
      %p56 = por %p54, %p55
      %p58 = scmp.ne.s32.totalorder %s41, %s57
      %p59 = scmp.eq.s32.totalorder %s33, 0
      %p60 = por %p58, %p59
      %s62 = sadd.s32 %s61, 1
      %p65 = scmp.eq.s32.totalorder %s27, 3
      %p66 = scmp.ne.s32.totalorder %s61, %s63
      %p67 = scmp.eq.s32.totalorder %s27, 0
      %p68 = por %p66, %p67
      %p69 = scmp.ne.s32.totalorder %s61, %s63
      %p70 = scmp.eq.s32.totalorder %s32, 3
      %p71 = por %p69, %p70
      %p72 = scmp.ne.s32.totalorder %s63, %s64
      %p73 = scmp.eq.s32.totalorder %s32, 0
      %p74 = por %p72, %p73
      %p75 = scmp.ne.s32.totalorder %s63, %s64
      %p76 = scmp.eq.s32.totalorder %s33, 3
      %p77 = por %p75, %p76
      %p79 = scmp.ne.s32.totalorder %s64, %s78
      %p80 = scmp.eq.s32.totalorder %s33, 0
      %p81 = por %p79, %p80
      %s83 = sadd.s32 %s82, 1
      %p86 = scmp.eq.s32.totalorder %s27, 3
      %p87 = scmp.ne.s32.totalorder %s82, %s84
      %p88 = scmp.eq.s32.totalorder %s27, 0
      %p89 = por %p87, %p88
      %p90 = scmp.ne.s32.totalorder %s82, %s84
      %p91 = scmp.eq.s32.totalorder %s32, 3
      %p92 = por %p90, %p91
      %p93 = scmp.ne.s32.totalorder %s84, %s85
      %p94 = scmp.eq.s32.totalorder %s32, 0
      %p95 = por %p93, %p94
      %p96 = scmp.ne.s32.totalorder %s84, %s85
      %p97 = scmp.eq.s32.totalorder %s33, 3
      %p98 = por %p96, %p97
      %p100 = scmp.ne.s32.totalorder %s85, %s99
      %p101 = scmp.eq.s32.totalorder %s33, 0
      %p102 = por %p100, %p101
      %s104 = sadd.s32 %s103, 1
      %p107 = scmp.eq.s32.totalorder %s27, 3
      %p108 = scmp.ne.s32.totalorder %s103, %s105
      %p109 = scmp.eq.s32.totalorder %s27, 0
      %p110 = por %p108, %p109
      %p111 = scmp.ne.s32.totalorder %s103, %s105
      %p112 = scmp.eq.s32.totalorder %s32, 3
      %p113 = por %p111, %p112
      %p114 = scmp.ne.s32.totalorder %s105, %s106
      %p115 = scmp.eq.s32.totalorder %s32, 0
      %p116 = por %p114, %p115
      %p117 = scmp.ne.s32.totalorder %s105, %s106
      %p118 = scmp.eq.s32.totalorder %s33, 3
      %p119 = por %p117, %p118
      %p121 = scmp.ne.s32.totalorder %s106, %s120
      %p122 = scmp.eq.s32.totalorder %s33, 0
      %p123 = por %p121, %p122
      %s125 = sadd.s32 %s124, 1
      %p128 = scmp.eq.s32.totalorder %s27, 3
      %p129 = scmp.ne.s32.totalorder %s124, %s126
      %p130 = scmp.eq.s32.totalorder %s27, 0
      %p131 = por %p129, %p130
      %p132 = scmp.ne.s32.totalorder %s124, %s126
      %p133 = scmp.eq.s32.totalorder %s32, 3
      %p134 = por %p132, %p133
      %p135 = scmp.ne.s32.totalorder %s126, %s127
      %p136 = scmp.eq.s32.totalorder %s32, 0
      %p137 = por %p135, %p136
      %p138 = scmp.ne.s32.totalorder %s126, %s127
      %p139 = scmp.eq.s32.totalorder %s33, 3
      %p140 = por %p138, %p139
      %p142 = scmp.ne.s32.totalorder %s127, %s141
      %p143 = scmp.eq.s32.totalorder %s33, 0
      %p144 = por %p142, %p143
      %s146 = sadd.s32 %s145, 1
      %p149 = scmp.eq.s32.totalorder %s27, 3
      %p150 = scmp.ne.s32.totalorder %s145, %s147
      %p151 = scmp.eq.s32.totalorder %s27, 0
      %p152 = por %p150, %p151
      %p153 = scmp.ne.s32.totalorder %s145, %s147
      %p154 = scmp.eq.s32.totalorder %s32, 3
      %p155 = por %p153, %p154
      %p156 = scmp.ne.s32.totalorder %s147, %s148
      %p157 = scmp.eq.s32.totalorder %s32, 0
      %p158 = por %p156, %p157
      %p159 = scmp.ne.s32.totalorder %s147, %s148
      %p160 = scmp.eq.s32.totalorder %s33, 3
      %p161 = por %p159, %p160
      %p163 = scmp.ne.s32.totalorder %s148, %s162
      %p164 = scmp.eq.s32.totalorder %s33, 0
      %p165 = por %p163, %p164
      %s167 = sadd.s32 %s166, 1
      %p170 = scmp.eq.s32.totalorder %s27, 3
      %p171 = scmp.ne.s32.totalorder %s166, %s168
      %p172 = scmp.eq.s32.totalorder %s27, 0
      %p173 = por %p171, %p172
      %p174 = scmp.ne.s32.totalorder %s166, %s168
      %p175 = scmp.eq.s32.totalorder %s32, 3
      %p176 = por %p174, %p175
      %p177 = scmp.ne.s32.totalorder %s168, %s169
      %p178 = scmp.eq.s32.totalorder %s32, 0
      %p179 = por %p177, %p178
      %p180 = scmp.ne.s32.totalorder %s168, %s169
      %p181 = scmp.eq.s32.totalorder %s33, 3
      %p182 = por %p180, %p181
      %p184 = scmp.ne.s32.totalorder %s169, %s183
      %p185 = scmp.eq.s32.totalorder %s33, 0
      %p186 = por %p184, %p185
      %s188 = sadd.s32 %s187, 1
      %p191 = scmp.eq.s32.totalorder %s27, 3
      %p192 = scmp.ne.s32.totalorder %s187, %s189
      %p193 = scmp.eq.s32.totalorder %s27, 0
      %p194 = por %p192, %p193
      %p195 = scmp.ne.s32.totalorder %s187, %s189
      %p196 = scmp.eq.s32.totalorder %s32, 3
      %p197 = por %p195, %p196
      %p198 = scmp.ne.s32.totalorder %s189, %s190
      %p199 = scmp.eq.s32.totalorder %s32, 0
      %p200 = por %p198, %p199
      %p201 = scmp.ne.s32.totalorder %s189, %s190
      %p202 = scmp.eq.s32.totalorder %s33, 3
      %p203 = por %p201, %p202
      %p205 = scmp.ne.s32.totalorder %s190, %s204
      %p206 = scmp.eq.s32.totalorder %s33, 0
      %p207 = por %p205, %p206
      %s209 = sadd.s32 %s208, 1
      %p212 = scmp.eq.s32.totalorder %s27, 3
      %p213 = scmp.ne.s32.totalorder %s208, %s210
      %p214 = scmp.eq.s32.totalorder %s27, 0
      %p215 = por %p213, %p214
      %p216 = scmp.ne.s32.totalorder %s208, %s210
      %p217 = scmp.eq.s32.totalorder %s32, 3
      %p218 = por %p216, %p217
      %p219 = scmp.ne.s32.totalorder %s210, %s211
      %p220 = scmp.eq.s32.totalorder %s32, 0
      %p221 = por %p219, %p220
      %p222 = scmp.ne.s32.totalorder %s210, %s211
      %p223 = scmp.eq.s32.totalorder %s33, 3
      %p224 = por %p222, %p223
      %p226 = scmp.ne.s32.totalorder %s211, %s225
      %p227 = scmp.eq.s32.totalorder %s33, 0
      %p228 = por %p226, %p227
      %s229 = ssub.s32 %s27, %s34
      %p230 = scmp.eq.s32.totalorder %s229, 0
      %s232 = sadd.s32 %s231, 1
      %s233 = scalar_select %p230, %s231, %s232
      %p236 = pneg %p230
      %p237 = scmp.eq.s32.totalorder %s27, 3
      %p238 = por %p236, %p237
      %p239 = scmp.ne.s32.totalorder %s231, %s234
      %p240 = scmp.eq.s32.totalorder %s27, 0
      %p241 = por %p239, %p240
      %p242 = scmp.ne.s32.totalorder %s231, %s234
      %p243 = scmp.eq.s32.totalorder %s32, 3
      %p244 = por %p242, %p243
      %p245 = scmp.ne.s32.totalorder %s234, %s235
      %p246 = scmp.eq.s32.totalorder %s32, 0
      %p247 = por %p245, %p246
      %p248 = scmp.ne.s32.totalorder %s234, %s235
      %p249 = scmp.eq.s32.totalorder %s33, 3
      %p250 = por %p248, %p249
      %p252 = scmp.ne.s32.totalorder %s235, %s251
      %p253 = scmp.eq.s32.totalorder %s33, 0
      %p254 = por %p252, %p253
      %s256 = sadd.s32 %s255, 1
      %p259 = scmp.eq.s32.totalorder %s27, 3
      %p260 = scmp.ne.s32.totalorder %s255, %s257
      %p261 = scmp.eq.s32.totalorder %s27, 0
      %p262 = por %p260, %p261
      %p263 = scmp.ne.s32.totalorder %s255, %s257
      %p264 = scmp.eq.s32.totalorder %s32, 3
      %p265 = por %p263, %p264
      %p266 = scmp.ne.s32.totalorder %s257, %s258
      %p267 = scmp.eq.s32.totalorder %s32, 0
      %p268 = por %p266, %p267
      %p269 = scmp.ne.s32.totalorder %s257, %s258
      %p270 = scmp.eq.s32.totalorder %s33, 3
      %p271 = por %p269, %p270
      %p273 = scmp.ne.s32.totalorder %s258, %s272
      %p274 = scmp.eq.s32.totalorder %s33, 0
      %p275 = por %p273, %p274
      %s277 = sadd.s32 %s276, 1
      %p280 = scmp.eq.s32.totalorder %s27, 3
      %p281 = scmp.ne.s32.totalorder %s276, %s278
      %p282 = scmp.eq.s32.totalorder %s27, 0
      %p283 = por %p281, %p282
      %p284 = scmp.ne.s32.totalorder %s276, %s278
      %p285 = scmp.eq.s32.totalorder %s32, 3
      %p286 = por %p284, %p285
      %p287 = scmp.ne.s32.totalorder %s278, %s279
      %p288 = scmp.eq.s32.totalorder %s32, 0
      %p289 = por %p287, %p288
      %p290 = scmp.ne.s32.totalorder %s278, %s279
      %p291 = scmp.eq.s32.totalorder %s33, 3
      %p292 = por %p290, %p291
      %p294 = scmp.ne.s32.totalorder %s279, %s293
      %p295 = scmp.eq.s32.totalorder %s33, 0
      %p296 = por %p294, %p295
      %s298 = sadd.s32 %s297, 1
      %p301 = scmp.eq.s32.totalorder %s27, 3
      %p302 = scmp.ne.s32.totalorder %s297, %s299
      %p303 = scmp.eq.s32.totalorder %s27, 0
      %p304 = por %p302, %p303
      %p305 = scmp.ne.s32.totalorder %s297, %s299
      %p306 = scmp.eq.s32.totalorder %s32, 3
      %p307 = por %p305, %p306
      %p308 = scmp.ne.s32.totalorder %s299, %s300
      %p309 = scmp.eq.s32.totalorder %s32, 0
      %p310 = por %p308, %p309
      %p311 = scmp.ne.s32.totalorder %s299, %s300
      %p312 = scmp.eq.s32.totalorder %s33, 3
      %p313 = por %p311, %p312
      %p315 = scmp.ne.s32.totalorder %s300, %s314
      %p316 = scmp.eq.s32.totalorder %s33, 0
      %p317 = por %p315, %p316
      %p318 = scmp.le.s32.totalorder 1, %s27
      %p319 = scmp.lt.s32.totalorder %s27, 5
      %p320 = pnand %p318, %p319
      %p321 = pneg %p320
      // Predicated region
      $region9: #{tpu_custom_call.1} parent=5 // pred_check
        _
      $region10: #{tpu_custom_call.1} parent=5 // pred_check_branch
        %323 = sbr.rel (%p320) target = $region12
      $region11: #{tpu_custom_call.1} parent=5 // pred_region
        %s324 = ssub.s32 %s27, 1
        // Predicated region
        $region13: #{tpu_custom_call.1} parent=11 // pred_check
          %p325 = pneg %p74
        $region14: #{tpu_custom_call.1} parent=11 // pred_check_branch
          %327 = sbr.rel (%p325) target = $region16
        $region15: #{tpu_custom_call.1} parent=11 // pred_region
          %s329 = ssub.s32 8192, 8192
          %330 = vsyncadd [#allocation9], %s329
          %s331 = sshll.u32 [#allocation8], 4
          %s332 = int_to_ptr.vmem [resolvable:$true] %s331
          %337 = dma.hbm_to_vmem [thread:$0]  %s1, 8192, %s332, [#allocation9], 256, 256, 16
        $region16: #{tpu_custom_call.1} parent=11 // pred_fallthru
          _
        // Predicated region
        $region17: #{tpu_custom_call.1} parent=11 // pred_check
          %p338 = pneg %p95
        $region18: #{tpu_custom_call.1} parent=11 // pred_check_branch
          %340 = sbr.rel (%p338) target = $region20
        $region19: #{tpu_custom_call.1} parent=11 // pred_region
          _
        $region20: #{tpu_custom_call.1} parent=11 // pred_fallthru
          _
        // Predicated region
        $region21: #{tpu_custom_call.1} parent=11 // pred_check
          %p341 = pneg %p116
        $region22: #{tpu_custom_call.1} parent=11 // pred_check_branch
          %343 = sbr.rel (%p341) target = $region24
        $region23: #{tpu_custom_call.1} parent=11 // pred_region
          %s345 = ssub.s32 16384, 16384
          %346 = vsyncadd [#allocation9], %s345
          %s347 = sshll.u32 [#allocation10], 4
          %s348 = int_to_ptr.vmem [resolvable:$true] %s347
          %353 = dma.hbm_to_vmem [thread:$0]  %s3, 16384, %s348, [#allocation9], 256, 256, 16
        $region24: #{tpu_custom_call.1} parent=11 // pred_fallthru
          _
        // Predicated region
        $region25: #{tpu_custom_call.1} parent=11 // pred_check
          %p354 = pneg %p137
        $region26: #{tpu_custom_call.1} parent=11 // pred_check_branch
          %356 = sbr.rel (%p354) target = $region28
        $region27: #{tpu_custom_call.1} parent=11 // pred_region
          _
        $region28: #{tpu_custom_call.1} parent=11 // pred_fallthru
          _
        // Predicated region
        $region29: #{tpu_custom_call.1} parent=11 // pred_check
          %p357 = pneg %p158
        $region30: #{tpu_custom_call.1} parent=11 // pred_check_branch
          %359 = sbr.rel (%p357) target = $region32
        $region31: #{tpu_custom_call.1} parent=11 // pred_region
          _
        $region32: #{tpu_custom_call.1} parent=11 // pred_fallthru
          _
        // Predicated region
        $region33: #{tpu_custom_call.1} parent=11 // pred_check
          %p360 = pneg %p179
        $region34: #{tpu_custom_call.1} parent=11 // pred_check_branch
          %362 = sbr.rel (%p360) target = $region36
        $region35: #{tpu_custom_call.1} parent=11 // pred_region
          _
        $region36: #{tpu_custom_call.1} parent=11 // pred_fallthru
          _
        // Predicated region
        $region37: #{tpu_custom_call.1} parent=11 // pred_check
          %p363 = pneg %p200
        $region38: #{tpu_custom_call.1} parent=11 // pred_check_branch
          %365 = sbr.rel (%p363) target = $region40
        $region39: #{tpu_custom_call.1} parent=11 // pred_region
          _
        $region40: #{tpu_custom_call.1} parent=11 // pred_fallthru
          _
        // Predicated region
        $region41: #{tpu_custom_call.1} parent=11 // pred_check
          %p366 = pneg %p221
        $region42: #{tpu_custom_call.1} parent=11 // pred_check_branch
          %368 = sbr.rel (%p366) target = $region44
        $region43: #{tpu_custom_call.1} parent=11 // pred_region
          _
        $region44: #{tpu_custom_call.1} parent=11 // pred_fallthru
          _
      $region12: #{tpu_custom_call.1} parent=5 // pred_fallthru
        _
      %p369 = scmp.lt.s32.totalorder %s27, 4
      // Predicated region
      $region45: #{tpu_custom_call.1} parent=5 // pred_check
        %p370 = pneg %p369
      $region46: #{tpu_custom_call.1} parent=5 // pred_check_branch
        %372 = sbr.rel (%p370) target = $region48
      $region47: #{tpu_custom_call.1} parent=5 // pred_region
        // Predicated region
        $region49: #{tpu_custom_call.1} parent=47 // pred_check
          %p373 = pneg %p47
        $region50: #{tpu_custom_call.1} parent=47 // pred_check_branch
          %375 = sbr.rel (%p373) target = $region52
        $region51: #{tpu_custom_call.1} parent=47 // pred_region
          %s376 = sand.u32 %s37, 1
          %s377 = scalar_lea.sflag [#allocation6], %s376
          %s378 = sand.u32 %s37, 1
          %s379 = smul.addr %s378, 512
          %s380 = scalar_lea.vmem [#allocation5], %s379
          %s381 = smul.u32 32, %s27
          %s383 = ssub.s32 8192, 8192
          %384 = vsyncadd %s377, %s383
          %s385 = smul.addr %s381, 2
          %s386 = smul.addr %s385, 128
          %s387 = scalar_lea.hbm %s0, %s386
          %s388 = sshll.u32 %s380, 4
          %s389 = int_to_ptr.vmem [resolvable:$true] %s388
          %394 = dma.hbm_to_vmem [thread:$0]  %s387, 8192, %s389, %s377, 256, 256, 16
        $region52: #{tpu_custom_call.1} parent=47 // pred_fallthru
          _
      $region48: #{tpu_custom_call.1} parent=5 // pred_fallthru
        _
      %p395 = scmp.le.s32.totalorder 1, %s27
      %p396 = scmp.lt.s32.totalorder %s27, 5
      %p397 = pnand %p395, %p396
      %p398 = pneg %p397
      // Predicated region
      $region53: #{tpu_custom_call.1} parent=5 // pred_check
        _
      $region54: #{tpu_custom_call.1} parent=5 // pred_check_branch
        %400 = sbr.rel (%p397) target = $region56
      $region55: #{tpu_custom_call.1} parent=5 // pred_region
        %s401 = ssub.s32 %s27, 1
        %s402 = sand.u32 %s40, 1
        %s403 = scalar_lea.sflag [#allocation6], %s402
        %s404 = sand.u32 %s40, 1
        %s405 = smul.addr %s404, 512
        %s406 = scalar_lea.vmem [#allocation5], %s405
        // Predicated region
        $region57: #{tpu_custom_call.1} parent=55 // pred_check
          %p407 = pneg %p53
        $region58: #{tpu_custom_call.1} parent=55 // pred_check_branch
          %409 = sbr.rel (%p407) target = $region60
        $region59: #{tpu_custom_call.1} parent=55 // pred_region
          %410 = dma.done %s403, 8192
        $region60: #{tpu_custom_call.1} parent=55 // pred_fallthru
          _
        // Predicated region
        $region61: #{tpu_custom_call.1} parent=55 // pred_check
          %p411 = pneg %p74
        $region62: #{tpu_custom_call.1} parent=55 // pred_check_branch
          %413 = sbr.rel (%p411) target = $region64
        $region63: #{tpu_custom_call.1} parent=55 // pred_region
          %414 = dma.done [#allocation9], 8192
        $region64: #{tpu_custom_call.1} parent=55 // pred_fallthru
          _
        // Predicated region
        $region65: #{tpu_custom_call.1} parent=55 // pred_check
          %p415 = pneg %p116
        $region66: #{tpu_custom_call.1} parent=55 // pred_check_branch
          %417 = sbr.rel (%p415) target = $region68
        $region67: #{tpu_custom_call.1} parent=55 // pred_region
          %418 = dma.done [#allocation9], 16384
        $region68: #{tpu_custom_call.1} parent=55 // pred_fallthru
          _
        %s419 = sand.u32 %s40, 1
        %s420 = scalar_lea.sflag [#allocation6], %s419
        %s421 = sand.u32 %s40, 1
        %s422 = smul.addr %s421, 512
        %s423 = scalar_lea.vmem [#allocation5], %s422
        %p424 = pneg %p53
        %p425 = pneg %p50
        %p426 = pneg %p74
        %p427 = pneg %p71
        %p428 = pneg %p95
        %p429 = pneg %p92
        %p430 = pneg %p116
        %p431 = pneg %p113
        %p432 = pneg %p137
        %p433 = pneg %p134
        %p434 = pneg %p158
        %p435 = pneg %p155
        %p436 = pneg %p179
        %p437 = pneg %p176
        %p438 = pneg %p200
        %p439 = pneg %p197
        %p440 = pneg %p221
        %p441 = pneg %p218
        %p442 = pneg %p247
        %p443 = pneg %p244
        %s444 = sand.u32 %s234, 1
        %s445 = scalar_lea.sflag [#allocation7], %s444
        %s446 = sand.u32 %s234, 1
        %s447 = smul.addr %s446, 4
        %s448 = scalar_lea.vmem [#allocation11], %s447
        %p449 = pneg %p268
        %p450 = pneg %p265
        %p451 = pneg %p289
        %p452 = pneg %p286
        %p453 = pneg %p310
        %p454 = pneg %p307
        %s455 = smul.u32 32, %s32
        %s456 = smul.u32 2, %s32
        %p457 = scmp.eq.s32.totalorder %s32, 0
        // Predicated region
        $region69: #{tpu_custom_call.1} parent=55 // pred_check
          %p458 = pneg %p457
        $region70: #{tpu_custom_call.1} parent=55 // pred_check_branch
          %460 = sbr.rel (%p458) target = $region72
        $region71: #{tpu_custom_call.1} parent=55 // pred_region
          %vm461 = vcmask 1024
          %462 = vst.msk [vmem:[#allocation2] sm:$0x3] %vm461, -inf
          %463 = vst.msk [vmem:[#allocation3] sm:$0x3] %vm461, 0.0
          %464 = vst [vmem:[#allocation4] sm:$0xff] 0.0
        $region72: #{tpu_custom_call.1} parent=55 // pred_fallthru
          _
        %v465 = vld [vmem:[%s406] sm:$0xff]
        %v466 = vld [vmem:[%s406 + $0x8] sm:$0xff]
        %v467 = vld [vmem:[%s406 + $0x10] sm:$0xff]
        %v468 = vld [vmem:[%s406 + $0x18] sm:$0xff]
        %v469 = vld [vmem:[%s406 + $0x20] sm:$0xff]
        %v470 = vld [vmem:[%s406 + $0x28] sm:$0xff]
        %v471 = vld [vmem:[%s406 + $0x30] sm:$0xff]
        %v472 = vld [vmem:[%s406 + $0x38] sm:$0xff]
        %v473 = vld [vmem:[%s406 + $0x40] sm:$0xff]
        %v474 = vld [vmem:[%s406 + $0x48] sm:$0xff]
        %v475 = vld [vmem:[%s406 + $0x50] sm:$0xff]
        %v476 = vld [vmem:[%s406 + $0x58] sm:$0xff]
        %v477 = vld [vmem:[%s406 + $0x60] sm:$0xff]
        %v478 = vld [vmem:[%s406 + $0x68] sm:$0xff]
        %v479 = vld [vmem:[%s406 + $0x70] sm:$0xff]
        %v480 = vld [vmem:[%s406 + $0x78] sm:$0xff]
        %v481 = vld [vmem:[%s406 + $0x80] sm:$0xff]
        %v482 = vld [vmem:[%s406 + $0x88] sm:$0xff]
        %v483 = vld [vmem:[%s406 + $0x90] sm:$0xff]
        %v484 = vld [vmem:[%s406 + $0x98] sm:$0xff]
        %v485 = vld [vmem:[%s406 + $0xa0] sm:$0xff]
        %v486 = vld [vmem:[%s406 + $0xa8] sm:$0xff]
        %v487 = vld [vmem:[%s406 + $0xb0] sm:$0xff]
        %v488 = vld [vmem:[%s406 + $0xb8] sm:$0xff]
        %v489 = vld [vmem:[%s406 + $0xc0] sm:$0xff]
        %v490 = vld [vmem:[%s406 + $0xc8] sm:$0xff]
        %v491 = vld [vmem:[%s406 + $0xd0] sm:$0xff]
        %v492 = vld [vmem:[%s406 + $0xd8] sm:$0xff]
        %v493 = vld [vmem:[%s406 + $0xe0] sm:$0xff]
        %v494 = vld [vmem:[%s406 + $0xe8] sm:$0xff]
        %v495 = vld [vmem:[%s406 + $0xf0] sm:$0xff]
        %v496 = vld [vmem:[%s406 + $0xf8] sm:$0xff]
        %v497 = vld [vmem:[%s406 + $0x100] sm:$0xff]
        %v498 = vld [vmem:[%s406 + $0x108] sm:$0xff]
        %v499 = vld [vmem:[%s406 + $0x110] sm:$0xff]
        %v500 = vld [vmem:[%s406 + $0x118] sm:$0xff]
        %v501 = vld [vmem:[%s406 + $0x120] sm:$0xff]
        %v502 = vld [vmem:[%s406 + $0x128] sm:$0xff]
        %v503 = vld [vmem:[%s406 + $0x130] sm:$0xff]
        %v504 = vld [vmem:[%s406 + $0x138] sm:$0xff]
        %v505 = vld [vmem:[%s406 + $0x140] sm:$0xff]
        %v506 = vld [vmem:[%s406 + $0x148] sm:$0xff]
        %v507 = vld [vmem:[%s406 + $0x150] sm:$0xff]
        %v508 = vld [vmem:[%s406 + $0x158] sm:$0xff]
        %v509 = vld [vmem:[%s406 + $0x160] sm:$0xff]
        %v510 = vld [vmem:[%s406 + $0x168] sm:$0xff]
        %v511 = vld [vmem:[%s406 + $0x170] sm:$0xff]
        %v512 = vld [vmem:[%s406 + $0x178] sm:$0xff]
        %v513 = vld [vmem:[%s406 + $0x180] sm:$0xff]
        %v514 = vld [vmem:[%s406 + $0x188] sm:$0xff]
        %v515 = vld [vmem:[%s406 + $0x190] sm:$0xff]
        %v516 = vld [vmem:[%s406 + $0x198] sm:$0xff]
        %v517 = vld [vmem:[%s406 + $0x1a0] sm:$0xff]
        %v518 = vld [vmem:[%s406 + $0x1a8] sm:$0xff]
        %v519 = vld [vmem:[%s406 + $0x1b0] sm:$0xff]
        %v520 = vld [vmem:[%s406 + $0x1b8] sm:$0xff]
        %v521 = vld [vmem:[%s406 + $0x1c0] sm:$0xff]
        %v522 = vld [vmem:[%s406 + $0x1c8] sm:$0xff]
        %v523 = vld [vmem:[%s406 + $0x1d0] sm:$0xff]
        %v524 = vld [vmem:[%s406 + $0x1d8] sm:$0xff]
        %v525 = vld [vmem:[%s406 + $0x1e0] sm:$0xff]
        %v526 = vld [vmem:[%s406 + $0x1e8] sm:$0xff]
        %v527 = vld [vmem:[%s406 + $0x1f0] sm:$0xff]
        %v528 = vld [vmem:[%s406 + $0x1f8] sm:$0xff]
        %v529 = vpack.c.bf16 %v467, %v465
        %v530 = vpack.c.bf16 %v468, %v466
        %v531 = vpack.c.bf16 %v471, %v469
        %v532 = vpack.c.bf16 %v472, %v470
        %v533 = vpack.c.bf16 %v475, %v473
        %v534 = vpack.c.bf16 %v476, %v474
        %v535 = vpack.c.bf16 %v479, %v477
        %v536 = vpack.c.bf16 %v480, %v478
        %v537 = vpack.c.bf16 %v483, %v481
        %v538 = vpack.c.bf16 %v484, %v482
        %v539 = vpack.c.bf16 %v487, %v485
        %v540 = vpack.c.bf16 %v488, %v486
        %v541 = vpack.c.bf16 %v491, %v489
        %v542 = vpack.c.bf16 %v492, %v490
        %v543 = vpack.c.bf16 %v495, %v493
        %v544 = vpack.c.bf16 %v496, %v494
        %v545 = vpack.c.bf16 %v499, %v497
        %v546 = vpack.c.bf16 %v500, %v498
        %v547 = vpack.c.bf16 %v503, %v501
        %v548 = vpack.c.bf16 %v504, %v502
        %v549 = vpack.c.bf16 %v507, %v505
        %v550 = vpack.c.bf16 %v508, %v506
        %v551 = vpack.c.bf16 %v511, %v509
        %v552 = vpack.c.bf16 %v512, %v510
        %v553 = vpack.c.bf16 %v515, %v513
        %v554 = vpack.c.bf16 %v516, %v514
        %v555 = vpack.c.bf16 %v519, %v517
        %v556 = vpack.c.bf16 %v520, %v518
        %v557 = vpack.c.bf16 %v523, %v521
        %v558 = vpack.c.bf16 %v524, %v522
        %v559 = vpack.c.bf16 %v527, %v525
        %v560 = vpack.c.bf16 %v528, %v526
        %v561 = vld [vmem:[#allocation8] sm:$0xff]
        %v562 = vld [vmem:[#allocation8 + $0x8] sm:$0xff]
        %v563 = vld [vmem:[#allocation8 + $0x10] sm:$0xff]
        %v564 = vld [vmem:[#allocation8 + $0x18] sm:$0xff]
        %v565 = vld [vmem:[#allocation8 + $0x20] sm:$0xff]
        %v566 = vld [vmem:[#allocation8 + $0x28] sm:$0xff]
        %v567 = vld [vmem:[#allocation8 + $0x30] sm:$0xff]
        %v568 = vld [vmem:[#allocation8 + $0x38] sm:$0xff]
        %v569 = vld [vmem:[#allocation8 + $0x40] sm:$0xff]
        %v570 = vld [vmem:[#allocation8 + $0x48] sm:$0xff]
        %v571 = vld [vmem:[#allocation8 + $0x50] sm:$0xff]
        %v572 = vld [vmem:[#allocation8 + $0x58] sm:$0xff]
        %v573 = vld [vmem:[#allocation8 + $0x60] sm:$0xff]
        %v574 = vld [vmem:[#allocation8 + $0x68] sm:$0xff]
        %v575 = vld [vmem:[#allocation8 + $0x70] sm:$0xff]
        %v576 = vld [vmem:[#allocation8 + $0x78] sm:$0xff]
        %v577 = vld [vmem:[#allocation8 + $0x80] sm:$0xff]
        %v578 = vld [vmem:[#allocation8 + $0x88] sm:$0xff]
        %v579 = vld [vmem:[#allocation8 + $0x90] sm:$0xff]
        %v580 = vld [vmem:[#allocation8 + $0x98] sm:$0xff]
        %v581 = vld [vmem:[#allocation8 + $0xa0] sm:$0xff]
        %v582 = vld [vmem:[#allocation8 + $0xa8] sm:$0xff]
        %v583 = vld [vmem:[#allocation8 + $0xb0] sm:$0xff]
        %v584 = vld [vmem:[#allocation8 + $0xb8] sm:$0xff]
        %v585 = vld [vmem:[#allocation8 + $0xc0] sm:$0xff]
        %v586 = vld [vmem:[#allocation8 + $0xc8] sm:$0xff]
        %v587 = vld [vmem:[#allocation8 + $0xd0] sm:$0xff]
        %v588 = vld [vmem:[#allocation8 + $0xd8] sm:$0xff]
        %v589 = vld [vmem:[#allocation8 + $0xe0] sm:$0xff]
        %v590 = vld [vmem:[#allocation8 + $0xe8] sm:$0xff]
        %v591 = vld [vmem:[#allocation8 + $0xf0] sm:$0xff]
        %v592 = vld [vmem:[#allocation8 + $0xf8] sm:$0xff]
        %v593 = vld [vmem:[#allocation8 + $0x100] sm:$0xff]
        %v594 = vld [vmem:[#allocation8 + $0x108] sm:$0xff]
        %v595 = vld [vmem:[#allocation8 + $0x110] sm:$0xff]
        %v596 = vld [vmem:[#allocation8 + $0x118] sm:$0xff]
        %v597 = vld [vmem:[#allocation8 + $0x120] sm:$0xff]
        %v598 = vld [vmem:[#allocation8 + $0x128] sm:$0xff]
        %v599 = vld [vmem:[#allocation8 + $0x130] sm:$0xff]
        %v600 = vld [vmem:[#allocation8 + $0x138] sm:$0xff]
        %v601 = vld [vmem:[#allocation8 + $0x140] sm:$0xff]
        %v602 = vld [vmem:[#allocation8 + $0x148] sm:$0xff]
        %v603 = vld [vmem:[#allocation8 + $0x150] sm:$0xff]
        %v604 = vld [vmem:[#allocation8 + $0x158] sm:$0xff]
        %v605 = vld [vmem:[#allocation8 + $0x160] sm:$0xff]
        %v606 = vld [vmem:[#allocation8 + $0x168] sm:$0xff]
        %v607 = vld [vmem:[#allocation8 + $0x170] sm:$0xff]
        %v608 = vld [vmem:[#allocation8 + $0x178] sm:$0xff]
        %v609 = vld [vmem:[#allocation8 + $0x180] sm:$0xff]
        %v610 = vld [vmem:[#allocation8 + $0x188] sm:$0xff]
        %v611 = vld [vmem:[#allocation8 + $0x190] sm:$0xff]
        %v612 = vld [vmem:[#allocation8 + $0x198] sm:$0xff]
        %v613 = vld [vmem:[#allocation8 + $0x1a0] sm:$0xff]
        %v614 = vld [vmem:[#allocation8 + $0x1a8] sm:$0xff]
        %v615 = vld [vmem:[#allocation8 + $0x1b0] sm:$0xff]
        %v616 = vld [vmem:[#allocation8 + $0x1b8] sm:$0xff]
        %v617 = vld [vmem:[#allocation8 + $0x1c0] sm:$0xff]
        %v618 = vld [vmem:[#allocation8 + $0x1c8] sm:$0xff]
        %v619 = vld [vmem:[#allocation8 + $0x1d0] sm:$0xff]
        %v620 = vld [vmem:[#allocation8 + $0x1d8] sm:$0xff]
        %v621 = vld [vmem:[#allocation8 + $0x1e0] sm:$0xff]
        %v622 = vld [vmem:[#allocation8 + $0x1e8] sm:$0xff]
        %v623 = vld [vmem:[#allocation8 + $0x1f0] sm:$0xff]
        %v624 = vld [vmem:[#allocation8 + $0x1f8] sm:$0xff]
        %v625 = vld [vmem:[%s2] sm:$0xf]
        %v627 = vlaneseq
        %v628 = vshrl.u32 %v627, 7
        %v629 = vsub.s32 0, %v628
        %v630 = vrot.slane %v625, %v629
        %v631 = vlaneseq
        %v632 = vshrl.u32 %v631, 7
        %v633 = vsub.s32 1, %v632
        %v634 = vrot.slane %v625, %v633
        %v635 = vlaneseq
        %v636 = vshrl.u32 %v635, 7
        %v637 = vsub.s32 2, %v636
        %v638 = vrot.slane %v625, %v637
        %v639 = vlaneseq
        %v640 = vshrl.u32 %v639, 7
        %v641 = vsub.s32 3, %v640
        %v642 = vrot.slane %v625, %v641
        %v711 = vunpack.c.l.b16 %v561
        %v712 = vunpack.c.h.b16 %v561
        %v713 = vunpack.c.l.b16 %v562
        %v714 = vunpack.c.h.b16 %v562
        %v715 = vunpack.c.l.b16 %v563
        %v716 = vunpack.c.h.b16 %v563
        %v717 = vunpack.c.l.b16 %v564
        %v718 = vunpack.c.h.b16 %v564
        %v719 = vunpack.c.l.b16 %v565
        %v720 = vunpack.c.h.b16 %v565
        %v721 = vunpack.c.l.b16 %v566
        %v722 = vunpack.c.h.b16 %v566
        %v723 = vunpack.c.l.b16 %v567
        %v724 = vunpack.c.h.b16 %v567
        %v725 = vunpack.c.l.b16 %v568
        %v726 = vunpack.c.h.b16 %v568
        %v727 = vunpack.c.l.b16 %v569
        %v728 = vunpack.c.h.b16 %v569
        %v729 = vunpack.c.l.b16 %v570
        %v730 = vunpack.c.h.b16 %v570
        %v731 = vunpack.c.l.b16 %v571
        %v732 = vunpack.c.h.b16 %v571
        %v733 = vunpack.c.l.b16 %v572
        %v734 = vunpack.c.h.b16 %v572
        %v735 = vunpack.c.l.b16 %v573
        %v736 = vunpack.c.h.b16 %v573
        %v737 = vunpack.c.l.b16 %v574
        %v738 = vunpack.c.h.b16 %v574
        %v739 = vunpack.c.l.b16 %v575
        %v740 = vunpack.c.h.b16 %v575
        %v741 = vunpack.c.l.b16 %v576
        %v742 = vunpack.c.h.b16 %v576
        %v743 = vunpack.c.l.b16 %v577
        %v744 = vunpack.c.h.b16 %v577
        %v745 = vunpack.c.l.b16 %v578
        %v746 = vunpack.c.h.b16 %v578
        %v747 = vunpack.c.l.b16 %v579
        %v748 = vunpack.c.h.b16 %v579
        %v749 = vunpack.c.l.b16 %v580
        %v750 = vunpack.c.h.b16 %v580
        %v751 = vunpack.c.l.b16 %v581
        %v752 = vunpack.c.h.b16 %v581
        %v753 = vunpack.c.l.b16 %v582
        %v754 = vunpack.c.h.b16 %v582
        %v755 = vunpack.c.l.b16 %v583
        %v756 = vunpack.c.h.b16 %v583
        %v757 = vunpack.c.l.b16 %v584
        %v758 = vunpack.c.h.b16 %v584
        %v759 = vunpack.c.l.b16 %v585
        %v760 = vunpack.c.h.b16 %v585
        %v761 = vunpack.c.l.b16 %v586
        %v762 = vunpack.c.h.b16 %v586
        %v763 = vunpack.c.l.b16 %v587
        %v764 = vunpack.c.h.b16 %v587
        %v765 = vunpack.c.l.b16 %v588
        %v766 = vunpack.c.h.b16 %v588
        %v767 = vunpack.c.l.b16 %v589
        %v768 = vunpack.c.h.b16 %v589
        %v769 = vunpack.c.l.b16 %v590
        %v770 = vunpack.c.h.b16 %v590
        %v771 = vunpack.c.l.b16 %v591
        %v772 = vunpack.c.h.b16 %v591
        %v773 = vunpack.c.l.b16 %v592
        %v774 = vunpack.c.h.b16 %v592
        %v775 = vunpack.c.l.b16 %v593
        %v776 = vunpack.c.h.b16 %v593
        %v777 = vunpack.c.l.b16 %v594
        %v778 = vunpack.c.h.b16 %v594
        %v779 = vunpack.c.l.b16 %v595
        %v780 = vunpack.c.h.b16 %v595
        %v781 = vunpack.c.l.b16 %v596
        %v782 = vunpack.c.h.b16 %v596
        %v783 = vunpack.c.l.b16 %v597
        %v784 = vunpack.c.h.b16 %v597
        %v785 = vunpack.c.l.b16 %v598
        %v786 = vunpack.c.h.b16 %v598
        %v787 = vunpack.c.l.b16 %v599
        %v788 = vunpack.c.h.b16 %v599
        %v789 = vunpack.c.l.b16 %v600
        %v790 = vunpack.c.h.b16 %v600
        %v791 = vunpack.c.l.b16 %v601
        %v792 = vunpack.c.h.b16 %v601
        %v793 = vunpack.c.l.b16 %v602
        %v794 = vunpack.c.h.b16 %v602
        %v795 = vunpack.c.l.b16 %v603
        %v796 = vunpack.c.h.b16 %v603
        %v797 = vunpack.c.l.b16 %v604
        %v798 = vunpack.c.h.b16 %v604
        %v799 = vunpack.c.l.b16 %v605
        %v800 = vunpack.c.h.b16 %v605
        %v801 = vunpack.c.l.b16 %v606
        %v802 = vunpack.c.h.b16 %v606
        %v803 = vunpack.c.l.b16 %v607
        %v804 = vunpack.c.h.b16 %v607
        %v805 = vunpack.c.l.b16 %v608
        %v806 = vunpack.c.h.b16 %v608
        %v807 = vunpack.c.l.b16 %v609
        %v808 = vunpack.c.h.b16 %v609
        %v809 = vunpack.c.l.b16 %v610
        %v810 = vunpack.c.h.b16 %v610
        %v811 = vunpack.c.l.b16 %v611
        %v812 = vunpack.c.h.b16 %v611
        %v813 = vunpack.c.l.b16 %v612
        %v814 = vunpack.c.h.b16 %v612
        %v815 = vunpack.c.l.b16 %v613
        %v816 = vunpack.c.h.b16 %v613
        %v817 = vunpack.c.l.b16 %v614
        %v818 = vunpack.c.h.b16 %v614
        %v819 = vunpack.c.l.b16 %v615
        %v820 = vunpack.c.h.b16 %v615
        %v821 = vunpack.c.l.b16 %v616
        %v822 = vunpack.c.h.b16 %v616
        %v823 = vunpack.c.l.b16 %v617
        %v824 = vunpack.c.h.b16 %v617
        %v825 = vunpack.c.l.b16 %v618
        %v826 = vunpack.c.h.b16 %v618
        %v827 = vunpack.c.l.b16 %v619
        %v828 = vunpack.c.h.b16 %v619
        %v829 = vunpack.c.l.b16 %v620
        %v830 = vunpack.c.h.b16 %v620
        %v831 = vunpack.c.l.b16 %v621
        %v832 = vunpack.c.h.b16 %v621
        %v833 = vunpack.c.l.b16 %v622
        %v834 = vunpack.c.h.b16 %v622
        %v835 = vunpack.c.l.b16 %v623
        %v836 = vunpack.c.h.b16 %v623
        %v837 = vunpack.c.l.b16 %v624
        %v838 = vunpack.c.h.b16 %v624
        %v839 = vpack.c.b16 %v715, %v711
        %v840 = vpack.c.b16 %v716, %v712
        %v841 = vpack.c.b16 %v717, %v713
        %v842 = vpack.c.b16 %v718, %v714
        %v843 = vpack.c.b16 %v723, %v719
        %v844 = vpack.c.b16 %v724, %v720
        %v845 = vpack.c.b16 %v725, %v721
        %v846 = vpack.c.b16 %v726, %v722
        %v847 = vpack.c.b16 %v731, %v727
        %v848 = vpack.c.b16 %v732, %v728
        %v849 = vpack.c.b16 %v733, %v729
        %v850 = vpack.c.b16 %v734, %v730
        %v851 = vpack.c.b16 %v739, %v735
        %v852 = vpack.c.b16 %v740, %v736
        %v853 = vpack.c.b16 %v741, %v737
        %v854 = vpack.c.b16 %v742, %v738
        %v855 = vpack.c.b16 %v747, %v743
        %v856 = vpack.c.b16 %v748, %v744
        %v857 = vpack.c.b16 %v749, %v745
        %v858 = vpack.c.b16 %v750, %v746
        %v859 = vpack.c.b16 %v755, %v751
        %v860 = vpack.c.b16 %v756, %v752
        %v861 = vpack.c.b16 %v757, %v753
        %v862 = vpack.c.b16 %v758, %v754
        %v863 = vpack.c.b16 %v763, %v759
        %v864 = vpack.c.b16 %v764, %v760
        %v865 = vpack.c.b16 %v765, %v761
        %v866 = vpack.c.b16 %v766, %v762
        %v867 = vpack.c.b16 %v771, %v767
        %v868 = vpack.c.b16 %v772, %v768
        %v869 = vpack.c.b16 %v773, %v769
        %v870 = vpack.c.b16 %v774, %v770
        %v871 = vpack.c.b16 %v779, %v775
        %v872 = vpack.c.b16 %v780, %v776
        %v873 = vpack.c.b16 %v781, %v777
        %v874 = vpack.c.b16 %v782, %v778
        %v875 = vpack.c.b16 %v787, %v783
        %v876 = vpack.c.b16 %v788, %v784
        %v877 = vpack.c.b16 %v789, %v785
        %v878 = vpack.c.b16 %v790, %v786
        %v879 = vpack.c.b16 %v795, %v791
        %v880 = vpack.c.b16 %v796, %v792
        %v881 = vpack.c.b16 %v797, %v793
        %v882 = vpack.c.b16 %v798, %v794
        %v883 = vpack.c.b16 %v803, %v799
        %v884 = vpack.c.b16 %v804, %v800
        %v885 = vpack.c.b16 %v805, %v801
        %v886 = vpack.c.b16 %v806, %v802
        %v887 = vpack.c.b16 %v811, %v807
        %v888 = vpack.c.b16 %v812, %v808
        %v889 = vpack.c.b16 %v813, %v809
        %v890 = vpack.c.b16 %v814, %v810
        %v891 = vpack.c.b16 %v819, %v815
        %v892 = vpack.c.b16 %v820, %v816
        %v893 = vpack.c.b16 %v821, %v817
        %v894 = vpack.c.b16 %v822, %v818
        %v895 = vpack.c.b16 %v827, %v823
        %v896 = vpack.c.b16 %v828, %v824
        %v897 = vpack.c.b16 %v829, %v825
        %v898 = vpack.c.b16 %v830, %v826
        %v899 = vpack.c.b16 %v835, %v831
        %v900 = vpack.c.b16 %v836, %v832
        %v901 = vpack.c.b16 %v837, %v833
        %v902 = vpack.c.b16 %v838, %v834
        %967 = vmatprep.subr.bf16.mxu0 %v840
        %968 = vmatpush1.bf16.msra.mxu0 %v839
        %969 = vmatprep.subr.bf16.mxu0 %v844
        %970 = vmatpush1.bf16.msra.mxu0 %v843
        %971 = vmatprep.subr.bf16.mxu0 %v848
        %972 = vmatpush1.bf16.msra.mxu0 %v847
        %973 = vmatprep.subr.bf16.mxu0 %v852
        %974 = vmatpush1.bf16.msra.mxu0 %v851
        %975 = vmatprep.subr.bf16.mxu0 %v856
        %976 = vmatpush1.bf16.msra.mxu0 %v855
        %977 = vmatprep.subr.bf16.mxu0 %v860
        %978 = vmatpush1.bf16.msra.mxu0 %v859
        %979 = vmatprep.subr.bf16.mxu0 %v864
        %980 = vmatpush1.bf16.msra.mxu0 %v863
        %981 = vmatprep.subr.bf16.mxu0 %v868
        %982 = vmatpush1.bf16.msra.mxu0 %v867
        %983 = vmatprep.subr.bf16.mxu0 %v872
        %984 = vmatpush1.bf16.msra.mxu0 %v871
        %985 = vmatprep.subr.bf16.mxu0 %v876
        %986 = vmatpush1.bf16.msra.mxu0 %v875
        %987 = vmatprep.subr.bf16.mxu0 %v880
        %988 = vmatpush1.bf16.msra.mxu0 %v879
        %989 = vmatprep.subr.bf16.mxu0 %v884
        %990 = vmatpush1.bf16.msra.mxu0 %v883
        %991 = vmatprep.subr.bf16.mxu0 %v888
        %992 = vmatpush1.bf16.msra.mxu0 %v887
        %993 = vmatprep.subr.bf16.mxu0 %v892
        %994 = vmatpush1.bf16.msra.mxu0 %v891
        %995 = vmatprep.subr.bf16.mxu0 %v896
        %996 = vmatpush1.bf16.msra.mxu0 %v895
        %997 = vmatprep.subr.bf16.mxu0 %v900
        %998 = vmatpush1.bf16.msra.mxu0 %v899
        %999 = vmatprep.mubr.bf16.mxu0 %v530
        %1000 = vmatmul.mubr.bf16.gmra.mrb[0].mxu0 %v529
        %v1001 = vpop.f32.mrb[0].mxu0
        %v1002 = vadd.f32 %v630, %v1001
        %v1003 = vpop.f32.mrb[0].mxu0
        %v1004 = vadd.f32 %v634, %v1003
        %v1005 = vpop.f32.mrb[0].mxu0
        %v1006 = vadd.f32 %v630, %v1005
        %v1007 = vpop.f32.mrb[0].mxu0
        %v1008 = vadd.f32 %v634, %v1007
        %1009 = vmatprep.mubr.bf16.mxu0 %v532
        %1010 = vmatmul.mubr.bf16.gmra.mrb[0].mxu0 %v531
        %v1011 = vpop.f32.mrb[0].mxu0
        %v1012 = vadd.f32 %v630, %v1011
        %v1013 = vpop.f32.mrb[0].mxu0
        %v1014 = vadd.f32 %v634, %v1013
        %v1015 = vpop.f32.mrb[0].mxu0
        %v1016 = vadd.f32 %v630, %v1015
        %v1017 = vpop.f32.mrb[0].mxu0
        %v1018 = vadd.f32 %v634, %v1017
        %1019 = vmatprep.mubr.bf16.mxu0 %v534
        %1020 = vmatmul.mubr.bf16.gmra.mrb[0].mxu0 %v533
        %v1021 = vpop.f32.mrb[0].mxu0
        %v1022 = vadd.f32 %v630, %v1021
        %v1023 = vpop.f32.mrb[0].mxu0
        %v1024 = vadd.f32 %v634, %v1023
        %v1025 = vpop.f32.mrb[0].mxu0
        %v1026 = vadd.f32 %v630, %v1025
        %v1027 = vpop.f32.mrb[0].mxu0
        %v1028 = vadd.f32 %v634, %v1027
        %1029 = vmatprep.mubr.bf16.mxu0 %v536
        %1030 = vmatmul.mubr.bf16.gmra.mrb[0].mxu0 %v535
        %v1031 = vpop.f32.mrb[0].mxu0
        %v1032 = vadd.f32 %v630, %v1031
        %v1033 = vpop.f32.mrb[0].mxu0
        %v1034 = vadd.f32 %v634, %v1033
        %v1035 = vpop.f32.mrb[0].mxu0
        %v1036 = vadd.f32 %v630, %v1035
        %v1037 = vpop.f32.mrb[0].mxu0
        %v1038 = vadd.f32 %v634, %v1037
        %1039 = vmatprep.mubr.bf16.mxu0 %v538
        %1040 = vmatmul.mubr.bf16.gmra.mrb[0].mxu0 %v537
        %v1041 = vpop.f32.mrb[0].mxu0
        %v1042 = vadd.f32 %v630, %v1041
        %v1043 = vpop.f32.mrb[0].mxu0
        %v1044 = vadd.f32 %v634, %v1043
        %v1045 = vpop.f32.mrb[0].mxu0
        %v1046 = vadd.f32 %v630, %v1045
        %v1047 = vpop.f32.mrb[0].mxu0
        %v1048 = vadd.f32 %v634, %v1047
        %1049 = vmatprep.mubr.bf16.mxu0 %v540
        %1050 = vmatmul.mubr.bf16.gmra.mrb[0].mxu0 %v539
        %v1051 = vpop.f32.mrb[0].mxu0
        %v1052 = vadd.f32 %v630, %v1051
        %v1053 = vpop.f32.mrb[0].mxu0
        %v1054 = vadd.f32 %v634, %v1053
        %v1055 = vpop.f32.mrb[0].mxu0
        %v1056 = vadd.f32 %v630, %v1055
        %v1057 = vpop.f32.mrb[0].mxu0
        %v1058 = vadd.f32 %v634, %v1057
        %1059 = vmatprep.mubr.bf16.mxu0 %v542
        %1060 = vmatmul.mubr.bf16.gmra.mrb[0].mxu0 %v541
        %v1061 = vpop.f32.mrb[0].mxu0
        %v1062 = vadd.f32 %v630, %v1061
        %v1063 = vpop.f32.mrb[0].mxu0
        %v1064 = vadd.f32 %v634, %v1063
        %v1065 = vpop.f32.mrb[0].mxu0
        %v1066 = vadd.f32 %v630, %v1065
        %v1067 = vpop.f32.mrb[0].mxu0
        %v1068 = vadd.f32 %v634, %v1067
        %1069 = vmatprep.mubr.bf16.mxu0 %v544
        %1070 = vmatmul.mubr.bf16.gmra.mrb[0].mxu0 %v543
        %v1071 = vpop.f32.mrb[0].mxu0
        %v1072 = vadd.f32 %v630, %v1071
        %v1073 = vpop.f32.mrb[0].mxu0
        %v1074 = vadd.f32 %v634, %v1073
        %v1075 = vpop.f32.mrb[0].mxu0
        %v1076 = vadd.f32 %v630, %v1075
        %v1077 = vpop.f32.mrb[0].mxu0
        %v1078 = vadd.f32 %v634, %v1077
        %1079 = vmatprep.mubr.bf16.mxu0 %v546
        %1080 = vmatmul.mubr.bf16.gmra.mrb[0].mxu0 %v545
        %v1081 = vpop.f32.mrb[0].mxu0
        %v1082 = vadd.f32 %v630, %v1081
        %v1083 = vpop.f32.mrb[0].mxu0
        %v1084 = vadd.f32 %v634, %v1083
        %v1085 = vpop.f32.mrb[0].mxu0
        %v1086 = vadd.f32 %v630, %v1085
        %v1087 = vpop.f32.mrb[0].mxu0
        %v1088 = vadd.f32 %v634, %v1087
        %1089 = vmatprep.mubr.bf16.mxu0 %v548
        %1090 = vmatmul.mubr.bf16.gmra.mrb[0].mxu0 %v547
        %v1091 = vpop.f32.mrb[0].mxu0
        %v1092 = vadd.f32 %v630, %v1091
        %v1093 = vpop.f32.mrb[0].mxu0
        %v1094 = vadd.f32 %v634, %v1093
        %v1095 = vpop.f32.mrb[0].mxu0
        %v1096 = vadd.f32 %v630, %v1095
        %v1097 = vpop.f32.mrb[0].mxu0
        %v1098 = vadd.f32 %v634, %v1097
        %1099 = vmatprep.mubr.bf16.mxu0 %v550
        %1100 = vmatmul.mubr.bf16.gmra.mrb[0].mxu0 %v549
        %v1101 = vpop.f32.mrb[0].mxu0
        %v1102 = vadd.f32 %v630, %v1101
        %v1103 = vpop.f32.mrb[0].mxu0
        %v1104 = vadd.f32 %v634, %v1103
        %v1105 = vpop.f32.mrb[0].mxu0
        %v1106 = vadd.f32 %v630, %v1105
        %v1107 = vpop.f32.mrb[0].mxu0
        %v1108 = vadd.f32 %v634, %v1107
        %1109 = vmatprep.mubr.bf16.mxu0 %v552
        %1110 = vmatmul.mubr.bf16.gmra.mrb[0].mxu0 %v551
        %v1111 = vpop.f32.mrb[0].mxu0
        %v1112 = vadd.f32 %v630, %v1111
        %v1113 = vpop.f32.mrb[0].mxu0
        %v1114 = vadd.f32 %v634, %v1113
        %v1115 = vpop.f32.mrb[0].mxu0
        %v1116 = vadd.f32 %v630, %v1115
        %v1117 = vpop.f32.mrb[0].mxu0
        %v1118 = vadd.f32 %v634, %v1117
        %1119 = vmatprep.mubr.bf16.mxu0 %v554
        %1120 = vmatmul.mubr.bf16.gmra.mrb[0].mxu0 %v553
        %v1121 = vpop.f32.mrb[0].mxu0
        %v1122 = vadd.f32 %v630, %v1121
        %v1123 = vpop.f32.mrb[0].mxu0
        %v1124 = vadd.f32 %v634, %v1123
        %v1125 = vpop.f32.mrb[0].mxu0
        %v1126 = vadd.f32 %v630, %v1125
        %v1127 = vpop.f32.mrb[0].mxu0
        %v1128 = vadd.f32 %v634, %v1127
        %1129 = vmatprep.mubr.bf16.mxu0 %v556
        %1130 = vmatmul.mubr.bf16.gmra.mrb[0].mxu0 %v555
        %v1131 = vpop.f32.mrb[0].mxu0
        %v1132 = vadd.f32 %v630, %v1131
        %v1133 = vpop.f32.mrb[0].mxu0
        %v1134 = vadd.f32 %v634, %v1133
        %v1135 = vpop.f32.mrb[0].mxu0
        %v1136 = vadd.f32 %v630, %v1135
        %v1137 = vpop.f32.mrb[0].mxu0
        %v1138 = vadd.f32 %v634, %v1137
        %1139 = vmatprep.mubr.bf16.mxu0 %v558
        %1140 = vmatmul.mubr.bf16.gmra.mrb[0].mxu0 %v557
        %v1141 = vpop.f32.mrb[0].mxu0
        %v1142 = vadd.f32 %v630, %v1141
        %v1143 = vpop.f32.mrb[0].mxu0
        %v1144 = vadd.f32 %v634, %v1143
        %v1145 = vpop.f32.mrb[0].mxu0
        %v1146 = vadd.f32 %v630, %v1145
        %v1147 = vpop.f32.mrb[0].mxu0
        %v1148 = vadd.f32 %v634, %v1147
        %1149 = vmatprep.mubr.bf16.mxu0 %v560
        %1150 = vmatmul.mubr.bf16.gmra.mrb[0].mxu0 %v559
        %v1151 = vpop.f32.mrb[0].mxu0
        %v1152 = vadd.f32 %v630, %v1151
        %v1153 = vpop.f32.mrb[0].mxu0
        %v1154 = vadd.f32 %v634, %v1153
        %v1155 = vpop.f32.mrb[0].mxu0
        %v1156 = vadd.f32 %v630, %v1155
        %v1157 = vpop.f32.mrb[0].mxu0
        %v1158 = vadd.f32 %v634, %v1157
        %1159 = vdwg.mxu0
        %1160 = vmatprep.subr.bf16.mxu0 %v842
        %1161 = vmatpush1.bf16.msra.mxu0 %v841
        %1162 = vmatprep.subr.bf16.mxu0 %v846
        %1163 = vmatpush1.bf16.msra.mxu0 %v845
        %1164 = vmatprep.subr.bf16.mxu0 %v850
        %1165 = vmatpush1.bf16.msra.mxu0 %v849
        %1166 = vmatprep.subr.bf16.mxu0 %v854
        %1167 = vmatpush1.bf16.msra.mxu0 %v853
        %1168 = vmatprep.subr.bf16.mxu0 %v858
        %1169 = vmatpush1.bf16.msra.mxu0 %v857
        %1170 = vmatprep.subr.bf16.mxu0 %v862
        %1171 = vmatpush1.bf16.msra.mxu0 %v861
        %1172 = vmatprep.subr.bf16.mxu0 %v866
        %1173 = vmatpush1.bf16.msra.mxu0 %v865
        %1174 = vmatprep.subr.bf16.mxu0 %v870
        %1175 = vmatpush1.bf16.msra.mxu0 %v869
        %1176 = vmatprep.subr.bf16.mxu0 %v874
        %1177 = vmatpush1.bf16.msra.mxu0 %v873
        %1178 = vmatprep.subr.bf16.mxu0 %v878
        %1179 = vmatpush1.bf16.msra.mxu0 %v877
        %1180 = vmatprep.subr.bf16.mxu0 %v882
        %1181 = vmatpush1.bf16.msra.mxu0 %v881
        %1182 = vmatprep.subr.bf16.mxu0 %v886
        %1183 = vmatpush1.bf16.msra.mxu0 %v885
        %1184 = vmatprep.subr.bf16.mxu0 %v890
        %1185 = vmatpush1.bf16.msra.mxu0 %v889
        %1186 = vmatprep.subr.bf16.mxu0 %v894
        %1187 = vmatpush1.bf16.msra.mxu0 %v893
        %1188 = vmatprep.subr.bf16.mxu0 %v898
        %1189 = vmatpush1.bf16.msra.mxu0 %v897
        %1190 = vmatprep.subr.bf16.mxu0 %v902
        %1191 = vmatpush1.bf16.msra.mxu0 %v901
        %1192 = vmatprep.mubr.bf16.mxu0 %v530
        %1193 = vmatmul.mubr.bf16.gmra.mrb[0].mxu0 %v529
        %v1194 = vpop.f32.mrb[0].mxu0
        %v1195 = vadd.f32 %v638, %v1194
        %v1196 = vpop.f32.mrb[0].mxu0
        %v1197 = vadd.f32 %v642, %v1196
        %v1198 = vpop.f32.mrb[0].mxu0
        %v1199 = vadd.f32 %v638, %v1198
        %v1200 = vpop.f32.mrb[0].mxu0
        %v1201 = vadd.f32 %v642, %v1200
        %1202 = vmatprep.mubr.bf16.mxu0 %v532
        %1203 = vmatmul.mubr.bf16.gmra.mrb[0].mxu0 %v531
        %v1204 = vpop.f32.mrb[0].mxu0
        %v1205 = vadd.f32 %v638, %v1204
        %v1206 = vpop.f32.mrb[0].mxu0
        %v1207 = vadd.f32 %v642, %v1206
        %v1208 = vpop.f32.mrb[0].mxu0
        %v1209 = vadd.f32 %v638, %v1208
        %v1210 = vpop.f32.mrb[0].mxu0
        %v1211 = vadd.f32 %v642, %v1210
        %1212 = vmatprep.mubr.bf16.mxu0 %v534
        %1213 = vmatmul.mubr.bf16.gmra.mrb[0].mxu0 %v533
        %v1214 = vpop.f32.mrb[0].mxu0
        %v1215 = vadd.f32 %v638, %v1214
        %v1216 = vpop.f32.mrb[0].mxu0
        %v1217 = vadd.f32 %v642, %v1216
        %v1218 = vpop.f32.mrb[0].mxu0
        %v1219 = vadd.f32 %v638, %v1218
        %v1220 = vpop.f32.mrb[0].mxu0
        %v1221 = vadd.f32 %v642, %v1220
        %1222 = vmatprep.mubr.bf16.mxu0 %v536
        %1223 = vmatmul.mubr.bf16.gmra.mrb[0].mxu0 %v535
        %v1224 = vpop.f32.mrb[0].mxu0
        %v1225 = vadd.f32 %v638, %v1224
        %v1226 = vpop.f32.mrb[0].mxu0
        %v1227 = vadd.f32 %v642, %v1226
        %v1228 = vpop.f32.mrb[0].mxu0
        %v1229 = vadd.f32 %v638, %v1228
        %v1230 = vpop.f32.mrb[0].mxu0
        %v1231 = vadd.f32 %v642, %v1230
        %1232 = vmatprep.mubr.bf16.mxu0 %v538
        %1233 = vmatmul.mubr.bf16.gmra.mrb[0].mxu0 %v537
        %v1234 = vpop.f32.mrb[0].mxu0
        %v1235 = vadd.f32 %v638, %v1234
        %v1236 = vpop.f32.mrb[0].mxu0
        %v1237 = vadd.f32 %v642, %v1236
        %v1238 = vpop.f32.mrb[0].mxu0
        %v1239 = vadd.f32 %v638, %v1238
        %v1240 = vpop.f32.mrb[0].mxu0
        %v1241 = vadd.f32 %v642, %v1240
        %1242 = vmatprep.mubr.bf16.mxu0 %v540
        %1243 = vmatmul.mubr.bf16.gmra.mrb[0].mxu0 %v539
        %v1244 = vpop.f32.mrb[0].mxu0
        %v1245 = vadd.f32 %v638, %v1244
        %v1246 = vpop.f32.mrb[0].mxu0
        %v1247 = vadd.f32 %v642, %v1246
        %v1248 = vpop.f32.mrb[0].mxu0
        %v1249 = vadd.f32 %v638, %v1248
        %v1250 = vpop.f32.mrb[0].mxu0
        %v1251 = vadd.f32 %v642, %v1250
        %1252 = vmatprep.mubr.bf16.mxu0 %v542
        %1253 = vmatmul.mubr.bf16.gmra.mrb[0].mxu0 %v541
        %v1254 = vpop.f32.mrb[0].mxu0
        %v1255 = vadd.f32 %v638, %v1254
        %v1256 = vpop.f32.mrb[0].mxu0
        %v1257 = vadd.f32 %v642, %v1256
        %v1258 = vpop.f32.mrb[0].mxu0
        %v1259 = vadd.f32 %v638, %v1258
        %v1260 = vpop.f32.mrb[0].mxu0
        %v1261 = vadd.f32 %v642, %v1260
        %1262 = vmatprep.mubr.bf16.mxu0 %v544
        %1263 = vmatmul.mubr.bf16.gmra.mrb[0].mxu0 %v543
        %v1264 = vpop.f32.mrb[0].mxu0
        %v1265 = vadd.f32 %v638, %v1264
        %v1266 = vpop.f32.mrb[0].mxu0
        %v1267 = vadd.f32 %v642, %v1266
        %v1268 = vpop.f32.mrb[0].mxu0
        %v1269 = vadd.f32 %v638, %v1268
        %v1270 = vpop.f32.mrb[0].mxu0
        %v1271 = vadd.f32 %v642, %v1270
        %1272 = vmatprep.mubr.bf16.mxu0 %v546
        %1273 = vmatmul.mubr.bf16.gmra.mrb[0].mxu0 %v545
        %v1274 = vpop.f32.mrb[0].mxu0
        %v1275 = vadd.f32 %v638, %v1274
        %v1276 = vpop.f32.mrb[0].mxu0
        %v1277 = vadd.f32 %v642, %v1276
        %v1278 = vpop.f32.mrb[0].mxu0
        %v1279 = vadd.f32 %v638, %v1278
        %v1280 = vpop.f32.mrb[0].mxu0
        %v1281 = vadd.f32 %v642, %v1280
        %1282 = vmatprep.mubr.bf16.mxu0 %v548
        %1283 = vmatmul.mubr.bf16.gmra.mrb[0].mxu0 %v547
        %v1284 = vpop.f32.mrb[0].mxu0
        %v1285 = vadd.f32 %v638, %v1284
        %v1286 = vpop.f32.mrb[0].mxu0
        %v1287 = vadd.f32 %v642, %v1286
        %v1288 = vpop.f32.mrb[0].mxu0
        %v1289 = vadd.f32 %v638, %v1288
        %v1290 = vpop.f32.mrb[0].mxu0
        %v1291 = vadd.f32 %v642, %v1290
        %1292 = vmatprep.mubr.bf16.mxu0 %v550
        %1293 = vmatmul.mubr.bf16.gmra.mrb[0].mxu0 %v549
        %v1294 = vpop.f32.mrb[0].mxu0
        %v1295 = vadd.f32 %v638, %v1294
        %v1296 = vpop.f32.mrb[0].mxu0
        %v1297 = vadd.f32 %v642, %v1296
        %v1298 = vpop.f32.mrb[0].mxu0
        %v1299 = vadd.f32 %v638, %v1298
        %v1300 = vpop.f32.mrb[0].mxu0
        %v1301 = vadd.f32 %v642, %v1300
        %1302 = vmatprep.mubr.bf16.mxu0 %v552
        %1303 = vmatmul.mubr.bf16.gmra.mrb[0].mxu0 %v551
        %v1304 = vpop.f32.mrb[0].mxu0
        %v1305 = vadd.f32 %v638, %v1304
        %v1306 = vpop.f32.mrb[0].mxu0
        %v1307 = vadd.f32 %v642, %v1306
        %v1308 = vpop.f32.mrb[0].mxu0
        %v1309 = vadd.f32 %v638, %v1308
        %v1310 = vpop.f32.mrb[0].mxu0
        %v1311 = vadd.f32 %v642, %v1310
        %1312 = vmatprep.mubr.bf16.mxu0 %v554
        %1313 = vmatmul.mubr.bf16.gmra.mrb[0].mxu0 %v553
        %v1314 = vpop.f32.mrb[0].mxu0
        %v1315 = vadd.f32 %v638, %v1314
        %v1316 = vpop.f32.mrb[0].mxu0
        %v1317 = vadd.f32 %v642, %v1316
        %v1318 = vpop.f32.mrb[0].mxu0
        %v1319 = vadd.f32 %v638, %v1318
        %v1320 = vpop.f32.mrb[0].mxu0
        %v1321 = vadd.f32 %v642, %v1320
        %1322 = vmatprep.mubr.bf16.mxu0 %v556
        %1323 = vmatmul.mubr.bf16.gmra.mrb[0].mxu0 %v555
        %v1324 = vpop.f32.mrb[0].mxu0
        %v1325 = vadd.f32 %v638, %v1324
        %v1326 = vpop.f32.mrb[0].mxu0
        %v1327 = vadd.f32 %v642, %v1326
        %v1328 = vpop.f32.mrb[0].mxu0
        %v1329 = vadd.f32 %v638, %v1328
        %v1330 = vpop.f32.mrb[0].mxu0
        %v1331 = vadd.f32 %v642, %v1330
        %1332 = vmatprep.mubr.bf16.mxu0 %v558
        %1333 = vmatmul.mubr.bf16.gmra.mrb[0].mxu0 %v557
        %v1334 = vpop.f32.mrb[0].mxu0
        %v1335 = vadd.f32 %v638, %v1334
        %v1336 = vpop.f32.mrb[0].mxu0
        %v1337 = vadd.f32 %v642, %v1336
        %v1338 = vpop.f32.mrb[0].mxu0
        %v1339 = vadd.f32 %v638, %v1338
        %v1340 = vpop.f32.mrb[0].mxu0
        %v1341 = vadd.f32 %v642, %v1340
        %1342 = vmatprep.mubr.bf16.mxu0 %v560
        %1343 = vmatmul.mubr.bf16.gmra.mrb[0].mxu0 %v559
        %v1344 = vpop.f32.mrb[0].mxu0
        %v1345 = vadd.f32 %v638, %v1344
        %v1346 = vpop.f32.mrb[0].mxu0
        %v1347 = vadd.f32 %v642, %v1346
        %v1348 = vpop.f32.mrb[0].mxu0
        %v1349 = vadd.f32 %v638, %v1348
        %v1350 = vpop.f32.mrb[0].mxu0
        %v1351 = vadd.f32 %v642, %v1350
        %1352 = vdwg.mxu0
        %v1353 = vmax.f32 %v1002, 0.0
        %v1354 = vmax.f32 %v1004, 0.0
        %v1355 = vmax.f32 %v1195, 0.0
        %v1356 = vmax.f32 %v1197, 0.0
        %v1357 = vmax.f32 %v1006, 0.0
        %v1358 = vmax.f32 %v1008, 0.0
        %v1359 = vmax.f32 %v1199, 0.0
        %v1360 = vmax.f32 %v1201, 0.0
        %v1361 = vmax.f32 %v1012, 0.0
        %v1362 = vmax.f32 %v1014, 0.0
        %v1363 = vmax.f32 %v1205, 0.0
        %v1364 = vmax.f32 %v1207, 0.0
        %v1365 = vmax.f32 %v1016, 0.0
        %v1366 = vmax.f32 %v1018, 0.0
        %v1367 = vmax.f32 %v1209, 0.0
        %v1368 = vmax.f32 %v1211, 0.0
        %v1369 = vmax.f32 %v1022, 0.0
        %v1370 = vmax.f32 %v1024, 0.0
        %v1371 = vmax.f32 %v1215, 0.0
        %v1372 = vmax.f32 %v1217, 0.0
        %v1373 = vmax.f32 %v1026, 0.0
        %v1374 = vmax.f32 %v1028, 0.0
        %v1375 = vmax.f32 %v1219, 0.0
        %v1376 = vmax.f32 %v1221, 0.0
        %v1377 = vmax.f32 %v1032, 0.0
        %v1378 = vmax.f32 %v1034, 0.0
        %v1379 = vmax.f32 %v1225, 0.0
        %v1380 = vmax.f32 %v1227, 0.0
        %v1381 = vmax.f32 %v1036, 0.0
        %v1382 = vmax.f32 %v1038, 0.0
        %v1383 = vmax.f32 %v1229, 0.0
        %v1384 = vmax.f32 %v1231, 0.0
        %v1385 = vmax.f32 %v1042, 0.0
        %v1386 = vmax.f32 %v1044, 0.0
        %v1387 = vmax.f32 %v1235, 0.0
        %v1388 = vmax.f32 %v1237, 0.0
        %v1389 = vmax.f32 %v1046, 0.0
        %v1390 = vmax.f32 %v1048, 0.0
        %v1391 = vmax.f32 %v1239, 0.0
        %v1392 = vmax.f32 %v1241, 0.0
        %v1393 = vmax.f32 %v1052, 0.0
        %v1394 = vmax.f32 %v1054, 0.0
        %v1395 = vmax.f32 %v1245, 0.0
        %v1396 = vmax.f32 %v1247, 0.0
        %v1397 = vmax.f32 %v1056, 0.0
        %v1398 = vmax.f32 %v1058, 0.0
        %v1399 = vmax.f32 %v1249, 0.0
        %v1400 = vmax.f32 %v1251, 0.0
        %v1401 = vmax.f32 %v1062, 0.0
        %v1402 = vmax.f32 %v1064, 0.0
        %v1403 = vmax.f32 %v1255, 0.0
        %v1404 = vmax.f32 %v1257, 0.0
        %v1405 = vmax.f32 %v1066, 0.0
        %v1406 = vmax.f32 %v1068, 0.0
        %v1407 = vmax.f32 %v1259, 0.0
        %v1408 = vmax.f32 %v1261, 0.0
        %v1409 = vmax.f32 %v1072, 0.0
        %v1410 = vmax.f32 %v1074, 0.0
        %v1411 = vmax.f32 %v1265, 0.0
        %v1412 = vmax.f32 %v1267, 0.0
        %v1413 = vmax.f32 %v1076, 0.0
        %v1414 = vmax.f32 %v1078, 0.0
        %v1415 = vmax.f32 %v1269, 0.0
        %v1416 = vmax.f32 %v1271, 0.0
        %v1417 = vmax.f32 %v1082, 0.0
        %v1418 = vmax.f32 %v1084, 0.0
        %v1419 = vmax.f32 %v1275, 0.0
        %v1420 = vmax.f32 %v1277, 0.0
        %v1421 = vmax.f32 %v1086, 0.0
        %v1422 = vmax.f32 %v1088, 0.0
        %v1423 = vmax.f32 %v1279, 0.0
        %v1424 = vmax.f32 %v1281, 0.0
        %v1425 = vmax.f32 %v1092, 0.0
        %v1426 = vmax.f32 %v1094, 0.0
        %v1427 = vmax.f32 %v1285, 0.0
        %v1428 = vmax.f32 %v1287, 0.0
        %v1429 = vmax.f32 %v1096, 0.0
        %v1430 = vmax.f32 %v1098, 0.0
        %v1431 = vmax.f32 %v1289, 0.0
        %v1432 = vmax.f32 %v1291, 0.0
        %v1433 = vmax.f32 %v1102, 0.0
        %v1434 = vmax.f32 %v1104, 0.0
        %v1435 = vmax.f32 %v1295, 0.0
        %v1436 = vmax.f32 %v1297, 0.0
        %v1437 = vmax.f32 %v1106, 0.0
        %v1438 = vmax.f32 %v1108, 0.0
        %v1439 = vmax.f32 %v1299, 0.0
        %v1440 = vmax.f32 %v1301, 0.0
        %v1441 = vmax.f32 %v1112, 0.0
        %v1442 = vmax.f32 %v1114, 0.0
        %v1443 = vmax.f32 %v1305, 0.0
        %v1444 = vmax.f32 %v1307, 0.0
        %v1445 = vmax.f32 %v1116, 0.0
        %v1446 = vmax.f32 %v1118, 0.0
        %v1447 = vmax.f32 %v1309, 0.0
        %v1448 = vmax.f32 %v1311, 0.0
        %v1449 = vmax.f32 %v1122, 0.0
        %v1450 = vmax.f32 %v1124, 0.0
        %v1451 = vmax.f32 %v1315, 0.0
        %v1452 = vmax.f32 %v1317, 0.0
        %v1453 = vmax.f32 %v1126, 0.0
        %v1454 = vmax.f32 %v1128, 0.0
        %v1455 = vmax.f32 %v1319, 0.0
        %v1456 = vmax.f32 %v1321, 0.0
        %v1457 = vmax.f32 %v1132, 0.0
        %v1458 = vmax.f32 %v1134, 0.0
        %v1459 = vmax.f32 %v1325, 0.0
        %v1460 = vmax.f32 %v1327, 0.0
        %v1461 = vmax.f32 %v1136, 0.0
        %v1462 = vmax.f32 %v1138, 0.0
        %v1463 = vmax.f32 %v1329, 0.0
        %v1464 = vmax.f32 %v1331, 0.0
        %v1465 = vmax.f32 %v1142, 0.0
        %v1466 = vmax.f32 %v1144, 0.0
        %v1467 = vmax.f32 %v1335, 0.0
        %v1468 = vmax.f32 %v1337, 0.0
        %v1469 = vmax.f32 %v1146, 0.0
        %v1470 = vmax.f32 %v1148, 0.0
        %v1471 = vmax.f32 %v1339, 0.0
        %v1472 = vmax.f32 %v1341, 0.0
        %v1473 = vmax.f32 %v1152, 0.0
        %v1474 = vmax.f32 %v1154, 0.0
        %v1475 = vmax.f32 %v1345, 0.0
        %v1476 = vmax.f32 %v1347, 0.0
        %v1477 = vmax.f32 %v1156, 0.0
        %v1478 = vmax.f32 %v1158, 0.0
        %v1479 = vmax.f32 %v1349, 0.0
        %v1480 = vmax.f32 %v1351, 0.0
        %v1481 = vpack.c.bf16 %v1357, %v1353
        %v1482 = vpack.c.bf16 %v1358, %v1354
        %v1483 = vpack.c.bf16 %v1359, %v1355
        %v1484 = vpack.c.bf16 %v1360, %v1356
        %v1485 = vpack.c.bf16 %v1365, %v1361
        %v1486 = vpack.c.bf16 %v1366, %v1362
        %v1487 = vpack.c.bf16 %v1367, %v1363
        %v1488 = vpack.c.bf16 %v1368, %v1364
        %v1489 = vpack.c.bf16 %v1373, %v1369
        %v1490 = vpack.c.bf16 %v1374, %v1370
        %v1491 = vpack.c.bf16 %v1375, %v1371
        %v1492 = vpack.c.bf16 %v1376, %v1372
        %v1493 = vpack.c.bf16 %v1381, %v1377
        %v1494 = vpack.c.bf16 %v1382, %v1378
        %v1495 = vpack.c.bf16 %v1383, %v1379
        %v1496 = vpack.c.bf16 %v1384, %v1380
        %v1497 = vpack.c.bf16 %v1389, %v1385
        %v1498 = vpack.c.bf16 %v1390, %v1386
        %v1499 = vpack.c.bf16 %v1391, %v1387
        %v1500 = vpack.c.bf16 %v1392, %v1388
        %v1501 = vpack.c.bf16 %v1397, %v1393
        %v1502 = vpack.c.bf16 %v1398, %v1394
        %v1503 = vpack.c.bf16 %v1399, %v1395
        %v1504 = vpack.c.bf16 %v1400, %v1396
        %v1505 = vpack.c.bf16 %v1405, %v1401
        %v1506 = vpack.c.bf16 %v1406, %v1402
        %v1507 = vpack.c.bf16 %v1407, %v1403
        %v1508 = vpack.c.bf16 %v1408, %v1404
        %v1509 = vpack.c.bf16 %v1413, %v1409
        %v1510 = vpack.c.bf16 %v1414, %v1410
        %v1511 = vpack.c.bf16 %v1415, %v1411
        %v1512 = vpack.c.bf16 %v1416, %v1412
        %v1513 = vpack.c.bf16 %v1421, %v1417
        %v1514 = vpack.c.bf16 %v1422, %v1418
        %v1515 = vpack.c.bf16 %v1423, %v1419
        %v1516 = vpack.c.bf16 %v1424, %v1420
        %v1517 = vpack.c.bf16 %v1429, %v1425
        %v1518 = vpack.c.bf16 %v1430, %v1426
        %v1519 = vpack.c.bf16 %v1431, %v1427
        %v1520 = vpack.c.bf16 %v1432, %v1428
        %v1521 = vpack.c.bf16 %v1437, %v1433
        %v1522 = vpack.c.bf16 %v1438, %v1434
        %v1523 = vpack.c.bf16 %v1439, %v1435
        %v1524 = vpack.c.bf16 %v1440, %v1436
        %v1525 = vpack.c.bf16 %v1445, %v1441
        %v1526 = vpack.c.bf16 %v1446, %v1442
        %v1527 = vpack.c.bf16 %v1447, %v1443
        %v1528 = vpack.c.bf16 %v1448, %v1444
        %v1529 = vpack.c.bf16 %v1453, %v1449
        %v1530 = vpack.c.bf16 %v1454, %v1450
        %v1531 = vpack.c.bf16 %v1455, %v1451
        %v1532 = vpack.c.bf16 %v1456, %v1452
        %v1533 = vpack.c.bf16 %v1461, %v1457
        %v1534 = vpack.c.bf16 %v1462, %v1458
        %v1535 = vpack.c.bf16 %v1463, %v1459
        %v1536 = vpack.c.bf16 %v1464, %v1460
        %v1537 = vpack.c.bf16 %v1469, %v1465
        %v1538 = vpack.c.bf16 %v1470, %v1466
        %v1539 = vpack.c.bf16 %v1471, %v1467
        %v1540 = vpack.c.bf16 %v1472, %v1468
        %v1541 = vpack.c.bf16 %v1477, %v1473
        %v1542 = vpack.c.bf16 %v1478, %v1474
        %v1543 = vpack.c.bf16 %v1479, %v1475
        %v1544 = vpack.c.bf16 %v1480, %v1476
        %v1545 = vld [vmem:[#allocation10] sm:$0xff]
        %v1546 = vld [vmem:[#allocation10 + $0x8] sm:$0xff]
        %v1547 = vld [vmem:[#allocation10 + $0x10] sm:$0xff]
        %v1548 = vld [vmem:[#allocation10 + $0x18] sm:$0xff]
        %v1549 = vld [vmem:[#allocation10 + $0x20] sm:$0xff]
        %v1550 = vld [vmem:[#allocation10 + $0x28] sm:$0xff]
        %v1551 = vld [vmem:[#allocation10 + $0x30] sm:$0xff]
        %v1552 = vld [vmem:[#allocation10 + $0x38] sm:$0xff]
        %v1553 = vld [vmem:[#allocation10 + $0x40] sm:$0xff]
        %v1554 = vld [vmem:[#allocation10 + $0x48] sm:$0xff]
        %v1555 = vld [vmem:[#allocation10 + $0x50] sm:$0xff]
        %v1556 = vld [vmem:[#allocation10 + $0x58] sm:$0xff]
        %v1557 = vld [vmem:[#allocation10 + $0x60] sm:$0xff]
        %v1558 = vld [vmem:[#allocation10 + $0x68] sm:$0xff]
        %v1559 = vld [vmem:[#allocation10 + $0x70] sm:$0xff]
        %v1560 = vld [vmem:[#allocation10 + $0x78] sm:$0xff]
        %v1561 = vld [vmem:[#allocation10 + $0x80] sm:$0xff]
        %v1562 = vld [vmem:[#allocation10 + $0x88] sm:$0xff]
        %v1563 = vld [vmem:[#allocation10 + $0x90] sm:$0xff]
        %v1564 = vld [vmem:[#allocation10 + $0x98] sm:$0xff]
        %v1565 = vld [vmem:[#allocation10 + $0xa0] sm:$0xff]
        %v1566 = vld [vmem:[#allocation10 + $0xa8] sm:$0xff]
        %v1567 = vld [vmem:[#allocation10 + $0xb0] sm:$0xff]
        %v1568 = vld [vmem:[#allocation10 + $0xb8] sm:$0xff]
        %v1569 = vld [vmem:[#allocation10 + $0xc0] sm:$0xff]
        %v1570 = vld [vmem:[#allocation10 + $0xc8] sm:$0xff]
        %v1571 = vld [vmem:[#allocation10 + $0xd0] sm:$0xff]
        %v1572 = vld [vmem:[#allocation10 + $0xd8] sm:$0xff]
        %v1573 = vld [vmem:[#allocation10 + $0xe0] sm:$0xff]
        %v1574 = vld [vmem:[#allocation10 + $0xe8] sm:$0xff]
        %v1575 = vld [vmem:[#allocation10 + $0xf0] sm:$0xff]
        %v1576 = vld [vmem:[#allocation10 + $0xf8] sm:$0xff]
        %v1577 = vld [vmem:[#allocation10 + $0x100] sm:$0xff]
        %v1578 = vld [vmem:[#allocation10 + $0x108] sm:$0xff]
        %v1579 = vld [vmem:[#allocation10 + $0x110] sm:$0xff]
        %v1580 = vld [vmem:[#allocation10 + $0x118] sm:$0xff]
        %v1581 = vld [vmem:[#allocation10 + $0x120] sm:$0xff]
        %v1582 = vld [vmem:[#allocation10 + $0x128] sm:$0xff]
        %v1583 = vld [vmem:[#allocation10 + $0x130] sm:$0xff]
        %v1584 = vld [vmem:[#allocation10 + $0x138] sm:$0xff]
        %v1585 = vld [vmem:[#allocation10 + $0x140] sm:$0xff]
        %v1586 = vld [vmem:[#allocation10 + $0x148] sm:$0xff]
        %v1587 = vld [vmem:[#allocation10 + $0x150] sm:$0xff]
        %v1588 = vld [vmem:[#allocation10 + $0x158] sm:$0xff]
        %v1589 = vld [vmem:[#allocation10 + $0x160] sm:$0xff]
        %v1590 = vld [vmem:[#allocation10 + $0x168] sm:$0xff]
        %v1591 = vld [vmem:[#allocation10 + $0x170] sm:$0xff]
        %v1592 = vld [vmem:[#allocation10 + $0x178] sm:$0xff]
        %v1593 = vld [vmem:[#allocation10 + $0x180] sm:$0xff]
        %v1594 = vld [vmem:[#allocation10 + $0x188] sm:$0xff]
        %v1595 = vld [vmem:[#allocation10 + $0x190] sm:$0xff]
        %v1596 = vld [vmem:[#allocation10 + $0x198] sm:$0xff]
        %v1597 = vld [vmem:[#allocation10 + $0x1a0] sm:$0xff]
        %v1598 = vld [vmem:[#allocation10 + $0x1a8] sm:$0xff]
        %v1599 = vld [vmem:[#allocation10 + $0x1b0] sm:$0xff]
        %v1600 = vld [vmem:[#allocation10 + $0x1b8] sm:$0xff]
        %v1601 = vld [vmem:[#allocation10 + $0x1c0] sm:$0xff]
        %v1602 = vld [vmem:[#allocation10 + $0x1c8] sm:$0xff]
        %v1603 = vld [vmem:[#allocation10 + $0x1d0] sm:$0xff]
        %v1604 = vld [vmem:[#allocation10 + $0x1d8] sm:$0xff]
        %v1605 = vld [vmem:[#allocation10 + $0x1e0] sm:$0xff]
        %v1606 = vld [vmem:[#allocation10 + $0x1e8] sm:$0xff]
        %v1607 = vld [vmem:[#allocation10 + $0x1f0] sm:$0xff]
        %v1608 = vld [vmem:[#allocation10 + $0x1f8] sm:$0xff]
        %v1609 = vld [vmem:[#allocation10 + $0x200] sm:$0xff]
        %v1610 = vld [vmem:[#allocation10 + $0x208] sm:$0xff]
        %v1611 = vld [vmem:[#allocation10 + $0x210] sm:$0xff]
        %v1612 = vld [vmem:[#allocation10 + $0x218] sm:$0xff]
        %v1613 = vld [vmem:[#allocation10 + $0x220] sm:$0xff]
        %v1614 = vld [vmem:[#allocation10 + $0x228] sm:$0xff]
        %v1615 = vld [vmem:[#allocation10 + $0x230] sm:$0xff]
        %v1616 = vld [vmem:[#allocation10 + $0x238] sm:$0xff]
        %v1617 = vld [vmem:[#allocation10 + $0x240] sm:$0xff]
        %v1618 = vld [vmem:[#allocation10 + $0x248] sm:$0xff]
        %v1619 = vld [vmem:[#allocation10 + $0x250] sm:$0xff]
        %v1620 = vld [vmem:[#allocation10 + $0x258] sm:$0xff]
        %v1621 = vld [vmem:[#allocation10 + $0x260] sm:$0xff]
        %v1622 = vld [vmem:[#allocation10 + $0x268] sm:$0xff]
        %v1623 = vld [vmem:[#allocation10 + $0x270] sm:$0xff]
        %v1624 = vld [vmem:[#allocation10 + $0x278] sm:$0xff]
        %v1625 = vld [vmem:[#allocation10 + $0x280] sm:$0xff]
        %v1626 = vld [vmem:[#allocation10 + $0x288] sm:$0xff]
        %v1627 = vld [vmem:[#allocation10 + $0x290] sm:$0xff]
        %v1628 = vld [vmem:[#allocation10 + $0x298] sm:$0xff]
        %v1629 = vld [vmem:[#allocation10 + $0x2a0] sm:$0xff]
        %v1630 = vld [vmem:[#allocation10 + $0x2a8] sm:$0xff]
        %v1631 = vld [vmem:[#allocation10 + $0x2b0] sm:$0xff]
        %v1632 = vld [vmem:[#allocation10 + $0x2b8] sm:$0xff]
        %v1633 = vld [vmem:[#allocation10 + $0x2c0] sm:$0xff]
        %v1634 = vld [vmem:[#allocation10 + $0x2c8] sm:$0xff]
        %v1635 = vld [vmem:[#allocation10 + $0x2d0] sm:$0xff]
        %v1636 = vld [vmem:[#allocation10 + $0x2d8] sm:$0xff]
        %v1637 = vld [vmem:[#allocation10 + $0x2e0] sm:$0xff]
        %v1638 = vld [vmem:[#allocation10 + $0x2e8] sm:$0xff]
        %v1639 = vld [vmem:[#allocation10 + $0x2f0] sm:$0xff]
        %v1640 = vld [vmem:[#allocation10 + $0x2f8] sm:$0xff]
        %v1641 = vld [vmem:[#allocation10 + $0x300] sm:$0xff]
        %v1642 = vld [vmem:[#allocation10 + $0x308] sm:$0xff]
        %v1643 = vld [vmem:[#allocation10 + $0x310] sm:$0xff]
        %v1644 = vld [vmem:[#allocation10 + $0x318] sm:$0xff]
        %v1645 = vld [vmem:[#allocation10 + $0x320] sm:$0xff]
        %v1646 = vld [vmem:[#allocation10 + $0x328] sm:$0xff]
        %v1647 = vld [vmem:[#allocation10 + $0x330] sm:$0xff]
        %v1648 = vld [vmem:[#allocation10 + $0x338] sm:$0xff]
        %v1649 = vld [vmem:[#allocation10 + $0x340] sm:$0xff]
        %v1650 = vld [vmem:[#allocation10 + $0x348] sm:$0xff]
        %v1651 = vld [vmem:[#allocation10 + $0x350] sm:$0xff]
        %v1652 = vld [vmem:[#allocation10 + $0x358] sm:$0xff]
        %v1653 = vld [vmem:[#allocation10 + $0x360] sm:$0xff]
        %v1654 = vld [vmem:[#allocation10 + $0x368] sm:$0xff]
        %v1655 = vld [vmem:[#allocation10 + $0x370] sm:$0xff]
        %v1656 = vld [vmem:[#allocation10 + $0x378] sm:$0xff]
        %v1657 = vld [vmem:[#allocation10 + $0x380] sm:$0xff]
        %v1658 = vld [vmem:[#allocation10 + $0x388] sm:$0xff]
        %v1659 = vld [vmem:[#allocation10 + $0x390] sm:$0xff]
        %v1660 = vld [vmem:[#allocation10 + $0x398] sm:$0xff]
        %v1661 = vld [vmem:[#allocation10 + $0x3a0] sm:$0xff]
        %v1662 = vld [vmem:[#allocation10 + $0x3a8] sm:$0xff]
        %v1663 = vld [vmem:[#allocation10 + $0x3b0] sm:$0xff]
        %v1664 = vld [vmem:[#allocation10 + $0x3b8] sm:$0xff]
        %v1665 = vld [vmem:[#allocation10 + $0x3c0] sm:$0xff]
        %v1666 = vld [vmem:[#allocation10 + $0x3c8] sm:$0xff]
        %v1667 = vld [vmem:[#allocation10 + $0x3d0] sm:$0xff]
        %v1668 = vld [vmem:[#allocation10 + $0x3d8] sm:$0xff]
        %v1669 = vld [vmem:[#allocation10 + $0x3e0] sm:$0xff]
        %v1670 = vld [vmem:[#allocation10 + $0x3e8] sm:$0xff]
        %v1671 = vld [vmem:[#allocation10 + $0x3f0] sm:$0xff]
        %v1672 = vld [vmem:[#allocation10 + $0x3f8] sm:$0xff]
        %v1673 = vld [vmem:[%s4] sm:$0xf]
        %v1675 = vlaneseq
        %v1676 = vshrl.u32 %v1675, 7
        %v1677 = vsub.s32 0, %v1676
        %v1678 = vrot.slane %v1673, %v1677
        %v1679 = vlaneseq
        %v1680 = vshrl.u32 %v1679, 7
        %v1681 = vsub.s32 1, %v1680
        %v1682 = vrot.slane %v1673, %v1681
        %v1683 = vlaneseq
        %v1684 = vshrl.u32 %v1683, 7
        %v1685 = vsub.s32 2, %v1684
        %v1686 = vrot.slane %v1673, %v1685
        %v1687 = vlaneseq
        %v1688 = vshrl.u32 %v1687, 7
        %v1689 = vsub.s32 3, %v1688
        %v1690 = vrot.slane %v1673, %v1689
        %v1823 = vunpack.c.l.b16 %v1545
        %v1824 = vunpack.c.h.b16 %v1545
        %v1825 = vunpack.c.l.b16 %v1546
        %v1826 = vunpack.c.h.b16 %v1546
        %v1827 = vunpack.c.l.b16 %v1547
        %v1828 = vunpack.c.h.b16 %v1547
        %v1829 = vunpack.c.l.b16 %v1548
        %v1830 = vunpack.c.h.b16 %v1548
        %v1831 = vunpack.c.l.b16 %v1549
        %v1832 = vunpack.c.h.b16 %v1549
        %v1833 = vunpack.c.l.b16 %v1550
        %v1834 = vunpack.c.h.b16 %v1550
        %v1835 = vunpack.c.l.b16 %v1551
        %v1836 = vunpack.c.h.b16 %v1551
        %v1837 = vunpack.c.l.b16 %v1552
        %v1838 = vunpack.c.h.b16 %v1552
        %v1839 = vunpack.c.l.b16 %v1553
        %v1840 = vunpack.c.h.b16 %v1553
        %v1841 = vunpack.c.l.b16 %v1554
        %v1842 = vunpack.c.h.b16 %v1554
        %v1843 = vunpack.c.l.b16 %v1555
        %v1844 = vunpack.c.h.b16 %v1555
        %v1845 = vunpack.c.l.b16 %v1556
        %v1846 = vunpack.c.h.b16 %v1556
        %v1847 = vunpack.c.l.b16 %v1557
        %v1848 = vunpack.c.h.b16 %v1557
        %v1849 = vunpack.c.l.b16 %v1558
        %v1850 = vunpack.c.h.b16 %v1558
        %v1851 = vunpack.c.l.b16 %v1559
        %v1852 = vunpack.c.h.b16 %v1559
        %v1853 = vunpack.c.l.b16 %v1560
        %v1854 = vunpack.c.h.b16 %v1560
        %v1855 = vunpack.c.l.b16 %v1561
        %v1856 = vunpack.c.h.b16 %v1561
        %v1857 = vunpack.c.l.b16 %v1562
        %v1858 = vunpack.c.h.b16 %v1562
        %v1859 = vunpack.c.l.b16 %v1563
        %v1860 = vunpack.c.h.b16 %v1563
        %v1861 = vunpack.c.l.b16 %v1564
        %v1862 = vunpack.c.h.b16 %v1564
        %v1863 = vunpack.c.l.b16 %v1565
        %v1864 = vunpack.c.h.b16 %v1565
        %v1865 = vunpack.c.l.b16 %v1566
        %v1866 = vunpack.c.h.b16 %v1566
        %v1867 = vunpack.c.l.b16 %v1567
        %v1868 = vunpack.c.h.b16 %v1567
        %v1869 = vunpack.c.l.b16 %v1568
        %v1870 = vunpack.c.h.b16 %v1568
        %v1871 = vunpack.c.l.b16 %v1569
        %v1872 = vunpack.c.h.b16 %v1569
        %v1873 = vunpack.c.l.b16 %v1570
        %v1874 = vunpack.c.h.b16 %v1570
        %v1875 = vunpack.c.l.b16 %v1571
        %v1876 = vunpack.c.h.b16 %v1571
        %v1877 = vunpack.c.l.b16 %v1572
        %v1878 = vunpack.c.h.b16 %v1572
        %v1879 = vunpack.c.l.b16 %v1573
        %v1880 = vunpack.c.h.b16 %v1573
        %v1881 = vunpack.c.l.b16 %v1574
        %v1882 = vunpack.c.h.b16 %v1574
        %v1883 = vunpack.c.l.b16 %v1575
        %v1884 = vunpack.c.h.b16 %v1575
        %v1885 = vunpack.c.l.b16 %v1576
        %v1886 = vunpack.c.h.b16 %v1576
        %v1887 = vunpack.c.l.b16 %v1577
        %v1888 = vunpack.c.h.b16 %v1577
        %v1889 = vunpack.c.l.b16 %v1578
        %v1890 = vunpack.c.h.b16 %v1578
        %v1891 = vunpack.c.l.b16 %v1579
        %v1892 = vunpack.c.h.b16 %v1579
        %v1893 = vunpack.c.l.b16 %v1580
        %v1894 = vunpack.c.h.b16 %v1580
        %v1895 = vunpack.c.l.b16 %v1581
        %v1896 = vunpack.c.h.b16 %v1581
        %v1897 = vunpack.c.l.b16 %v1582
        %v1898 = vunpack.c.h.b16 %v1582
        %v1899 = vunpack.c.l.b16 %v1583
        %v1900 = vunpack.c.h.b16 %v1583
        %v1901 = vunpack.c.l.b16 %v1584
        %v1902 = vunpack.c.h.b16 %v1584
        %v1903 = vunpack.c.l.b16 %v1585
        %v1904 = vunpack.c.h.b16 %v1585
        %v1905 = vunpack.c.l.b16 %v1586
        %v1906 = vunpack.c.h.b16 %v1586
        %v1907 = vunpack.c.l.b16 %v1587
        %v1908 = vunpack.c.h.b16 %v1587
        %v1909 = vunpack.c.l.b16 %v1588
        %v1910 = vunpack.c.h.b16 %v1588
        %v1911 = vunpack.c.l.b16 %v1589
        %v1912 = vunpack.c.h.b16 %v1589
        %v1913 = vunpack.c.l.b16 %v1590
        %v1914 = vunpack.c.h.b16 %v1590
        %v1915 = vunpack.c.l.b16 %v1591
        %v1916 = vunpack.c.h.b16 %v1591
        %v1917 = vunpack.c.l.b16 %v1592
        %v1918 = vunpack.c.h.b16 %v1592
        %v1919 = vunpack.c.l.b16 %v1593
        %v1920 = vunpack.c.h.b16 %v1593
        %v1921 = vunpack.c.l.b16 %v1594
        %v1922 = vunpack.c.h.b16 %v1594
        %v1923 = vunpack.c.l.b16 %v1595
        %v1924 = vunpack.c.h.b16 %v1595
        %v1925 = vunpack.c.l.b16 %v1596
        %v1926 = vunpack.c.h.b16 %v1596
        %v1927 = vunpack.c.l.b16 %v1597
        %v1928 = vunpack.c.h.b16 %v1597
        %v1929 = vunpack.c.l.b16 %v1598
        %v1930 = vunpack.c.h.b16 %v1598
        %v1931 = vunpack.c.l.b16 %v1599
        %v1932 = vunpack.c.h.b16 %v1599
        %v1933 = vunpack.c.l.b16 %v1600
        %v1934 = vunpack.c.h.b16 %v1600
        %v1935 = vunpack.c.l.b16 %v1601
        %v1936 = vunpack.c.h.b16 %v1601
        %v1937 = vunpack.c.l.b16 %v1602
        %v1938 = vunpack.c.h.b16 %v1602
        %v1939 = vunpack.c.l.b16 %v1603
        %v1940 = vunpack.c.h.b16 %v1603
        %v1941 = vunpack.c.l.b16 %v1604
        %v1942 = vunpack.c.h.b16 %v1604
        %v1943 = vunpack.c.l.b16 %v1605
        %v1944 = vunpack.c.h.b16 %v1605
        %v1945 = vunpack.c.l.b16 %v1606
        %v1946 = vunpack.c.h.b16 %v1606
        %v1947 = vunpack.c.l.b16 %v1607
        %v1948 = vunpack.c.h.b16 %v1607
        %v1949 = vunpack.c.l.b16 %v1608
        %v1950 = vunpack.c.h.b16 %v1608
        %v1951 = vunpack.c.l.b16 %v1609
        %v1952 = vunpack.c.h.b16 %v1609
        %v1953 = vunpack.c.l.b16 %v1610
        %v1954 = vunpack.c.h.b16 %v1610
        %v1955 = vunpack.c.l.b16 %v1611
        %v1956 = vunpack.c.h.b16 %v1611
        %v1957 = vunpack.c.l.b16 %v1612
        %v1958 = vunpack.c.h.b16 %v1612
        %v1959 = vunpack.c.l.b16 %v1613
        %v1960 = vunpack.c.h.b16 %v1613
        %v1961 = vunpack.c.l.b16 %v1614
        %v1962 = vunpack.c.h.b16 %v1614
        %v1963 = vunpack.c.l.b16 %v1615
        %v1964 = vunpack.c.h.b16 %v1615
        %v1965 = vunpack.c.l.b16 %v1616
        %v1966 = vunpack.c.h.b16 %v1616
        %v1967 = vunpack.c.l.b16 %v1617
        %v1968 = vunpack.c.h.b16 %v1617
        %v1969 = vunpack.c.l.b16 %v1618
        %v1970 = vunpack.c.h.b16 %v1618
        %v1971 = vunpack.c.l.b16 %v1619
        %v1972 = vunpack.c.h.b16 %v1619
        %v1973 = vunpack.c.l.b16 %v1620
        %v1974 = vunpack.c.h.b16 %v1620
        %v1975 = vunpack.c.l.b16 %v1621
        %v1976 = vunpack.c.h.b16 %v1621
        %v1977 = vunpack.c.l.b16 %v1622
        %v1978 = vunpack.c.h.b16 %v1622
        %v1979 = vunpack.c.l.b16 %v1623
        %v1980 = vunpack.c.h.b16 %v1623
        %v1981 = vunpack.c.l.b16 %v1624
        %v1982 = vunpack.c.h.b16 %v1624
        %v1983 = vunpack.c.l.b16 %v1625
        %v1984 = vunpack.c.h.b16 %v1625
        %v1985 = vunpack.c.l.b16 %v1626
        %v1986 = vunpack.c.h.b16 %v1626
        %v1987 = vunpack.c.l.b16 %v1627
        %v1988 = vunpack.c.h.b16 %v1627
        %v1989 = vunpack.c.l.b16 %v1628
        %v1990 = vunpack.c.h.b16 %v1628
        %v1991 = vunpack.c.l.b16 %v1629
        %v1992 = vunpack.c.h.b16 %v1629
        %v1993 = vunpack.c.l.b16 %v1630
        %v1994 = vunpack.c.h.b16 %v1630
        %v1995 = vunpack.c.l.b16 %v1631
        %v1996 = vunpack.c.h.b16 %v1631
        %v1997 = vunpack.c.l.b16 %v1632
        %v1998 = vunpack.c.h.b16 %v1632
        %v1999 = vunpack.c.l.b16 %v1633
        %v2000 = vunpack.c.h.b16 %v1633
        %v2001 = vunpack.c.l.b16 %v1634
        %v2002 = vunpack.c.h.b16 %v1634
        %v2003 = vunpack.c.l.b16 %v1635
        %v2004 = vunpack.c.h.b16 %v1635
        %v2005 = vunpack.c.l.b16 %v1636
        %v2006 = vunpack.c.h.b16 %v1636
        %v2007 = vunpack.c.l.b16 %v1637
        %v2008 = vunpack.c.h.b16 %v1637
        %v2009 = vunpack.c.l.b16 %v1638
        %v2010 = vunpack.c.h.b16 %v1638
        %v2011 = vunpack.c.l.b16 %v1639
        %v2012 = vunpack.c.h.b16 %v1639
        %v2013 = vunpack.c.l.b16 %v1640
        %v2014 = vunpack.c.h.b16 %v1640
        %v2015 = vunpack.c.l.b16 %v1641
        %v2016 = vunpack.c.h.b16 %v1641
        %v2017 = vunpack.c.l.b16 %v1642
        %v2018 = vunpack.c.h.b16 %v1642
        %v2019 = vunpack.c.l.b16 %v1643
        %v2020 = vunpack.c.h.b16 %v1643
        %v2021 = vunpack.c.l.b16 %v1644
        %v2022 = vunpack.c.h.b16 %v1644
        %v2023 = vunpack.c.l.b16 %v1645
        %v2024 = vunpack.c.h.b16 %v1645
        %v2025 = vunpack.c.l.b16 %v1646
        %v2026 = vunpack.c.h.b16 %v1646
        %v2027 = vunpack.c.l.b16 %v1647
        %v2028 = vunpack.c.h.b16 %v1647
        %v2029 = vunpack.c.l.b16 %v1648
        %v2030 = vunpack.c.h.b16 %v1648
        %v2031 = vunpack.c.l.b16 %v1649
        %v2032 = vunpack.c.h.b16 %v1649
        %v2033 = vunpack.c.l.b16 %v1650
        %v2034 = vunpack.c.h.b16 %v1650
        %v2035 = vunpack.c.l.b16 %v1651
        %v2036 = vunpack.c.h.b16 %v1651
        %v2037 = vunpack.c.l.b16 %v1652
        %v2038 = vunpack.c.h.b16 %v1652
        %v2039 = vunpack.c.l.b16 %v1653
        %v2040 = vunpack.c.h.b16 %v1653
        %v2041 = vunpack.c.l.b16 %v1654
        %v2042 = vunpack.c.h.b16 %v1654
        %v2043 = vunpack.c.l.b16 %v1655
        %v2044 = vunpack.c.h.b16 %v1655
        %v2045 = vunpack.c.l.b16 %v1656
        %v2046 = vunpack.c.h.b16 %v1656
        %v2047 = vunpack.c.l.b16 %v1657
        %v2048 = vunpack.c.h.b16 %v1657
        %v2049 = vunpack.c.l.b16 %v1658
        %v2050 = vunpack.c.h.b16 %v1658
        %v2051 = vunpack.c.l.b16 %v1659
        %v2052 = vunpack.c.h.b16 %v1659
        %v2053 = vunpack.c.l.b16 %v1660
        %v2054 = vunpack.c.h.b16 %v1660
        %v2055 = vunpack.c.l.b16 %v1661
        %v2056 = vunpack.c.h.b16 %v1661
        %v2057 = vunpack.c.l.b16 %v1662
        %v2058 = vunpack.c.h.b16 %v1662
        %v2059 = vunpack.c.l.b16 %v1663
        %v2060 = vunpack.c.h.b16 %v1663
        %v2061 = vunpack.c.l.b16 %v1664
        %v2062 = vunpack.c.h.b16 %v1664
        %v2063 = vunpack.c.l.b16 %v1665
        %v2064 = vunpack.c.h.b16 %v1665
        %v2065 = vunpack.c.l.b16 %v1666
        %v2066 = vunpack.c.h.b16 %v1666
        %v2067 = vunpack.c.l.b16 %v1667
        %v2068 = vunpack.c.h.b16 %v1667
        %v2069 = vunpack.c.l.b16 %v1668
        %v2070 = vunpack.c.h.b16 %v1668
        %v2071 = vunpack.c.l.b16 %v1669
        %v2072 = vunpack.c.h.b16 %v1669
        %v2073 = vunpack.c.l.b16 %v1670
        %v2074 = vunpack.c.h.b16 %v1670
        %v2075 = vunpack.c.l.b16 %v1671
        %v2076 = vunpack.c.h.b16 %v1671
        %v2077 = vunpack.c.l.b16 %v1672
        %v2078 = vunpack.c.h.b16 %v1672
        %v2079 = vpack.c.b16 %v1827, %v1823
        %v2080 = vpack.c.b16 %v1828, %v1824
        %v2081 = vpack.c.b16 %v1829, %v1825
        %v2082 = vpack.c.b16 %v1830, %v1826
        %v2083 = vpack.c.b16 %v1835, %v1831
        %v2084 = vpack.c.b16 %v1836, %v1832
        %v2085 = vpack.c.b16 %v1837, %v1833
        %v2086 = vpack.c.b16 %v1838, %v1834
        %v2087 = vpack.c.b16 %v1843, %v1839
        %v2088 = vpack.c.b16 %v1844, %v1840
        %v2089 = vpack.c.b16 %v1845, %v1841
        %v2090 = vpack.c.b16 %v1846, %v1842
        %v2091 = vpack.c.b16 %v1851, %v1847
        %v2092 = vpack.c.b16 %v1852, %v1848
        %v2093 = vpack.c.b16 %v1853, %v1849
        %v2094 = vpack.c.b16 %v1854, %v1850
        %v2095 = vpack.c.b16 %v1859, %v1855
        %v2096 = vpack.c.b16 %v1860, %v1856
        %v2097 = vpack.c.b16 %v1861, %v1857
        %v2098 = vpack.c.b16 %v1862, %v1858
        %v2099 = vpack.c.b16 %v1867, %v1863
        %v2100 = vpack.c.b16 %v1868, %v1864
        %v2101 = vpack.c.b16 %v1869, %v1865
        %v2102 = vpack.c.b16 %v1870, %v1866
        %v2103 = vpack.c.b16 %v1875, %v1871
        %v2104 = vpack.c.b16 %v1876, %v1872
        %v2105 = vpack.c.b16 %v1877, %v1873
        %v2106 = vpack.c.b16 %v1878, %v1874
        %v2107 = vpack.c.b16 %v1883, %v1879
        %v2108 = vpack.c.b16 %v1884, %v1880
        %v2109 = vpack.c.b16 %v1885, %v1881
        %v2110 = vpack.c.b16 %v1886, %v1882
        %v2111 = vpack.c.b16 %v1891, %v1887
        %v2112 = vpack.c.b16 %v1892, %v1888
        %v2113 = vpack.c.b16 %v1893, %v1889
        %v2114 = vpack.c.b16 %v1894, %v1890
        %v2115 = vpack.c.b16 %v1899, %v1895
        %v2116 = vpack.c.b16 %v1900, %v1896
        %v2117 = vpack.c.b16 %v1901, %v1897
        %v2118 = vpack.c.b16 %v1902, %v1898
        %v2119 = vpack.c.b16 %v1907, %v1903
        %v2120 = vpack.c.b16 %v1908, %v1904
        %v2121 = vpack.c.b16 %v1909, %v1905
        %v2122 = vpack.c.b16 %v1910, %v1906
        %v2123 = vpack.c.b16 %v1915, %v1911
        %v2124 = vpack.c.b16 %v1916, %v1912
        %v2125 = vpack.c.b16 %v1917, %v1913
        %v2126 = vpack.c.b16 %v1918, %v1914
        %v2127 = vpack.c.b16 %v1923, %v1919
        %v2128 = vpack.c.b16 %v1924, %v1920
        %v2129 = vpack.c.b16 %v1925, %v1921
        %v2130 = vpack.c.b16 %v1926, %v1922
        %v2131 = vpack.c.b16 %v1931, %v1927
        %v2132 = vpack.c.b16 %v1932, %v1928
        %v2133 = vpack.c.b16 %v1933, %v1929
        %v2134 = vpack.c.b16 %v1934, %v1930
        %v2135 = vpack.c.b16 %v1939, %v1935
        %v2136 = vpack.c.b16 %v1940, %v1936
        %v2137 = vpack.c.b16 %v1941, %v1937
        %v2138 = vpack.c.b16 %v1942, %v1938
        %v2139 = vpack.c.b16 %v1947, %v1943
        %v2140 = vpack.c.b16 %v1948, %v1944
        %v2141 = vpack.c.b16 %v1949, %v1945
        %v2142 = vpack.c.b16 %v1950, %v1946
        %v2143 = vpack.c.b16 %v1955, %v1951
        %v2144 = vpack.c.b16 %v1956, %v1952
        %v2145 = vpack.c.b16 %v1957, %v1953
        %v2146 = vpack.c.b16 %v1958, %v1954
        %v2147 = vpack.c.b16 %v1963, %v1959
        %v2148 = vpack.c.b16 %v1964, %v1960
        %v2149 = vpack.c.b16 %v1965, %v1961
        %v2150 = vpack.c.b16 %v1966, %v1962
        %v2151 = vpack.c.b16 %v1971, %v1967
        %v2152 = vpack.c.b16 %v1972, %v1968
        %v2153 = vpack.c.b16 %v1973, %v1969
        %v2154 = vpack.c.b16 %v1974, %v1970
        %v2155 = vpack.c.b16 %v1979, %v1975
        %v2156 = vpack.c.b16 %v1980, %v1976
        %v2157 = vpack.c.b16 %v1981, %v1977
        %v2158 = vpack.c.b16 %v1982, %v1978
        %v2159 = vpack.c.b16 %v1987, %v1983
        %v2160 = vpack.c.b16 %v1988, %v1984
        %v2161 = vpack.c.b16 %v1989, %v1985
        %v2162 = vpack.c.b16 %v1990, %v1986
        %v2163 = vpack.c.b16 %v1995, %v1991
        %v2164 = vpack.c.b16 %v1996, %v1992
        %v2165 = vpack.c.b16 %v1997, %v1993
        %v2166 = vpack.c.b16 %v1998, %v1994
        %v2167 = vpack.c.b16 %v2003, %v1999
        %v2168 = vpack.c.b16 %v2004, %v2000
        %v2169 = vpack.c.b16 %v2005, %v2001
        %v2170 = vpack.c.b16 %v2006, %v2002
        %v2171 = vpack.c.b16 %v2011, %v2007
        %v2172 = vpack.c.b16 %v2012, %v2008
        %v2173 = vpack.c.b16 %v2013, %v2009
        %v2174 = vpack.c.b16 %v2014, %v2010
        %v2175 = vpack.c.b16 %v2019, %v2015
        %v2176 = vpack.c.b16 %v2020, %v2016
        %v2177 = vpack.c.b16 %v2021, %v2017
        %v2178 = vpack.c.b16 %v2022, %v2018
        %v2179 = vpack.c.b16 %v2027, %v2023
        %v2180 = vpack.c.b16 %v2028, %v2024
        %v2181 = vpack.c.b16 %v2029, %v2025
        %v2182 = vpack.c.b16 %v2030, %v2026
        %v2183 = vpack.c.b16 %v2035, %v2031
        %v2184 = vpack.c.b16 %v2036, %v2032
        %v2185 = vpack.c.b16 %v2037, %v2033
        %v2186 = vpack.c.b16 %v2038, %v2034
        %v2187 = vpack.c.b16 %v2043, %v2039
        %v2188 = vpack.c.b16 %v2044, %v2040
        %v2189 = vpack.c.b16 %v2045, %v2041
        %v2190 = vpack.c.b16 %v2046, %v2042
        %v2191 = vpack.c.b16 %v2051, %v2047
        %v2192 = vpack.c.b16 %v2052, %v2048
        %v2193 = vpack.c.b16 %v2053, %v2049
        %v2194 = vpack.c.b16 %v2054, %v2050
        %v2195 = vpack.c.b16 %v2059, %v2055
        %v2196 = vpack.c.b16 %v2060, %v2056
        %v2197 = vpack.c.b16 %v2061, %v2057
        %v2198 = vpack.c.b16 %v2062, %v2058
        %v2199 = vpack.c.b16 %v2067, %v2063
        %v2200 = vpack.c.b16 %v2068, %v2064
        %v2201 = vpack.c.b16 %v2069, %v2065
        %v2202 = vpack.c.b16 %v2070, %v2066
        %v2203 = vpack.c.b16 %v2075, %v2071
        %v2204 = vpack.c.b16 %v2076, %v2072
        %v2205 = vpack.c.b16 %v2077, %v2073
        %v2206 = vpack.c.b16 %v2078, %v2074
        %2335 = vmatprep.subr.bf16.mxu0 %v2080
        %2336 = vmatpush1.bf16.msra.mxu0 %v2079
        %2337 = vmatprep.subr.bf16.mxu0 %v2084
        %2338 = vmatpush1.bf16.msra.mxu0 %v2083
        %2339 = vmatprep.subr.bf16.mxu0 %v2088
        %2340 = vmatpush1.bf16.msra.mxu0 %v2087
        %2341 = vmatprep.subr.bf16.mxu0 %v2092
        %2342 = vmatpush1.bf16.msra.mxu0 %v2091
        %2343 = vmatprep.subr.bf16.mxu0 %v2096
        %2344 = vmatpush1.bf16.msra.mxu0 %v2095
        %2345 = vmatprep.subr.bf16.mxu0 %v2100
        %2346 = vmatpush1.bf16.msra.mxu0 %v2099
        %2347 = vmatprep.subr.bf16.mxu0 %v2104
        %2348 = vmatpush1.bf16.msra.mxu0 %v2103
        %2349 = vmatprep.subr.bf16.mxu0 %v2108
        %2350 = vmatpush1.bf16.msra.mxu0 %v2107
        %2351 = vmatprep.subr.bf16.mxu0 %v2112
        %2352 = vmatpush1.bf16.msra.mxu0 %v2111
        %2353 = vmatprep.subr.bf16.mxu0 %v2116
        %2354 = vmatpush1.bf16.msra.mxu0 %v2115
        %2355 = vmatprep.subr.bf16.mxu0 %v2120
        %2356 = vmatpush1.bf16.msra.mxu0 %v2119
        %2357 = vmatprep.subr.bf16.mxu0 %v2124
        %2358 = vmatpush1.bf16.msra.mxu0 %v2123
        %2359 = vmatprep.subr.bf16.mxu0 %v2128
        %2360 = vmatpush1.bf16.msra.mxu0 %v2127
        %2361 = vmatprep.subr.bf16.mxu0 %v2132
        %2362 = vmatpush1.bf16.msra.mxu0 %v2131
        %2363 = vmatprep.subr.bf16.mxu0 %v2136
        %2364 = vmatpush1.bf16.msra.mxu0 %v2135
        %2365 = vmatprep.subr.bf16.mxu0 %v2140
        %2366 = vmatpush1.bf16.msra.mxu0 %v2139
        %2367 = vmatprep.mubr.bf16.mxu0 %v1482
        %2368 = vmatmul.mubr.bf16.gmra.mrb[0].mxu0 %v1481
        %v2369 = vpop.f32.mrb[0].mxu0
        %v2370 = vadd.f32 %v1678, %v2369
        %v2371 = vpop.f32.mrb[0].mxu0
        %v2372 = vadd.f32 %v1682, %v2371
        %v2373 = vpop.f32.mrb[0].mxu0
        %v2374 = vadd.f32 %v1678, %v2373
        %v2375 = vpop.f32.mrb[0].mxu0
        %v2376 = vadd.f32 %v1682, %v2375
        %2377 = vmatprep.mubr.bf16.mxu0 %v1486
        %2378 = vmatmul.mubr.bf16.gmra.mrb[0].mxu0 %v1485
        %v2379 = vpop.f32.mrb[0].mxu0
        %v2380 = vadd.f32 %v1678, %v2379
        %v2381 = vpop.f32.mrb[0].mxu0
        %v2382 = vadd.f32 %v1682, %v2381
        %v2383 = vpop.f32.mrb[0].mxu0
        %v2384 = vadd.f32 %v1678, %v2383
        %v2385 = vpop.f32.mrb[0].mxu0
        %v2386 = vadd.f32 %v1682, %v2385
        %2387 = vmatprep.mubr.bf16.mxu0 %v1490
        %2388 = vmatmul.mubr.bf16.gmra.mrb[0].mxu0 %v1489
        %v2389 = vpop.f32.mrb[0].mxu0
        %v2390 = vadd.f32 %v1678, %v2389
        %v2391 = vpop.f32.mrb[0].mxu0
        %v2392 = vadd.f32 %v1682, %v2391
        %v2393 = vpop.f32.mrb[0].mxu0
        %v2394 = vadd.f32 %v1678, %v2393
        %v2395 = vpop.f32.mrb[0].mxu0
        %v2396 = vadd.f32 %v1682, %v2395
        %2397 = vmatprep.mubr.bf16.mxu0 %v1494
        %2398 = vmatmul.mubr.bf16.gmra.mrb[0].mxu0 %v1493
        %v2399 = vpop.f32.mrb[0].mxu0
        %v2400 = vadd.f32 %v1678, %v2399
        %v2401 = vpop.f32.mrb[0].mxu0
        %v2402 = vadd.f32 %v1682, %v2401
        %v2403 = vpop.f32.mrb[0].mxu0
        %v2404 = vadd.f32 %v1678, %v2403
        %v2405 = vpop.f32.mrb[0].mxu0
        %v2406 = vadd.f32 %v1682, %v2405
        %2407 = vmatprep.mubr.bf16.mxu0 %v1498
        %2408 = vmatmul.mubr.bf16.gmra.mrb[0].mxu0 %v1497
        %v2409 = vpop.f32.mrb[0].mxu0
        %v2410 = vadd.f32 %v1678, %v2409
        %v2411 = vpop.f32.mrb[0].mxu0
        %v2412 = vadd.f32 %v1682, %v2411
        %v2413 = vpop.f32.mrb[0].mxu0
        %v2414 = vadd.f32 %v1678, %v2413
        %v2415 = vpop.f32.mrb[0].mxu0
        %v2416 = vadd.f32 %v1682, %v2415
        %2417 = vmatprep.mubr.bf16.mxu0 %v1502
        %2418 = vmatmul.mubr.bf16.gmra.mrb[0].mxu0 %v1501
        %v2419 = vpop.f32.mrb[0].mxu0
        %v2420 = vadd.f32 %v1678, %v2419
        %v2421 = vpop.f32.mrb[0].mxu0
        %v2422 = vadd.f32 %v1682, %v2421
        %v2423 = vpop.f32.mrb[0].mxu0
        %v2424 = vadd.f32 %v1678, %v2423
        %v2425 = vpop.f32.mrb[0].mxu0
        %v2426 = vadd.f32 %v1682, %v2425
        %2427 = vmatprep.mubr.bf16.mxu0 %v1506
        %2428 = vmatmul.mubr.bf16.gmra.mrb[0].mxu0 %v1505
        %v2429 = vpop.f32.mrb[0].mxu0
        %v2430 = vadd.f32 %v1678, %v2429
        %v2431 = vpop.f32.mrb[0].mxu0
        %v2432 = vadd.f32 %v1682, %v2431
        %v2433 = vpop.f32.mrb[0].mxu0
        %v2434 = vadd.f32 %v1678, %v2433
        %v2435 = vpop.f32.mrb[0].mxu0
        %v2436 = vadd.f32 %v1682, %v2435
        %2437 = vmatprep.mubr.bf16.mxu0 %v1510
        %2438 = vmatmul.mubr.bf16.gmra.mrb[0].mxu0 %v1509
        %v2439 = vpop.f32.mrb[0].mxu0
        %v2440 = vadd.f32 %v1678, %v2439
        %v2441 = vpop.f32.mrb[0].mxu0
        %v2442 = vadd.f32 %v1682, %v2441
        %v2443 = vpop.f32.mrb[0].mxu0
        %v2444 = vadd.f32 %v1678, %v2443
        %v2445 = vpop.f32.mrb[0].mxu0
        %v2446 = vadd.f32 %v1682, %v2445
        %2447 = vmatprep.mubr.bf16.mxu0 %v1514
        %2448 = vmatmul.mubr.bf16.gmra.mrb[0].mxu0 %v1513
        %v2449 = vpop.f32.mrb[0].mxu0
        %v2450 = vadd.f32 %v1678, %v2449
        %v2451 = vpop.f32.mrb[0].mxu0
        %v2452 = vadd.f32 %v1682, %v2451
        %v2453 = vpop.f32.mrb[0].mxu0
        %v2454 = vadd.f32 %v1678, %v2453
        %v2455 = vpop.f32.mrb[0].mxu0
        %v2456 = vadd.f32 %v1682, %v2455
        %2457 = vmatprep.mubr.bf16.mxu0 %v1518
        %2458 = vmatmul.mubr.bf16.gmra.mrb[0].mxu0 %v1517
        %v2459 = vpop.f32.mrb[0].mxu0
        %v2460 = vadd.f32 %v1678, %v2459
        %v2461 = vpop.f32.mrb[0].mxu0
        %v2462 = vadd.f32 %v1682, %v2461
        %v2463 = vpop.f32.mrb[0].mxu0
        %v2464 = vadd.f32 %v1678, %v2463
        %v2465 = vpop.f32.mrb[0].mxu0
        %v2466 = vadd.f32 %v1682, %v2465
        %2467 = vmatprep.mubr.bf16.mxu0 %v1522
        %2468 = vmatmul.mubr.bf16.gmra.mrb[0].mxu0 %v1521
        %v2469 = vpop.f32.mrb[0].mxu0
        %v2470 = vadd.f32 %v1678, %v2469
        %v2471 = vpop.f32.mrb[0].mxu0
        %v2472 = vadd.f32 %v1682, %v2471
        %v2473 = vpop.f32.mrb[0].mxu0
        %v2474 = vadd.f32 %v1678, %v2473
        %v2475 = vpop.f32.mrb[0].mxu0
        %v2476 = vadd.f32 %v1682, %v2475
        %2477 = vmatprep.mubr.bf16.mxu0 %v1526
        %2478 = vmatmul.mubr.bf16.gmra.mrb[0].mxu0 %v1525
        %v2479 = vpop.f32.mrb[0].mxu0
        %v2480 = vadd.f32 %v1678, %v2479
        %v2481 = vpop.f32.mrb[0].mxu0
        %v2482 = vadd.f32 %v1682, %v2481
        %v2483 = vpop.f32.mrb[0].mxu0
        %v2484 = vadd.f32 %v1678, %v2483
        %v2485 = vpop.f32.mrb[0].mxu0
        %v2486 = vadd.f32 %v1682, %v2485
        %2487 = vmatprep.mubr.bf16.mxu0 %v1530
        %2488 = vmatmul.mubr.bf16.gmra.mrb[0].mxu0 %v1529
        %v2489 = vpop.f32.mrb[0].mxu0
        %v2490 = vadd.f32 %v1678, %v2489
        %v2491 = vpop.f32.mrb[0].mxu0
        %v2492 = vadd.f32 %v1682, %v2491
        %v2493 = vpop.f32.mrb[0].mxu0
        %v2494 = vadd.f32 %v1678, %v2493
        %v2495 = vpop.f32.mrb[0].mxu0
        %v2496 = vadd.f32 %v1682, %v2495
        %2497 = vmatprep.mubr.bf16.mxu0 %v1534
        %2498 = vmatmul.mubr.bf16.gmra.mrb[0].mxu0 %v1533
        %v2499 = vpop.f32.mrb[0].mxu0
        %v2500 = vadd.f32 %v1678, %v2499
        %v2501 = vpop.f32.mrb[0].mxu0
        %v2502 = vadd.f32 %v1682, %v2501
        %v2503 = vpop.f32.mrb[0].mxu0
        %v2504 = vadd.f32 %v1678, %v2503
        %v2505 = vpop.f32.mrb[0].mxu0
        %v2506 = vadd.f32 %v1682, %v2505
        %2507 = vmatprep.mubr.bf16.mxu0 %v1538
        %2508 = vmatmul.mubr.bf16.gmra.mrb[0].mxu0 %v1537
        %v2509 = vpop.f32.mrb[0].mxu0
        %v2510 = vadd.f32 %v1678, %v2509
        %v2511 = vpop.f32.mrb[0].mxu0
        %v2512 = vadd.f32 %v1682, %v2511
        %v2513 = vpop.f32.mrb[0].mxu0
        %v2514 = vadd.f32 %v1678, %v2513
        %v2515 = vpop.f32.mrb[0].mxu0
        %v2516 = vadd.f32 %v1682, %v2515
        %2517 = vmatprep.mubr.bf16.mxu0 %v1542
        %2518 = vmatmul.mubr.bf16.gmra.mrb[0].mxu0 %v1541
        %v2519 = vpop.f32.mrb[0].mxu0
        %v2520 = vadd.f32 %v1678, %v2519
        %v2521 = vpop.f32.mrb[0].mxu0
        %v2522 = vadd.f32 %v1682, %v2521
        %v2523 = vpop.f32.mrb[0].mxu0
        %v2524 = vadd.f32 %v1678, %v2523
        %v2525 = vpop.f32.mrb[0].mxu0
        %v2526 = vadd.f32 %v1682, %v2525
        %2527 = vdwg.mxu0
        %2528 = vmatprep.subr.bf16.mxu0 %v2144
        %2529 = vmatpush1.bf16.msra.mxu0 %v2143
        %2530 = vmatprep.subr.bf16.mxu0 %v2148
        %2531 = vmatpush1.bf16.msra.mxu0 %v2147
        %2532 = vmatprep.subr.bf16.mxu0 %v2152
        %2533 = vmatpush1.bf16.msra.mxu0 %v2151
        %2534 = vmatprep.subr.bf16.mxu0 %v2156
        %2535 = vmatpush1.bf16.msra.mxu0 %v2155
        %2536 = vmatprep.subr.bf16.mxu0 %v2160
        %2537 = vmatpush1.bf16.msra.mxu0 %v2159
        %2538 = vmatprep.subr.bf16.mxu0 %v2164
        %2539 = vmatpush1.bf16.msra.mxu0 %v2163
        %2540 = vmatprep.subr.bf16.mxu0 %v2168
        %2541 = vmatpush1.bf16.msra.mxu0 %v2167
        %2542 = vmatprep.subr.bf16.mxu0 %v2172
        %2543 = vmatpush1.bf16.msra.mxu0 %v2171
        %2544 = vmatprep.subr.bf16.mxu0 %v2176
        %2545 = vmatpush1.bf16.msra.mxu0 %v2175
        %2546 = vmatprep.subr.bf16.mxu0 %v2180
        %2547 = vmatpush1.bf16.msra.mxu0 %v2179
        %2548 = vmatprep.subr.bf16.mxu0 %v2184
        %2549 = vmatpush1.bf16.msra.mxu0 %v2183
        %2550 = vmatprep.subr.bf16.mxu0 %v2188
        %2551 = vmatpush1.bf16.msra.mxu0 %v2187
        %2552 = vmatprep.subr.bf16.mxu0 %v2192
        %2553 = vmatpush1.bf16.msra.mxu0 %v2191
        %2554 = vmatprep.subr.bf16.mxu0 %v2196
        %2555 = vmatpush1.bf16.msra.mxu0 %v2195
        %2556 = vmatprep.subr.bf16.mxu0 %v2200
        %2557 = vmatpush1.bf16.msra.mxu0 %v2199
        %2558 = vmatprep.subr.bf16.mxu0 %v2204
        %2559 = vmatpush1.bf16.msra.mxu0 %v2203
        %2560 = vmatprep.mubr.bf16.mxu0 %v1484
        %2561 = vmatmul.mubr.bf16.gmra.mrb[0].mxu0 %v1483
        %v2562 = vpop.f32.mrb[0].mxu0
        %v2563 = vadd.f32 %v2370, %v2562
        %v2564 = vpop.f32.mrb[0].mxu0
        %v2565 = vadd.f32 %v2372, %v2564
        %v2566 = vpop.f32.mrb[0].mxu0
        %v2567 = vadd.f32 %v2374, %v2566
        %v2568 = vpop.f32.mrb[0].mxu0
        %v2569 = vadd.f32 %v2376, %v2568
        %2570 = vmatprep.mubr.bf16.mxu0 %v1488
        %2571 = vmatmul.mubr.bf16.gmra.mrb[0].mxu0 %v1487
        %v2572 = vpop.f32.mrb[0].mxu0
        %v2573 = vadd.f32 %v2380, %v2572
        %v2574 = vpop.f32.mrb[0].mxu0
        %v2575 = vadd.f32 %v2382, %v2574
        %v2576 = vpop.f32.mrb[0].mxu0
        %v2577 = vadd.f32 %v2384, %v2576
        %v2578 = vpop.f32.mrb[0].mxu0
        %v2579 = vadd.f32 %v2386, %v2578
        %2580 = vmatprep.mubr.bf16.mxu0 %v1492
        %2581 = vmatmul.mubr.bf16.gmra.mrb[0].mxu0 %v1491
        %v2582 = vpop.f32.mrb[0].mxu0
        %v2583 = vadd.f32 %v2390, %v2582
        %v2584 = vpop.f32.mrb[0].mxu0
        %v2585 = vadd.f32 %v2392, %v2584
        %v2586 = vpop.f32.mrb[0].mxu0
        %v2587 = vadd.f32 %v2394, %v2586
        %v2588 = vpop.f32.mrb[0].mxu0
        %v2589 = vadd.f32 %v2396, %v2588
        %2590 = vmatprep.mubr.bf16.mxu0 %v1496
        %2591 = vmatmul.mubr.bf16.gmra.mrb[0].mxu0 %v1495
        %v2592 = vpop.f32.mrb[0].mxu0
        %v2593 = vadd.f32 %v2400, %v2592
        %v2594 = vpop.f32.mrb[0].mxu0
        %v2595 = vadd.f32 %v2402, %v2594
        %v2596 = vpop.f32.mrb[0].mxu0
        %v2597 = vadd.f32 %v2404, %v2596
        %v2598 = vpop.f32.mrb[0].mxu0
        %v2599 = vadd.f32 %v2406, %v2598
        %2600 = vmatprep.mubr.bf16.mxu0 %v1500
        %2601 = vmatmul.mubr.bf16.gmra.mrb[0].mxu0 %v1499
        %v2602 = vpop.f32.mrb[0].mxu0
        %v2603 = vadd.f32 %v2410, %v2602
        %v2604 = vpop.f32.mrb[0].mxu0
        %v2605 = vadd.f32 %v2412, %v2604
        %v2606 = vpop.f32.mrb[0].mxu0
        %v2607 = vadd.f32 %v2414, %v2606
        %v2608 = vpop.f32.mrb[0].mxu0
        %v2609 = vadd.f32 %v2416, %v2608
        %2610 = vmatprep.mubr.bf16.mxu0 %v1504
        %2611 = vmatmul.mubr.bf16.gmra.mrb[0].mxu0 %v1503
        %v2612 = vpop.f32.mrb[0].mxu0
        %v2613 = vadd.f32 %v2420, %v2612
        %v2614 = vpop.f32.mrb[0].mxu0
        %v2615 = vadd.f32 %v2422, %v2614
        %v2616 = vpop.f32.mrb[0].mxu0
        %v2617 = vadd.f32 %v2424, %v2616
        %v2618 = vpop.f32.mrb[0].mxu0
        %v2619 = vadd.f32 %v2426, %v2618
        %2620 = vmatprep.mubr.bf16.mxu0 %v1508
        %2621 = vmatmul.mubr.bf16.gmra.mrb[0].mxu0 %v1507
        %v2622 = vpop.f32.mrb[0].mxu0
        %v2623 = vadd.f32 %v2430, %v2622
        %v2624 = vpop.f32.mrb[0].mxu0
        %v2625 = vadd.f32 %v2432, %v2624
        %v2626 = vpop.f32.mrb[0].mxu0
        %v2627 = vadd.f32 %v2434, %v2626
        %v2628 = vpop.f32.mrb[0].mxu0
        %v2629 = vadd.f32 %v2436, %v2628
        %2630 = vmatprep.mubr.bf16.mxu0 %v1512
        %2631 = vmatmul.mubr.bf16.gmra.mrb[0].mxu0 %v1511
        %v2632 = vpop.f32.mrb[0].mxu0
        %v2633 = vadd.f32 %v2440, %v2632
        %v2634 = vpop.f32.mrb[0].mxu0
        %v2635 = vadd.f32 %v2442, %v2634
        %v2636 = vpop.f32.mrb[0].mxu0
        %v2637 = vadd.f32 %v2444, %v2636
        %v2638 = vpop.f32.mrb[0].mxu0
        %v2639 = vadd.f32 %v2446, %v2638
        %2640 = vmatprep.mubr.bf16.mxu0 %v1516
        %2641 = vmatmul.mubr.bf16.gmra.mrb[0].mxu0 %v1515
        %v2642 = vpop.f32.mrb[0].mxu0
        %v2643 = vadd.f32 %v2450, %v2642
        %v2644 = vpop.f32.mrb[0].mxu0
        %v2645 = vadd.f32 %v2452, %v2644
        %v2646 = vpop.f32.mrb[0].mxu0
        %v2647 = vadd.f32 %v2454, %v2646
        %v2648 = vpop.f32.mrb[0].mxu0
        %v2649 = vadd.f32 %v2456, %v2648
        %2650 = vmatprep.mubr.bf16.mxu0 %v1520
        %2651 = vmatmul.mubr.bf16.gmra.mrb[0].mxu0 %v1519
        %v2652 = vpop.f32.mrb[0].mxu0
        %v2653 = vadd.f32 %v2460, %v2652
        %v2654 = vpop.f32.mrb[0].mxu0
        %v2655 = vadd.f32 %v2462, %v2654
        %v2656 = vpop.f32.mrb[0].mxu0
        %v2657 = vadd.f32 %v2464, %v2656
        %v2658 = vpop.f32.mrb[0].mxu0
        %v2659 = vadd.f32 %v2466, %v2658
        %2660 = vmatprep.mubr.bf16.mxu0 %v1524
        %2661 = vmatmul.mubr.bf16.gmra.mrb[0].mxu0 %v1523
        %v2662 = vpop.f32.mrb[0].mxu0
        %v2663 = vadd.f32 %v2470, %v2662
        %v2664 = vpop.f32.mrb[0].mxu0
        %v2665 = vadd.f32 %v2472, %v2664
        %v2666 = vpop.f32.mrb[0].mxu0
        %v2667 = vadd.f32 %v2474, %v2666
        %v2668 = vpop.f32.mrb[0].mxu0
        %v2669 = vadd.f32 %v2476, %v2668
        %2670 = vmatprep.mubr.bf16.mxu0 %v1528
        %2671 = vmatmul.mubr.bf16.gmra.mrb[0].mxu0 %v1527
        %v2672 = vpop.f32.mrb[0].mxu0
        %v2673 = vadd.f32 %v2480, %v2672
        %v2674 = vpop.f32.mrb[0].mxu0
        %v2675 = vadd.f32 %v2482, %v2674
        %v2676 = vpop.f32.mrb[0].mxu0
        %v2677 = vadd.f32 %v2484, %v2676
        %v2678 = vpop.f32.mrb[0].mxu0
        %v2679 = vadd.f32 %v2486, %v2678
        %2680 = vmatprep.mubr.bf16.mxu0 %v1532
        %2681 = vmatmul.mubr.bf16.gmra.mrb[0].mxu0 %v1531
        %v2682 = vpop.f32.mrb[0].mxu0
        %v2683 = vadd.f32 %v2490, %v2682
        %v2684 = vpop.f32.mrb[0].mxu0
        %v2685 = vadd.f32 %v2492, %v2684
        %v2686 = vpop.f32.mrb[0].mxu0
        %v2687 = vadd.f32 %v2494, %v2686
        %v2688 = vpop.f32.mrb[0].mxu0
        %v2689 = vadd.f32 %v2496, %v2688
        %2690 = vmatprep.mubr.bf16.mxu0 %v1536
        %2691 = vmatmul.mubr.bf16.gmra.mrb[0].mxu0 %v1535
        %v2692 = vpop.f32.mrb[0].mxu0
        %v2693 = vadd.f32 %v2500, %v2692
        %v2694 = vpop.f32.mrb[0].mxu0
        %v2695 = vadd.f32 %v2502, %v2694
        %v2696 = vpop.f32.mrb[0].mxu0
        %v2697 = vadd.f32 %v2504, %v2696
        %v2698 = vpop.f32.mrb[0].mxu0
        %v2699 = vadd.f32 %v2506, %v2698
        %2700 = vmatprep.mubr.bf16.mxu0 %v1540
        %2701 = vmatmul.mubr.bf16.gmra.mrb[0].mxu0 %v1539
        %v2702 = vpop.f32.mrb[0].mxu0
        %v2703 = vadd.f32 %v2510, %v2702
        %v2704 = vpop.f32.mrb[0].mxu0
        %v2705 = vadd.f32 %v2512, %v2704
        %v2706 = vpop.f32.mrb[0].mxu0
        %v2707 = vadd.f32 %v2514, %v2706
        %v2708 = vpop.f32.mrb[0].mxu0
        %v2709 = vadd.f32 %v2516, %v2708
        %2710 = vmatprep.mubr.bf16.mxu0 %v1544
        %2711 = vmatmul.mubr.bf16.gmra.mrb[0].mxu0 %v1543
        %v2712 = vpop.f32.mrb[0].mxu0
        %v2713 = vadd.f32 %v2520, %v2712
        %v2714 = vpop.f32.mrb[0].mxu0
        %v2715 = vadd.f32 %v2522, %v2714
        %v2716 = vpop.f32.mrb[0].mxu0
        %v2717 = vadd.f32 %v2524, %v2716
        %v2718 = vpop.f32.mrb[0].mxu0
        %v2719 = vadd.f32 %v2526, %v2718
        %2720 = vdwg.mxu0
        %2721 = vmatprep.subr.bf16.mxu0 %v2082
        %2722 = vmatpush1.bf16.msra.mxu0 %v2081
        %2723 = vmatprep.subr.bf16.mxu0 %v2086
        %2724 = vmatpush1.bf16.msra.mxu0 %v2085
        %2725 = vmatprep.subr.bf16.mxu0 %v2090
        %2726 = vmatpush1.bf16.msra.mxu0 %v2089
        %2727 = vmatprep.subr.bf16.mxu0 %v2094
        %2728 = vmatpush1.bf16.msra.mxu0 %v2093
        %2729 = vmatprep.subr.bf16.mxu0 %v2098
        %2730 = vmatpush1.bf16.msra.mxu0 %v2097
        %2731 = vmatprep.subr.bf16.mxu0 %v2102
        %2732 = vmatpush1.bf16.msra.mxu0 %v2101
        %2733 = vmatprep.subr.bf16.mxu0 %v2106
        %2734 = vmatpush1.bf16.msra.mxu0 %v2105
        %2735 = vmatprep.subr.bf16.mxu0 %v2110
        %2736 = vmatpush1.bf16.msra.mxu0 %v2109
        %2737 = vmatprep.subr.bf16.mxu0 %v2114
        %2738 = vmatpush1.bf16.msra.mxu0 %v2113
        %2739 = vmatprep.subr.bf16.mxu0 %v2118
        %2740 = vmatpush1.bf16.msra.mxu0 %v2117
        %2741 = vmatprep.subr.bf16.mxu0 %v2122
        %2742 = vmatpush1.bf16.msra.mxu0 %v2121
        %2743 = vmatprep.subr.bf16.mxu0 %v2126
        %2744 = vmatpush1.bf16.msra.mxu0 %v2125
        %2745 = vmatprep.subr.bf16.mxu0 %v2130
        %2746 = vmatpush1.bf16.msra.mxu0 %v2129
        %2747 = vmatprep.subr.bf16.mxu0 %v2134
        %2748 = vmatpush1.bf16.msra.mxu0 %v2133
        %2749 = vmatprep.subr.bf16.mxu0 %v2138
        %2750 = vmatpush1.bf16.msra.mxu0 %v2137
        %2751 = vmatprep.subr.bf16.mxu0 %v2142
        %2752 = vmatpush1.bf16.msra.mxu0 %v2141
        %2753 = vmatprep.mubr.bf16.mxu0 %v1482
        %2754 = vmatmul.mubr.bf16.gmra.mrb[0].mxu0 %v1481
        %v2755 = vpop.f32.mrb[0].mxu0
        %v2756 = vadd.f32 %v1686, %v2755
        %v2757 = vpop.f32.mrb[0].mxu0
        %v2758 = vadd.f32 %v1690, %v2757
        %v2759 = vpop.f32.mrb[0].mxu0
        %v2760 = vadd.f32 %v1686, %v2759
        %v2761 = vpop.f32.mrb[0].mxu0
        %v2762 = vadd.f32 %v1690, %v2761
        %2763 = vmatprep.mubr.bf16.mxu0 %v1486
        %2764 = vmatmul.mubr.bf16.gmra.mrb[0].mxu0 %v1485
        %v2765 = vpop.f32.mrb[0].mxu0
        %v2766 = vadd.f32 %v1686, %v2765
        %v2767 = vpop.f32.mrb[0].mxu0
        %v2768 = vadd.f32 %v1690, %v2767
        %v2769 = vpop.f32.mrb[0].mxu0
        %v2770 = vadd.f32 %v1686, %v2769
        %v2771 = vpop.f32.mrb[0].mxu0
        %v2772 = vadd.f32 %v1690, %v2771
        %2773 = vmatprep.mubr.bf16.mxu0 %v1490
        %2774 = vmatmul.mubr.bf16.gmra.mrb[0].mxu0 %v1489
        %v2775 = vpop.f32.mrb[0].mxu0
        %v2776 = vadd.f32 %v1686, %v2775
        %v2777 = vpop.f32.mrb[0].mxu0
        %v2778 = vadd.f32 %v1690, %v2777
        %v2779 = vpop.f32.mrb[0].mxu0
        %v2780 = vadd.f32 %v1686, %v2779
        %v2781 = vpop.f32.mrb[0].mxu0
        %v2782 = vadd.f32 %v1690, %v2781
        %2783 = vmatprep.mubr.bf16.mxu0 %v1494
        %2784 = vmatmul.mubr.bf16.gmra.mrb[0].mxu0 %v1493
        %v2785 = vpop.f32.mrb[0].mxu0
        %v2786 = vadd.f32 %v1686, %v2785
        %v2787 = vpop.f32.mrb[0].mxu0
        %v2788 = vadd.f32 %v1690, %v2787
        %v2789 = vpop.f32.mrb[0].mxu0
        %v2790 = vadd.f32 %v1686, %v2789
        %v2791 = vpop.f32.mrb[0].mxu0
        %v2792 = vadd.f32 %v1690, %v2791
        %2793 = vmatprep.mubr.bf16.mxu0 %v1498
        %2794 = vmatmul.mubr.bf16.gmra.mrb[0].mxu0 %v1497
        %v2795 = vpop.f32.mrb[0].mxu0
        %v2796 = vadd.f32 %v1686, %v2795
        %v2797 = vpop.f32.mrb[0].mxu0
        %v2798 = vadd.f32 %v1690, %v2797
        %v2799 = vpop.f32.mrb[0].mxu0
        %v2800 = vadd.f32 %v1686, %v2799
        %v2801 = vpop.f32.mrb[0].mxu0
        %v2802 = vadd.f32 %v1690, %v2801
        %2803 = vmatprep.mubr.bf16.mxu0 %v1502
        %2804 = vmatmul.mubr.bf16.gmra.mrb[0].mxu0 %v1501
        %v2805 = vpop.f32.mrb[0].mxu0
        %v2806 = vadd.f32 %v1686, %v2805
        %v2807 = vpop.f32.mrb[0].mxu0
        %v2808 = vadd.f32 %v1690, %v2807
        %v2809 = vpop.f32.mrb[0].mxu0
        %v2810 = vadd.f32 %v1686, %v2809
        %v2811 = vpop.f32.mrb[0].mxu0
        %v2812 = vadd.f32 %v1690, %v2811
        %2813 = vmatprep.mubr.bf16.mxu0 %v1506
        %2814 = vmatmul.mubr.bf16.gmra.mrb[0].mxu0 %v1505
        %v2815 = vpop.f32.mrb[0].mxu0
        %v2816 = vadd.f32 %v1686, %v2815
        %v2817 = vpop.f32.mrb[0].mxu0
        %v2818 = vadd.f32 %v1690, %v2817
        %v2819 = vpop.f32.mrb[0].mxu0
        %v2820 = vadd.f32 %v1686, %v2819
        %v2821 = vpop.f32.mrb[0].mxu0
        %v2822 = vadd.f32 %v1690, %v2821
        %2823 = vmatprep.mubr.bf16.mxu0 %v1510
        %2824 = vmatmul.mubr.bf16.gmra.mrb[0].mxu0 %v1509
        %v2825 = vpop.f32.mrb[0].mxu0
        %v2826 = vadd.f32 %v1686, %v2825
        %v2827 = vpop.f32.mrb[0].mxu0
        %v2828 = vadd.f32 %v1690, %v2827
        %v2829 = vpop.f32.mrb[0].mxu0
        %v2830 = vadd.f32 %v1686, %v2829
        %v2831 = vpop.f32.mrb[0].mxu0
        %v2832 = vadd.f32 %v1690, %v2831
        %2833 = vmatprep.mubr.bf16.mxu0 %v1514
        %2834 = vmatmul.mubr.bf16.gmra.mrb[0].mxu0 %v1513
        %v2835 = vpop.f32.mrb[0].mxu0
        %v2836 = vadd.f32 %v1686, %v2835
        %v2837 = vpop.f32.mrb[0].mxu0
        %v2838 = vadd.f32 %v1690, %v2837
        %v2839 = vpop.f32.mrb[0].mxu0
        %v2840 = vadd.f32 %v1686, %v2839
        %v2841 = vpop.f32.mrb[0].mxu0
        %v2842 = vadd.f32 %v1690, %v2841
        %2843 = vmatprep.mubr.bf16.mxu0 %v1518
        %2844 = vmatmul.mubr.bf16.gmra.mrb[0].mxu0 %v1517
        %v2845 = vpop.f32.mrb[0].mxu0
        %v2846 = vadd.f32 %v1686, %v2845
        %v2847 = vpop.f32.mrb[0].mxu0
        %v2848 = vadd.f32 %v1690, %v2847
        %v2849 = vpop.f32.mrb[0].mxu0
        %v2850 = vadd.f32 %v1686, %v2849
        %v2851 = vpop.f32.mrb[0].mxu0
        %v2852 = vadd.f32 %v1690, %v2851
        %2853 = vmatprep.mubr.bf16.mxu0 %v1522
        %2854 = vmatmul.mubr.bf16.gmra.mrb[0].mxu0 %v1521
        %v2855 = vpop.f32.mrb[0].mxu0
        %v2856 = vadd.f32 %v1686, %v2855
        %v2857 = vpop.f32.mrb[0].mxu0
        %v2858 = vadd.f32 %v1690, %v2857
        %v2859 = vpop.f32.mrb[0].mxu0
        %v2860 = vadd.f32 %v1686, %v2859
        %v2861 = vpop.f32.mrb[0].mxu0
        %v2862 = vadd.f32 %v1690, %v2861
        %2863 = vmatprep.mubr.bf16.mxu0 %v1526
        %2864 = vmatmul.mubr.bf16.gmra.mrb[0].mxu0 %v1525
        %v2865 = vpop.f32.mrb[0].mxu0
        %v2866 = vadd.f32 %v1686, %v2865
        %v2867 = vpop.f32.mrb[0].mxu0
        %v2868 = vadd.f32 %v1690, %v2867
        %v2869 = vpop.f32.mrb[0].mxu0
        %v2870 = vadd.f32 %v1686, %v2869
        %v2871 = vpop.f32.mrb[0].mxu0
        %v2872 = vadd.f32 %v1690, %v2871
        %2873 = vmatprep.mubr.bf16.mxu0 %v1530
        %2874 = vmatmul.mubr.bf16.gmra.mrb[0].mxu0 %v1529
        %v2875 = vpop.f32.mrb[0].mxu0
        %v2876 = vadd.f32 %v1686, %v2875
        %v2877 = vpop.f32.mrb[0].mxu0
        %v2878 = vadd.f32 %v1690, %v2877
        %v2879 = vpop.f32.mrb[0].mxu0
        %v2880 = vadd.f32 %v1686, %v2879
        %v2881 = vpop.f32.mrb[0].mxu0
        %v2882 = vadd.f32 %v1690, %v2881
        %2883 = vmatprep.mubr.bf16.mxu0 %v1534
        %2884 = vmatmul.mubr.bf16.gmra.mrb[0].mxu0 %v1533
        %v2885 = vpop.f32.mrb[0].mxu0
        %v2886 = vadd.f32 %v1686, %v2885
        %v2887 = vpop.f32.mrb[0].mxu0
        %v2888 = vadd.f32 %v1690, %v2887
        %v2889 = vpop.f32.mrb[0].mxu0
        %v2890 = vadd.f32 %v1686, %v2889
        %v2891 = vpop.f32.mrb[0].mxu0
        %v2892 = vadd.f32 %v1690, %v2891
        %2893 = vmatprep.mubr.bf16.mxu0 %v1538
        %2894 = vmatmul.mubr.bf16.gmra.mrb[0].mxu0 %v1537
        %v2895 = vpop.f32.mrb[0].mxu0
        %v2896 = vadd.f32 %v1686, %v2895
        %v2897 = vpop.f32.mrb[0].mxu0
        %v2898 = vadd.f32 %v1690, %v2897
        %v2899 = vpop.f32.mrb[0].mxu0
        %v2900 = vadd.f32 %v1686, %v2899
        %v2901 = vpop.f32.mrb[0].mxu0
        %v2902 = vadd.f32 %v1690, %v2901
        %2903 = vmatprep.mubr.bf16.mxu0 %v1542
        %2904 = vmatmul.mubr.bf16.gmra.mrb[0].mxu0 %v1541
        %v2905 = vpop.f32.mrb[0].mxu0
        %v2906 = vadd.f32 %v1686, %v2905
        %v2907 = vpop.f32.mrb[0].mxu0
        %v2908 = vadd.f32 %v1690, %v2907
        %v2909 = vpop.f32.mrb[0].mxu0
        %v2910 = vadd.f32 %v1686, %v2909
        %v2911 = vpop.f32.mrb[0].mxu0
        %v2912 = vadd.f32 %v1690, %v2911
        %2913 = vdwg.mxu0
        %2914 = vmatprep.subr.bf16.mxu0 %v2146
        %2915 = vmatpush1.bf16.msra.mxu0 %v2145
        %2916 = vmatprep.subr.bf16.mxu0 %v2150
        %2917 = vmatpush1.bf16.msra.mxu0 %v2149
        %2918 = vmatprep.subr.bf16.mxu0 %v2154
        %2919 = vmatpush1.bf16.msra.mxu0 %v2153
        %2920 = vmatprep.subr.bf16.mxu0 %v2158
        %2921 = vmatpush1.bf16.msra.mxu0 %v2157
        %2922 = vmatprep.subr.bf16.mxu0 %v2162
        %2923 = vmatpush1.bf16.msra.mxu0 %v2161
        %2924 = vmatprep.subr.bf16.mxu0 %v2166
        %2925 = vmatpush1.bf16.msra.mxu0 %v2165
        %2926 = vmatprep.subr.bf16.mxu0 %v2170
        %2927 = vmatpush1.bf16.msra.mxu0 %v2169
        %2928 = vmatprep.subr.bf16.mxu0 %v2174
        %2929 = vmatpush1.bf16.msra.mxu0 %v2173
        %2930 = vmatprep.subr.bf16.mxu0 %v2178
        %2931 = vmatpush1.bf16.msra.mxu0 %v2177
        %2932 = vmatprep.subr.bf16.mxu0 %v2182
        %2933 = vmatpush1.bf16.msra.mxu0 %v2181
        %2934 = vmatprep.subr.bf16.mxu0 %v2186
        %2935 = vmatpush1.bf16.msra.mxu0 %v2185
        %2936 = vmatprep.subr.bf16.mxu0 %v2190
        %2937 = vmatpush1.bf16.msra.mxu0 %v2189
        %2938 = vmatprep.subr.bf16.mxu0 %v2194
        %2939 = vmatpush1.bf16.msra.mxu0 %v2193
        %2940 = vmatprep.subr.bf16.mxu0 %v2198
        %2941 = vmatpush1.bf16.msra.mxu0 %v2197
        %2942 = vmatprep.subr.bf16.mxu0 %v2202
        %2943 = vmatpush1.bf16.msra.mxu0 %v2201
        %2944 = vmatprep.subr.bf16.mxu0 %v2206
        %2945 = vmatpush1.bf16.msra.mxu0 %v2205
        %2946 = vmatprep.mubr.bf16.mxu0 %v1484
        %2947 = vmatmul.mubr.bf16.gmra.mrb[0].mxu0 %v1483
        %v2948 = vpop.f32.mrb[0].mxu0
        %v2949 = vadd.f32 %v2756, %v2948
        %v2950 = vpop.f32.mrb[0].mxu0
        %v2951 = vadd.f32 %v2758, %v2950
        %v2952 = vpop.f32.mrb[0].mxu0
        %v2953 = vadd.f32 %v2760, %v2952
        %v2954 = vpop.f32.mrb[0].mxu0
        %v2955 = vadd.f32 %v2762, %v2954
        %2956 = vmatprep.mubr.bf16.mxu0 %v1488
        %2957 = vmatmul.mubr.bf16.gmra.mrb[0].mxu0 %v1487
        %v2958 = vpop.f32.mrb[0].mxu0
        %v2959 = vadd.f32 %v2766, %v2958
        %v2960 = vpop.f32.mrb[0].mxu0
        %v2961 = vadd.f32 %v2768, %v2960
        %v2962 = vpop.f32.mrb[0].mxu0
        %v2963 = vadd.f32 %v2770, %v2962
        %v2964 = vpop.f32.mrb[0].mxu0
        %v2965 = vadd.f32 %v2772, %v2964
        %2966 = vmatprep.mubr.bf16.mxu0 %v1492
        %2967 = vmatmul.mubr.bf16.gmra.mrb[0].mxu0 %v1491
        %v2968 = vpop.f32.mrb[0].mxu0
        %v2969 = vadd.f32 %v2776, %v2968
        %v2970 = vpop.f32.mrb[0].mxu0
        %v2971 = vadd.f32 %v2778, %v2970
        %v2972 = vpop.f32.mrb[0].mxu0
        %v2973 = vadd.f32 %v2780, %v2972
        %v2974 = vpop.f32.mrb[0].mxu0
        %v2975 = vadd.f32 %v2782, %v2974
        %2976 = vmatprep.mubr.bf16.mxu0 %v1496
        %2977 = vmatmul.mubr.bf16.gmra.mrb[0].mxu0 %v1495
        %v2978 = vpop.f32.mrb[0].mxu0
        %v2979 = vadd.f32 %v2786, %v2978
        %v2980 = vpop.f32.mrb[0].mxu0
        %v2981 = vadd.f32 %v2788, %v2980
        %v2982 = vpop.f32.mrb[0].mxu0
        %v2983 = vadd.f32 %v2790, %v2982
        %v2984 = vpop.f32.mrb[0].mxu0
        %v2985 = vadd.f32 %v2792, %v2984
        %2986 = vmatprep.mubr.bf16.mxu0 %v1500
        %2987 = vmatmul.mubr.bf16.gmra.mrb[0].mxu0 %v1499
        %v2988 = vpop.f32.mrb[0].mxu0
        %v2989 = vadd.f32 %v2796, %v2988
        %v2990 = vpop.f32.mrb[0].mxu0
        %v2991 = vadd.f32 %v2798, %v2990
        %v2992 = vpop.f32.mrb[0].mxu0
        %v2993 = vadd.f32 %v2800, %v2992
        %v2994 = vpop.f32.mrb[0].mxu0
        %v2995 = vadd.f32 %v2802, %v2994
        %2996 = vmatprep.mubr.bf16.mxu0 %v1504
        %2997 = vmatmul.mubr.bf16.gmra.mrb[0].mxu0 %v1503
        %v2998 = vpop.f32.mrb[0].mxu0
        %v2999 = vadd.f32 %v2806, %v2998
        %v3000 = vpop.f32.mrb[0].mxu0
        %v3001 = vadd.f32 %v2808, %v3000
        %v3002 = vpop.f32.mrb[0].mxu0
        %v3003 = vadd.f32 %v2810, %v3002
        %v3004 = vpop.f32.mrb[0].mxu0
        %v3005 = vadd.f32 %v2812, %v3004
        %3006 = vmatprep.mubr.bf16.mxu0 %v1508
        %3007 = vmatmul.mubr.bf16.gmra.mrb[0].mxu0 %v1507
        %v3008 = vpop.f32.mrb[0].mxu0
        %v3009 = vadd.f32 %v2816, %v3008
        %v3010 = vpop.f32.mrb[0].mxu0
        %v3011 = vadd.f32 %v2818, %v3010
        %v3012 = vpop.f32.mrb[0].mxu0
        %v3013 = vadd.f32 %v2820, %v3012
        %v3014 = vpop.f32.mrb[0].mxu0
        %v3015 = vadd.f32 %v2822, %v3014
        %3016 = vmatprep.mubr.bf16.mxu0 %v1512
        %3017 = vmatmul.mubr.bf16.gmra.mrb[0].mxu0 %v1511
        %v3018 = vpop.f32.mrb[0].mxu0
        %v3019 = vadd.f32 %v2826, %v3018
        %v3020 = vpop.f32.mrb[0].mxu0
        %v3021 = vadd.f32 %v2828, %v3020
        %v3022 = vpop.f32.mrb[0].mxu0
        %v3023 = vadd.f32 %v2830, %v3022
        %v3024 = vpop.f32.mrb[0].mxu0
        %v3025 = vadd.f32 %v2832, %v3024
        %3026 = vmatprep.mubr.bf16.mxu0 %v1516
        %3027 = vmatmul.mubr.bf16.gmra.mrb[0].mxu0 %v1515
        %v3028 = vpop.f32.mrb[0].mxu0
        %v3029 = vadd.f32 %v2836, %v3028
        %v3030 = vpop.f32.mrb[0].mxu0
        %v3031 = vadd.f32 %v2838, %v3030
        %v3032 = vpop.f32.mrb[0].mxu0
        %v3033 = vadd.f32 %v2840, %v3032
        %v3034 = vpop.f32.mrb[0].mxu0
        %v3035 = vadd.f32 %v2842, %v3034
        %3036 = vmatprep.mubr.bf16.mxu0 %v1520
        %3037 = vmatmul.mubr.bf16.gmra.mrb[0].mxu0 %v1519
        %v3038 = vpop.f32.mrb[0].mxu0
        %v3039 = vadd.f32 %v2846, %v3038
        %v3040 = vpop.f32.mrb[0].mxu0
        %v3041 = vadd.f32 %v2848, %v3040
        %v3042 = vpop.f32.mrb[0].mxu0
        %v3043 = vadd.f32 %v2850, %v3042
        %v3044 = vpop.f32.mrb[0].mxu0
        %v3045 = vadd.f32 %v2852, %v3044
        %3046 = vmatprep.mubr.bf16.mxu0 %v1524
        %3047 = vmatmul.mubr.bf16.gmra.mrb[0].mxu0 %v1523
        %v3048 = vpop.f32.mrb[0].mxu0
        %v3049 = vadd.f32 %v2856, %v3048
        %v3050 = vpop.f32.mrb[0].mxu0
        %v3051 = vadd.f32 %v2858, %v3050
        %v3052 = vpop.f32.mrb[0].mxu0
        %v3053 = vadd.f32 %v2860, %v3052
        %v3054 = vpop.f32.mrb[0].mxu0
        %v3055 = vadd.f32 %v2862, %v3054
        %3056 = vmatprep.mubr.bf16.mxu0 %v1528
        %3057 = vmatmul.mubr.bf16.gmra.mrb[0].mxu0 %v1527
        %v3058 = vpop.f32.mrb[0].mxu0
        %v3059 = vadd.f32 %v2866, %v3058
        %v3060 = vpop.f32.mrb[0].mxu0
        %v3061 = vadd.f32 %v2868, %v3060
        %v3062 = vpop.f32.mrb[0].mxu0
        %v3063 = vadd.f32 %v2870, %v3062
        %v3064 = vpop.f32.mrb[0].mxu0
        %v3065 = vadd.f32 %v2872, %v3064
        %3066 = vmatprep.mubr.bf16.mxu0 %v1532
        %3067 = vmatmul.mubr.bf16.gmra.mrb[0].mxu0 %v1531
        %v3068 = vpop.f32.mrb[0].mxu0
        %v3069 = vadd.f32 %v2876, %v3068
        %v3070 = vpop.f32.mrb[0].mxu0
        %v3071 = vadd.f32 %v2878, %v3070
        %v3072 = vpop.f32.mrb[0].mxu0
        %v3073 = vadd.f32 %v2880, %v3072
        %v3074 = vpop.f32.mrb[0].mxu0
        %v3075 = vadd.f32 %v2882, %v3074
        %3076 = vmatprep.mubr.bf16.mxu0 %v1536
        %3077 = vmatmul.mubr.bf16.gmra.mrb[0].mxu0 %v1535
        %v3078 = vpop.f32.mrb[0].mxu0
        %v3079 = vadd.f32 %v2886, %v3078
        %v3080 = vpop.f32.mrb[0].mxu0
        %v3081 = vadd.f32 %v2888, %v3080
        %v3082 = vpop.f32.mrb[0].mxu0
        %v3083 = vadd.f32 %v2890, %v3082
        %v3084 = vpop.f32.mrb[0].mxu0
        %v3085 = vadd.f32 %v2892, %v3084
        %3086 = vmatprep.mubr.bf16.mxu0 %v1540
        %3087 = vmatmul.mubr.bf16.gmra.mrb[0].mxu0 %v1539
        %v3088 = vpop.f32.mrb[0].mxu0
        %v3089 = vadd.f32 %v2896, %v3088
        %v3090 = vpop.f32.mrb[0].mxu0
        %v3091 = vadd.f32 %v2898, %v3090
        %v3092 = vpop.f32.mrb[0].mxu0
        %v3093 = vadd.f32 %v2900, %v3092
        %v3094 = vpop.f32.mrb[0].mxu0
        %v3095 = vadd.f32 %v2902, %v3094
        %3096 = vmatprep.mubr.bf16.mxu0 %v1544
        %3097 = vmatmul.mubr.bf16.gmra.mrb[0].mxu0 %v1543
        %v3098 = vpop.f32.mrb[0].mxu0
        %v3099 = vadd.f32 %v2906, %v3098
        %v3100 = vpop.f32.mrb[0].mxu0
        %v3101 = vadd.f32 %v2908, %v3100
        %v3102 = vpop.f32.mrb[0].mxu0
        %v3103 = vadd.f32 %v2910, %v3102
        %v3104 = vpop.f32.mrb[0].mxu0
        %v3105 = vadd.f32 %v2912, %v3104
        %3106 = vdwg.mxu0
        %v3107 = vtanh.pop %v2563
        %v3108 = vtanh.pop %v2565
        %v3109 = vtanh.pop %v2567
        %v3110 = vtanh.pop %v2569
        %v3111 = vtanh.pop %v2573
        %v3112 = vtanh.pop %v2575
        %v3113 = vtanh.pop %v2577
        %v3114 = vtanh.pop %v2579
        %v3115 = vtanh.pop %v2583
        %v3116 = vtanh.pop %v2585
        %v3117 = vtanh.pop %v2587
        %v3118 = vtanh.pop %v2589
        %v3119 = vtanh.pop %v2593
        %v3120 = vtanh.pop %v2595
        %v3121 = vtanh.pop %v2597
        %v3122 = vtanh.pop %v2599
        %v3123 = vtanh.pop %v2603
        %v3124 = vtanh.pop %v2605
        %v3125 = vtanh.pop %v2607
        %v3126 = vtanh.pop %v2609
        %v3127 = vtanh.pop %v2613
        %v3128 = vtanh.pop %v2615
        %v3129 = vtanh.pop %v2617
        %v3130 = vtanh.pop %v2619
        %v3131 = vtanh.pop %v2623
        %v3132 = vtanh.pop %v2625
        %v3133 = vtanh.pop %v2627
        %v3134 = vtanh.pop %v2629
        %v3135 = vtanh.pop %v2633
        %v3136 = vtanh.pop %v2635
        %v3137 = vtanh.pop %v2637
        %v3138 = vtanh.pop %v2639
        %v3139 = vtanh.pop %v2643
        %v3140 = vtanh.pop %v2645
        %v3141 = vtanh.pop %v2647
        %v3142 = vtanh.pop %v2649
        %v3143 = vtanh.pop %v2653
        %v3144 = vtanh.pop %v2655
        %v3145 = vtanh.pop %v2657
        %v3146 = vtanh.pop %v2659
        %v3147 = vtanh.pop %v2663
        %v3148 = vtanh.pop %v2665
        %v3149 = vtanh.pop %v2667
        %v3150 = vtanh.pop %v2669
        %v3151 = vtanh.pop %v2673
        %v3152 = vtanh.pop %v2675
        %v3153 = vtanh.pop %v2677
        %v3154 = vtanh.pop %v2679
        %v3155 = vtanh.pop %v2683
        %v3156 = vtanh.pop %v2685
        %v3157 = vtanh.pop %v2687
        %v3158 = vtanh.pop %v2689
        %v3159 = vtanh.pop %v2693
        %v3160 = vtanh.pop %v2695
        %v3161 = vtanh.pop %v2697
        %v3162 = vtanh.pop %v2699
        %v3163 = vtanh.pop %v2703
        %v3164 = vtanh.pop %v2705
        %v3165 = vtanh.pop %v2707
        %v3166 = vtanh.pop %v2709
        %v3167 = vtanh.pop %v2713
        %v3168 = vtanh.pop %v2715
        %v3169 = vtanh.pop %v2717
        %v3170 = vtanh.pop %v2719
        %v3171 = vxor.u32 %v2949, 2147483648
        %v3172 = vxor.u32 %v2951, 2147483648
        %v3173 = vxor.u32 %v2953, 2147483648
        %v3174 = vxor.u32 %v2955, 2147483648
        %v3175 = vxor.u32 %v2959, 2147483648
        %v3176 = vxor.u32 %v2961, 2147483648
        %v3177 = vxor.u32 %v2963, 2147483648
        %v3178 = vxor.u32 %v2965, 2147483648
        %v3179 = vxor.u32 %v2969, 2147483648
        %v3180 = vxor.u32 %v2971, 2147483648
        %v3181 = vxor.u32 %v2973, 2147483648
        %v3182 = vxor.u32 %v2975, 2147483648
        %v3183 = vxor.u32 %v2979, 2147483648
        %v3184 = vxor.u32 %v2981, 2147483648
        %v3185 = vxor.u32 %v2983, 2147483648
        %v3186 = vxor.u32 %v2985, 2147483648
        %v3187 = vxor.u32 %v2989, 2147483648
        %v3188 = vxor.u32 %v2991, 2147483648
        %v3189 = vxor.u32 %v2993, 2147483648
        %v3190 = vxor.u32 %v2995, 2147483648
        %v3191 = vxor.u32 %v2999, 2147483648
        %v3192 = vxor.u32 %v3001, 2147483648
        %v3193 = vxor.u32 %v3003, 2147483648
        %v3194 = vxor.u32 %v3005, 2147483648
        %v3195 = vxor.u32 %v3009, 2147483648
        %v3196 = vxor.u32 %v3011, 2147483648
        %v3197 = vxor.u32 %v3013, 2147483648
        %v3198 = vxor.u32 %v3015, 2147483648
        %v3199 = vxor.u32 %v3019, 2147483648
        %v3200 = vxor.u32 %v3021, 2147483648
        %v3201 = vxor.u32 %v3023, 2147483648
        %v3202 = vxor.u32 %v3025, 2147483648
        %v3203 = vxor.u32 %v3029, 2147483648
        %v3204 = vxor.u32 %v3031, 2147483648
        %v3205 = vxor.u32 %v3033, 2147483648
        %v3206 = vxor.u32 %v3035, 2147483648
        %v3207 = vxor.u32 %v3039, 2147483648
        %v3208 = vxor.u32 %v3041, 2147483648
        %v3209 = vxor.u32 %v3043, 2147483648
        %v3210 = vxor.u32 %v3045, 2147483648
        %v3211 = vxor.u32 %v3049, 2147483648
        %v3212 = vxor.u32 %v3051, 2147483648
        %v3213 = vxor.u32 %v3053, 2147483648
        %v3214 = vxor.u32 %v3055, 2147483648
        %v3215 = vxor.u32 %v3059, 2147483648
        %v3216 = vxor.u32 %v3061, 2147483648
        %v3217 = vxor.u32 %v3063, 2147483648
        %v3218 = vxor.u32 %v3065, 2147483648
        %v3219 = vxor.u32 %v3069, 2147483648
        %v3220 = vxor.u32 %v3071, 2147483648
        %v3221 = vxor.u32 %v3073, 2147483648
        %v3222 = vxor.u32 %v3075, 2147483648
        %v3223 = vxor.u32 %v3079, 2147483648
        %v3224 = vxor.u32 %v3081, 2147483648
        %v3225 = vxor.u32 %v3083, 2147483648
        %v3226 = vxor.u32 %v3085, 2147483648
        %v3227 = vxor.u32 %v3089, 2147483648
        %v3228 = vxor.u32 %v3091, 2147483648
        %v3229 = vxor.u32 %v3093, 2147483648
        %v3230 = vxor.u32 %v3095, 2147483648
        %v3231 = vxor.u32 %v3099, 2147483648
        %v3232 = vxor.u32 %v3101, 2147483648
        %v3233 = vxor.u32 %v3103, 2147483648
        %v3234 = vxor.u32 %v3105, 2147483648
        %v3235 = vmul.f32 %v3171, 1.442695
        %v3236 = vpow.pop %v3235
        %v3237 = vmul.f32 %v3172, 1.442695
        %v3238 = vpow.pop %v3237
        %v3239 = vmul.f32 %v3173, 1.442695
        %v3240 = vpow.pop %v3239
        %v3241 = vmul.f32 %v3174, 1.442695
        %v3242 = vpow.pop %v3241
        %v3243 = vmul.f32 %v3175, 1.442695
        %v3244 = vpow.pop %v3243
        %v3245 = vmul.f32 %v3176, 1.442695
        %v3246 = vpow.pop %v3245
        %v3247 = vmul.f32 %v3177, 1.442695
        %v3248 = vpow.pop %v3247
        %v3249 = vmul.f32 %v3178, 1.442695
        %v3250 = vpow.pop %v3249
        %v3251 = vmul.f32 %v3179, 1.442695
        %v3252 = vpow.pop %v3251
        %v3253 = vmul.f32 %v3180, 1.442695
        %v3254 = vpow.pop %v3253
        %v3255 = vmul.f32 %v3181, 1.442695
        %v3256 = vpow.pop %v3255
        %v3257 = vmul.f32 %v3182, 1.442695
        %v3258 = vpow.pop %v3257
        %v3259 = vmul.f32 %v3183, 1.442695
        %v3260 = vpow.pop %v3259
        %v3261 = vmul.f32 %v3184, 1.442695
        %v3262 = vpow.pop %v3261
        %v3263 = vmul.f32 %v3185, 1.442695
        %v3264 = vpow.pop %v3263
        %v3265 = vmul.f32 %v3186, 1.442695
        %v3266 = vpow.pop %v3265
        %v3267 = vmul.f32 %v3187, 1.442695
        %v3268 = vpow.pop %v3267
        %v3269 = vmul.f32 %v3188, 1.442695
        %v3270 = vpow.pop %v3269
        %v3271 = vmul.f32 %v3189, 1.442695
        %v3272 = vpow.pop %v3271
        %v3273 = vmul.f32 %v3190, 1.442695
        %v3274 = vpow.pop %v3273
        %v3275 = vmul.f32 %v3191, 1.442695
        %v3276 = vpow.pop %v3275
        %v3277 = vmul.f32 %v3192, 1.442695
        %v3278 = vpow.pop %v3277
        %v3279 = vmul.f32 %v3193, 1.442695
        %v3280 = vpow.pop %v3279
        %v3281 = vmul.f32 %v3194, 1.442695
        %v3282 = vpow.pop %v3281
        %v3283 = vmul.f32 %v3195, 1.442695
        %v3284 = vpow.pop %v3283
        %v3285 = vmul.f32 %v3196, 1.442695
        %v3286 = vpow.pop %v3285
        %v3287 = vmul.f32 %v3197, 1.442695
        %v3288 = vpow.pop %v3287
        %v3289 = vmul.f32 %v3198, 1.442695
        %v3290 = vpow.pop %v3289
        %v3291 = vmul.f32 %v3199, 1.442695
        %v3292 = vpow.pop %v3291
        %v3293 = vmul.f32 %v3200, 1.442695
        %v3294 = vpow.pop %v3293
        %v3295 = vmul.f32 %v3201, 1.442695
        %v3296 = vpow.pop %v3295
        %v3297 = vmul.f32 %v3202, 1.442695
        %v3298 = vpow.pop %v3297
        %v3299 = vmul.f32 %v3203, 1.442695
        %v3300 = vpow.pop %v3299
        %v3301 = vmul.f32 %v3204, 1.442695
        %v3302 = vpow.pop %v3301
        %v3303 = vmul.f32 %v3205, 1.442695
        %v3304 = vpow.pop %v3303
        %v3305 = vmul.f32 %v3206, 1.442695
        %v3306 = vpow.pop %v3305
        %v3307 = vmul.f32 %v3207, 1.442695
        %v3308 = vpow.pop %v3307
        %v3309 = vmul.f32 %v3208, 1.442695
        %v3310 = vpow.pop %v3309
        %v3311 = vmul.f32 %v3209, 1.442695
        %v3312 = vpow.pop %v3311
        %v3313 = vmul.f32 %v3210, 1.442695
        %v3314 = vpow.pop %v3313
        %v3315 = vmul.f32 %v3211, 1.442695
        %v3316 = vpow.pop %v3315
        %v3317 = vmul.f32 %v3212, 1.442695
        %v3318 = vpow.pop %v3317
        %v3319 = vmul.f32 %v3213, 1.442695
        %v3320 = vpow.pop %v3319
        %v3321 = vmul.f32 %v3214, 1.442695
        %v3322 = vpow.pop %v3321
        %v3323 = vmul.f32 %v3215, 1.442695
        %v3324 = vpow.pop %v3323
        %v3325 = vmul.f32 %v3216, 1.442695
        %v3326 = vpow.pop %v3325
        %v3327 = vmul.f32 %v3217, 1.442695
        %v3328 = vpow.pop %v3327
        %v3329 = vmul.f32 %v3218, 1.442695
        %v3330 = vpow.pop %v3329
        %v3331 = vmul.f32 %v3219, 1.442695
        %v3332 = vpow.pop %v3331
        %v3333 = vmul.f32 %v3220, 1.442695
        %v3334 = vpow.pop %v3333
        %v3335 = vmul.f32 %v3221, 1.442695
        %v3336 = vpow.pop %v3335
        %v3337 = vmul.f32 %v3222, 1.442695
        %v3338 = vpow.pop %v3337
        %v3339 = vmul.f32 %v3223, 1.442695
        %v3340 = vpow.pop %v3339
        %v3341 = vmul.f32 %v3224, 1.442695
        %v3342 = vpow.pop %v3341
        %v3343 = vmul.f32 %v3225, 1.442695
        %v3344 = vpow.pop %v3343
        %v3345 = vmul.f32 %v3226, 1.442695
        %v3346 = vpow.pop %v3345
        %v3347 = vmul.f32 %v3227, 1.442695
        %v3348 = vpow.pop %v3347
        %v3349 = vmul.f32 %v3228, 1.442695
        %v3350 = vpow.pop %v3349
        %v3351 = vmul.f32 %v3229, 1.442695
        %v3352 = vpow.pop %v3351
        %v3353 = vmul.f32 %v3230, 1.442695
        %v3354 = vpow.pop %v3353
        %v3355 = vmul.f32 %v3231, 1.442695
        %v3356 = vpow.pop %v3355
        %v3357 = vmul.f32 %v3232, 1.442695
        %v3358 = vpow.pop %v3357
        %v3359 = vmul.f32 %v3233, 1.442695
        %v3360 = vpow.pop %v3359
        %v3361 = vmul.f32 %v3234, 1.442695
        %v3362 = vpow.pop %v3361
        %v3363 = vadd.f32 %v3236, 1.0
        %v3364 = vadd.f32 %v3238, 1.0
        %v3365 = vadd.f32 %v3240, 1.0
        %v3366 = vadd.f32 %v3242, 1.0
        %v3367 = vadd.f32 %v3244, 1.0
        %v3368 = vadd.f32 %v3246, 1.0
        %v3369 = vadd.f32 %v3248, 1.0
        %v3370 = vadd.f32 %v3250, 1.0
        %v3371 = vadd.f32 %v3252, 1.0
        %v3372 = vadd.f32 %v3254, 1.0
        %v3373 = vadd.f32 %v3256, 1.0
        %v3374 = vadd.f32 %v3258, 1.0
        %v3375 = vadd.f32 %v3260, 1.0
        %v3376 = vadd.f32 %v3262, 1.0
        %v3377 = vadd.f32 %v3264, 1.0
        %v3378 = vadd.f32 %v3266, 1.0
        %v3379 = vadd.f32 %v3268, 1.0
        %v3380 = vadd.f32 %v3270, 1.0
        %v3381 = vadd.f32 %v3272, 1.0
        %v3382 = vadd.f32 %v3274, 1.0
        %v3383 = vadd.f32 %v3276, 1.0
        %v3384 = vadd.f32 %v3278, 1.0
        %v3385 = vadd.f32 %v3280, 1.0
        %v3386 = vadd.f32 %v3282, 1.0
        %v3387 = vadd.f32 %v3284, 1.0
        %v3388 = vadd.f32 %v3286, 1.0
        %v3389 = vadd.f32 %v3288, 1.0
        %v3390 = vadd.f32 %v3290, 1.0
        %v3391 = vadd.f32 %v3292, 1.0
        %v3392 = vadd.f32 %v3294, 1.0
        %v3393 = vadd.f32 %v3296, 1.0
        %v3394 = vadd.f32 %v3298, 1.0
        %v3395 = vadd.f32 %v3300, 1.0
        %v3396 = vadd.f32 %v3302, 1.0
        %v3397 = vadd.f32 %v3304, 1.0
        %v3398 = vadd.f32 %v3306, 1.0
        %v3399 = vadd.f32 %v3308, 1.0
        %v3400 = vadd.f32 %v3310, 1.0
        %v3401 = vadd.f32 %v3312, 1.0
        %v3402 = vadd.f32 %v3314, 1.0
        %v3403 = vadd.f32 %v3316, 1.0
        %v3404 = vadd.f32 %v3318, 1.0
        %v3405 = vadd.f32 %v3320, 1.0
        %v3406 = vadd.f32 %v3322, 1.0
        %v3407 = vadd.f32 %v3324, 1.0
        %v3408 = vadd.f32 %v3326, 1.0
        %v3409 = vadd.f32 %v3328, 1.0
        %v3410 = vadd.f32 %v3330, 1.0
        %v3411 = vadd.f32 %v3332, 1.0
        %v3412 = vadd.f32 %v3334, 1.0
        %v3413 = vadd.f32 %v3336, 1.0
        %v3414 = vadd.f32 %v3338, 1.0
        %v3415 = vadd.f32 %v3340, 1.0
        %v3416 = vadd.f32 %v3342, 1.0
        %v3417 = vadd.f32 %v3344, 1.0
        %v3418 = vadd.f32 %v3346, 1.0
        %v3419 = vadd.f32 %v3348, 1.0
        %v3420 = vadd.f32 %v3350, 1.0
        %v3421 = vadd.f32 %v3352, 1.0
        %v3422 = vadd.f32 %v3354, 1.0
        %v3423 = vadd.f32 %v3356, 1.0
        %v3424 = vadd.f32 %v3358, 1.0
        %v3425 = vadd.f32 %v3360, 1.0
        %v3426 = vadd.f32 %v3362, 1.0
        %v3427 = vrcp.pop %v3363
        %v3428 = vmul.f32 1.0, %v3427
        %v3429 = vrcp.pop %v3364
        %v3430 = vmul.f32 1.0, %v3429
        %v3431 = vrcp.pop %v3365
        %v3432 = vmul.f32 1.0, %v3431
        %v3433 = vrcp.pop %v3366
        %v3434 = vmul.f32 1.0, %v3433
        %v3435 = vrcp.pop %v3367
        %v3436 = vmul.f32 1.0, %v3435
        %v3437 = vrcp.pop %v3368
        %v3438 = vmul.f32 1.0, %v3437
        %v3439 = vrcp.pop %v3369
        %v3440 = vmul.f32 1.0, %v3439
        %v3441 = vrcp.pop %v3370
        %v3442 = vmul.f32 1.0, %v3441
        %v3443 = vrcp.pop %v3371
        %v3444 = vmul.f32 1.0, %v3443
        %v3445 = vrcp.pop %v3372
        %v3446 = vmul.f32 1.0, %v3445
        %v3447 = vrcp.pop %v3373
        %v3448 = vmul.f32 1.0, %v3447
        %v3449 = vrcp.pop %v3374
        %v3450 = vmul.f32 1.0, %v3449
        %v3451 = vrcp.pop %v3375
        %v3452 = vmul.f32 1.0, %v3451
        %v3453 = vrcp.pop %v3376
        %v3454 = vmul.f32 1.0, %v3453
        %v3455 = vrcp.pop %v3377
        %v3456 = vmul.f32 1.0, %v3455
        %v3457 = vrcp.pop %v3378
        %v3458 = vmul.f32 1.0, %v3457
        %v3459 = vrcp.pop %v3379
        %v3460 = vmul.f32 1.0, %v3459
        %v3461 = vrcp.pop %v3380
        %v3462 = vmul.f32 1.0, %v3461
        %v3463 = vrcp.pop %v3381
        %v3464 = vmul.f32 1.0, %v3463
        %v3465 = vrcp.pop %v3382
        %v3466 = vmul.f32 1.0, %v3465
        %v3467 = vrcp.pop %v3383
        %v3468 = vmul.f32 1.0, %v3467
        %v3469 = vrcp.pop %v3384
        %v3470 = vmul.f32 1.0, %v3469
        %v3471 = vrcp.pop %v3385
        %v3472 = vmul.f32 1.0, %v3471
        %v3473 = vrcp.pop %v3386
        %v3474 = vmul.f32 1.0, %v3473
        %v3475 = vrcp.pop %v3387
        %v3476 = vmul.f32 1.0, %v3475
        %v3477 = vrcp.pop %v3388
        %v3478 = vmul.f32 1.0, %v3477
        %v3479 = vrcp.pop %v3389
        %v3480 = vmul.f32 1.0, %v3479
        %v3481 = vrcp.pop %v3390
        %v3482 = vmul.f32 1.0, %v3481
        %v3483 = vrcp.pop %v3391
        %v3484 = vmul.f32 1.0, %v3483
        %v3485 = vrcp.pop %v3392
        %v3486 = vmul.f32 1.0, %v3485
        %v3487 = vrcp.pop %v3393
        %v3488 = vmul.f32 1.0, %v3487
        %v3489 = vrcp.pop %v3394
        %v3490 = vmul.f32 1.0, %v3489
        %v3491 = vrcp.pop %v3395
        %v3492 = vmul.f32 1.0, %v3491
        %v3493 = vrcp.pop %v3396
        %v3494 = vmul.f32 1.0, %v3493
        %v3495 = vrcp.pop %v3397
        %v3496 = vmul.f32 1.0, %v3495
        %v3497 = vrcp.pop %v3398
        %v3498 = vmul.f32 1.0, %v3497
        %v3499 = vrcp.pop %v3399
        %v3500 = vmul.f32 1.0, %v3499
        %v3501 = vrcp.pop %v3400
        %v3502 = vmul.f32 1.0, %v3501
        %v3503 = vrcp.pop %v3401
        %v3504 = vmul.f32 1.0, %v3503
        %v3505 = vrcp.pop %v3402
        %v3506 = vmul.f32 1.0, %v3505
        %v3507 = vrcp.pop %v3403
        %v3508 = vmul.f32 1.0, %v3507
        %v3509 = vrcp.pop %v3404
        %v3510 = vmul.f32 1.0, %v3509
        %v3511 = vrcp.pop %v3405
        %v3512 = vmul.f32 1.0, %v3511
        %v3513 = vrcp.pop %v3406
        %v3514 = vmul.f32 1.0, %v3513
        %v3515 = vrcp.pop %v3407
        %v3516 = vmul.f32 1.0, %v3515
        %v3517 = vrcp.pop %v3408
        %v3518 = vmul.f32 1.0, %v3517
        %v3519 = vrcp.pop %v3409
        %v3520 = vmul.f32 1.0, %v3519
        %v3521 = vrcp.pop %v3410
        %v3522 = vmul.f32 1.0, %v3521
        %v3523 = vrcp.pop %v3411
        %v3524 = vmul.f32 1.0, %v3523
        %v3525 = vrcp.pop %v3412
        %v3526 = vmul.f32 1.0, %v3525
        %v3527 = vrcp.pop %v3413
        %v3528 = vmul.f32 1.0, %v3527
        %v3529 = vrcp.pop %v3414
        %v3530 = vmul.f32 1.0, %v3529
        %v3531 = vrcp.pop %v3415
        %v3532 = vmul.f32 1.0, %v3531
        %v3533 = vrcp.pop %v3416
        %v3534 = vmul.f32 1.0, %v3533
        %v3535 = vrcp.pop %v3417
        %v3536 = vmul.f32 1.0, %v3535
        %v3537 = vrcp.pop %v3418
        %v3538 = vmul.f32 1.0, %v3537
        %v3539 = vrcp.pop %v3419
        %v3540 = vmul.f32 1.0, %v3539
        %v3541 = vrcp.pop %v3420
        %v3542 = vmul.f32 1.0, %v3541
        %v3543 = vrcp.pop %v3421
        %v3544 = vmul.f32 1.0, %v3543
        %v3545 = vrcp.pop %v3422
        %v3546 = vmul.f32 1.0, %v3545
        %v3547 = vrcp.pop %v3423
        %v3548 = vmul.f32 1.0, %v3547
        %v3549 = vrcp.pop %v3424
        %v3550 = vmul.f32 1.0, %v3549
        %v3551 = vrcp.pop %v3425
        %v3552 = vmul.f32 1.0, %v3551
        %v3553 = vrcp.pop %v3426
        %v3554 = vmul.f32 1.0, %v3553
        %v3555 = vmul.f32 %v3107, %v3428
        %v3556 = vmul.f32 %v3108, %v3430
        %v3557 = vmul.f32 %v3109, %v3432
        %v3558 = vmul.f32 %v3110, %v3434
        %v3559 = vmul.f32 %v3111, %v3436
        %v3560 = vmul.f32 %v3112, %v3438
        %v3561 = vmul.f32 %v3113, %v3440
        %v3562 = vmul.f32 %v3114, %v3442
        %v3563 = vmul.f32 %v3115, %v3444
        %v3564 = vmul.f32 %v3116, %v3446
        %v3565 = vmul.f32 %v3117, %v3448
        %v3566 = vmul.f32 %v3118, %v3450
        %v3567 = vmul.f32 %v3119, %v3452
        %v3568 = vmul.f32 %v3120, %v3454
        %v3569 = vmul.f32 %v3121, %v3456
        %v3570 = vmul.f32 %v3122, %v3458
        %v3571 = vmul.f32 %v3123, %v3460
        %v3572 = vmul.f32 %v3124, %v3462
        %v3573 = vmul.f32 %v3125, %v3464
        %v3574 = vmul.f32 %v3126, %v3466
        %v3575 = vmul.f32 %v3127, %v3468
        %v3576 = vmul.f32 %v3128, %v3470
        %v3577 = vmul.f32 %v3129, %v3472
        %v3578 = vmul.f32 %v3130, %v3474
        %v3579 = vmul.f32 %v3131, %v3476
        %v3580 = vmul.f32 %v3132, %v3478
        %v3581 = vmul.f32 %v3133, %v3480
        %v3582 = vmul.f32 %v3134, %v3482
        %v3583 = vmul.f32 %v3135, %v3484
        %v3584 = vmul.f32 %v3136, %v3486
        %v3585 = vmul.f32 %v3137, %v3488
        %v3586 = vmul.f32 %v3138, %v3490
        %v3587 = vmul.f32 %v3139, %v3492
        %v3588 = vmul.f32 %v3140, %v3494
        %v3589 = vmul.f32 %v3141, %v3496
        %v3590 = vmul.f32 %v3142, %v3498
        %v3591 = vmul.f32 %v3143, %v3500
        %v3592 = vmul.f32 %v3144, %v3502
        %v3593 = vmul.f32 %v3145, %v3504
        %v3594 = vmul.f32 %v3146, %v3506
        %v3595 = vmul.f32 %v3147, %v3508
        %v3596 = vmul.f32 %v3148, %v3510
        %v3597 = vmul.f32 %v3149, %v3512
        %v3598 = vmul.f32 %v3150, %v3514
        %v3599 = vmul.f32 %v3151, %v3516
        %v3600 = vmul.f32 %v3152, %v3518
        %v3601 = vmul.f32 %v3153, %v3520
        %v3602 = vmul.f32 %v3154, %v3522
        %v3603 = vmul.f32 %v3155, %v3524
        %v3604 = vmul.f32 %v3156, %v3526
        %v3605 = vmul.f32 %v3157, %v3528
        %v3606 = vmul.f32 %v3158, %v3530
        %v3607 = vmul.f32 %v3159, %v3532
        %v3608 = vmul.f32 %v3160, %v3534
        %v3609 = vmul.f32 %v3161, %v3536
        %v3610 = vmul.f32 %v3162, %v3538
        %v3611 = vmul.f32 %v3163, %v3540
        %v3612 = vmul.f32 %v3164, %v3542
        %v3613 = vmul.f32 %v3165, %v3544
        %v3614 = vmul.f32 %v3166, %v3546
        %v3615 = vmul.f32 %v3167, %v3548
        %v3616 = vmul.f32 %v3168, %v3550
        %v3617 = vmul.f32 %v3169, %v3552
        %v3618 = vmul.f32 %v3170, %v3554
        %v3619 = vpack.c.bf16 %v3557, %v3555
        %v3620 = vpack.c.bf16 %v3558, %v3556
        %v3621 = vpack.c.bf16 %v3561, %v3559
        %v3622 = vpack.c.bf16 %v3562, %v3560
        %v3623 = vpack.c.bf16 %v3565, %v3563
        %v3624 = vpack.c.bf16 %v3566, %v3564
        %v3625 = vpack.c.bf16 %v3569, %v3567
        %v3626 = vpack.c.bf16 %v3570, %v3568
        %v3627 = vpack.c.bf16 %v3573, %v3571
        %v3628 = vpack.c.bf16 %v3574, %v3572
        %v3629 = vpack.c.bf16 %v3577, %v3575
        %v3630 = vpack.c.bf16 %v3578, %v3576
        %v3631 = vpack.c.bf16 %v3581, %v3579
        %v3632 = vpack.c.bf16 %v3582, %v3580
        %v3633 = vpack.c.bf16 %v3585, %v3583
        %v3634 = vpack.c.bf16 %v3586, %v3584
        %v3635 = vpack.c.bf16 %v3589, %v3587
        %v3636 = vpack.c.bf16 %v3590, %v3588
        %v3637 = vpack.c.bf16 %v3593, %v3591
        %v3638 = vpack.c.bf16 %v3594, %v3592
        %v3639 = vpack.c.bf16 %v3597, %v3595
        %v3640 = vpack.c.bf16 %v3598, %v3596
        %v3641 = vpack.c.bf16 %v3601, %v3599
        %v3642 = vpack.c.bf16 %v3602, %v3600
        %v3643 = vpack.c.bf16 %v3605, %v3603
        %v3644 = vpack.c.bf16 %v3606, %v3604
        %v3645 = vpack.c.bf16 %v3609, %v3607
        %v3646 = vpack.c.bf16 %v3610, %v3608
        %v3647 = vpack.c.bf16 %v3613, %v3611
        %v3648 = vpack.c.bf16 %v3614, %v3612
        %v3649 = vpack.c.bf16 %v3617, %v3615
        %v3650 = vpack.c.bf16 %v3618, %v3616
        %v3651 = vld [vmem:[%s5] sm:$0x3]
        %v3652 = vld [vmem:[%s6] sm:$0x3]
        %3654 = vset.pattern.permute.xlu0 0
        %3655 = vperm.xlu0 %3654, %v3652
        %v3656 = vpop.permute.xlu0 %3655
        %v3660 = vunpack.c.l.s4 1966171168
        %v3661 = vunpack.c.0.s8 %v3660
        %v3662 = vlaneseq
        %v3663 = vshrl.u32 %v3662, 7
        %v3664 = vsub.s32 %v3661, %v3663
        %v3665 = vrot.slane %v3651, %v3664
        %v3666 = vcombine.high %v3665, %v3665
        %v3668 = vunpack.c.l.s4 1966171168
        %v3669 = vunpack.c.0.s8 %v3668
        %v3670 = vlaneseq
        %v3671 = vshrl.u32 %v3670, 7
        %v3672 = vsub.s32 %v3669, %v3671
        %v3673 = vrot.slane %v3665, %v3672
        %v3675 = vunpack.c.l.s4 1966171168
        %v3676 = vunpack.c.0.s8 %v3675
        %v3677 = vlaneseq
        %v3678 = vshrl.u32 %v3677, 7
        %v3679 = vsub.s32 %v3676, %v3678
        %v3680 = vrot.slane %v3666, %v3679
        %3683 = vmatprep.subr.bf16.mxu0 %v3620
        %3684 = vmatpush1.bf16.xpose.msra.mxu0 %v3619
        %3685 = vmatprep.subr.bf16.mxu0 %v3622
        %3686 = vmatpush1.bf16.xpose.msra.mxu0 %v3621
        %3687 = vmatprep.subr.bf16.mxu0 %v3624
        %3688 = vmatpush1.bf16.xpose.msra.mxu0 %v3623
        %3689 = vmatprep.subr.bf16.mxu0 %v3626
        %3690 = vmatpush1.bf16.xpose.msra.mxu0 %v3625
        %3691 = vmatprep.subr.bf16.mxu0 %v3628
        %3692 = vmatpush1.bf16.xpose.msra.mxu0 %v3627
        %3693 = vmatprep.subr.bf16.mxu0 %v3630
        %3694 = vmatpush1.bf16.xpose.msra.mxu0 %v3629
        %3695 = vmatprep.subr.bf16.mxu0 %v3632
        %3696 = vmatpush1.bf16.xpose.msra.mxu0 %v3631
        %3697 = vmatprep.subr.bf16.mxu0 %v3634
        %3698 = vmatpush1.bf16.xpose.msra.mxu0 %v3633
        %3699 = vmatprep.subr.bf16.mxu0 %v3636
        %3700 = vmatpush1.bf16.xpose.msra.mxu0 %v3635
        %3701 = vmatprep.subr.bf16.mxu0 %v3638
        %3702 = vmatpush1.bf16.xpose.msra.mxu0 %v3637
        %3703 = vmatprep.subr.bf16.mxu0 %v3640
        %3704 = vmatpush1.bf16.xpose.msra.mxu0 %v3639
        %3705 = vmatprep.subr.bf16.mxu0 %v3642
        %3706 = vmatpush1.bf16.xpose.msra.mxu0 %v3641
        %3707 = vmatprep.subr.bf16.mxu0 %v3644
        %3708 = vmatpush1.bf16.xpose.msra.mxu0 %v3643
        %3709 = vmatprep.subr.bf16.mxu0 %v3646
        %3710 = vmatpush1.bf16.xpose.msra.mxu0 %v3645
        %3711 = vmatprep.subr.bf16.mxu0 %v3648
        %3712 = vmatpush1.bf16.xpose.msra.mxu0 %v3647
        %3713 = vmatprep.subr.bf16.mxu0 %v3650
        %3714 = vmatpush1.bf16.xpose.msra.mxu0 %v3649
        %3715 = vmatprep.mubr.bf16.mxu0 %v3680
        %3716 = vmatmul.mubr.bf16.gmra.mrb[0].mxu0 %v3673
        %v3717 = vpop.f32.mrb[0].mxu0
        %v3718 = vadd.f32 %v3656, %v3717
        %v3719 = vpop.f32.mrb[0].mxu0
        %v3720 = vadd.f32 %v3656, %v3719
        %v3721 = vpop.f32.mrb[0].mxu0
        %v3722 = vpop.f32.mrb[0].mxu0
        %3723 = vdwg.mxu0
        %v3726 = vcombine.low %v3718, %v3720
        %v3728 = vunpack.c.l.s4 1983009808
        %v3729 = vunpack.c.0.s8 %v3728
        %v3730 = vlaneseq
        %v3731 = vshrl.u32 %v3730, 7
        %v3732 = vsub.s32 %v3729, %v3731
        %v3733 = vrot.slane %v3726, %v3732
        %3735 = vst [vmem:[%s448] sm:$0xf] %v3733
        %s3736 = smul.u32 %s32, 256
        %v3737 = vlaneseq
        %v3738 = vand.u32 %v3737, 127
        %v3739 = vadd.s32 %v3738, 128
        %v3740 = vstv %s3736
        %v3741 = vadd.s32 %v3740, %v3738
        %v3742 = vadd.s32 %v3740, %v3739
        %vm3743 = vcmp.lt.s32.totalorder %v3741, 1000
        %vm3744 = vcmp.lt.s32.totalorder %v3742, 1000
        %v3745 = vsel %vm3743, 1, 0
        %v3746 = vsel %vm3744, 1, 0
        %vm3747 = vcmp.eq.s32.totalorder %v3745, 1
        %vm3748 = vcmp.eq.s32.totalorder %v3746, 1
        %v3749 = vsel %vm3747, %v3718, -1e+30
        %v3750 = vsel %vm3748, %v3720, -1e+30
        %v3751 = vld [vmem:[#allocation2] sm:$0x3]
        %vm3752 = vcmask 1041408
        %v3753 = vsel %vm3752, %v3749, -inf
        %v3754 = vsel %vm3752, %v3750, -inf
        %v3755 = vmax.f32 %v3753, %v3754
        %3756 = vmax.xlane.f32.xlu0 %v3755
        %v3757 = vpop.xlane.xlu0 %3756
        %v3758 = vmax.f32 %v3751, %v3757
        %v3759 = vsub.f32 %v3751, %v3758
        %v3760 = vmul.f32 %v3759, 1.442695
        %v3761 = vpow.pop %v3760
        %3763 = vset.pattern.permute.xlu0 0
        %3764 = vperm.xlu0 %3763, %v3758
        %v3765 = vpop.permute.xlu0 %3764
        %v3767 = vsub.f32 %v3749, %v3765
        %v3768 = vsub.f32 %v3750, %v3765
        %v3769 = vmul.f32 %v3767, 1.442695
        %v3770 = vpow.pop %v3769
        %v3771 = vmul.f32 %v3768, 1.442695
        %v3772 = vpow.pop %v3771
        %v3773 = vld [vmem:[#allocation3] sm:$0x3]
        %v3774 = vmul.f32 %v3761, %v3773
        %v3775 = vsel %vm3752, %v3770, 0.0
        %v3776 = vsel %vm3752, %v3772, 0.0
        %v3777 = vadd.f32 %v3775, %v3776
        %3778 = vadd.xlane.f32.xlu0 %v3777
        %v3779 = vpop.xlane.xlu0 %3778
        %v3780 = vadd.f32 %v3774, %v3779
        %vm3781 = vcmask 1024
        %3782 = vst.msk [vmem:[#allocation3] sm:$0x3] %vm3781, %v3780
        %v3783 = vld [vmem:[#allocation4] sm:$0xff]
        %3785 = vset.pattern.permute.xlu0 0
        %3786 = vperm.xlu0 %3785, %v3761
        %v3787 = vpop.permute.xlu0 %3786
        %v3790 = vcombine.high %v3783, %v3783
        %v3792 = vunpack.c.l.s4 1983009808
        %v3793 = vunpack.c.0.s8 %v3792
        %v3794 = vlaneseq
        %v3795 = vshrl.u32 %v3794, 7
        %v3796 = vsub.s32 %v3793, %v3795
        %v3797 = vrot.slane %v3783, %v3796
        %v3799 = vunpack.c.l.s4 1983009808
        %v3800 = vunpack.c.0.s8 %v3799
        %v3801 = vlaneseq
        %v3802 = vshrl.u32 %v3801, 7
        %v3803 = vsub.s32 %v3800, %v3802
        %v3804 = vrot.slane %v3790, %v3803
        %v3805 = vcombine.high %v3797, %v3797
        %v3806 = vcombine.high %v3804, %v3804
        %v3811 = vmul.f32 %v3787, %v3797
        %v3812 = vmul.f32 %v3787, %v3805
        %v3813 = vmul.f32 %v3787, %v3804
        %v3814 = vmul.f32 %v3787, %v3806
        %3815 = vmatprep.subr.mxu0 %v1354
        %3816 = vmatpush1.msra.mxu0 %v1353
        %3817 = vmatprep.subr.mxu0 %v1358
        %3818 = vmatpush1.msra.mxu0 %v1357
        %3819 = vmatprep.subr.mxu0 %v1362
        %3820 = vmatpush1.msra.mxu0 %v1361
        %3821 = vmatprep.subr.mxu0 %v1366
        %3822 = vmatpush1.msra.mxu0 %v1365
        %3823 = vmatprep.subr.mxu0 %v1370
        %3824 = vmatpush1.msra.mxu0 %v1369
        %3825 = vmatprep.subr.mxu0 %v1374
        %3826 = vmatpush1.msra.mxu0 %v1373
        %3827 = vmatprep.subr.mxu0 %v1378
        %3828 = vmatpush1.msra.mxu0 %v1377
        %3829 = vmatprep.subr.mxu0 %v1382
        %3830 = vmatpush1.msra.mxu0 %v1381
        %3831 = vmatprep.subr.mxu0 %v1386
        %3832 = vmatpush1.msra.mxu0 %v1385
        %3833 = vmatprep.subr.mxu0 %v1390
        %3834 = vmatpush1.msra.mxu0 %v1389
        %3835 = vmatprep.subr.mxu0 %v1394
        %3836 = vmatpush1.msra.mxu0 %v1393
        %3837 = vmatprep.subr.mxu0 %v1398
        %3838 = vmatpush1.msra.mxu0 %v1397
        %3839 = vmatprep.subr.mxu0 %v1402
        %3840 = vmatpush1.msra.mxu0 %v1401
        %3841 = vmatprep.subr.mxu0 %v1406
        %3842 = vmatpush1.msra.mxu0 %v1405
        %3843 = vmatprep.subr.mxu0 %v1410
        %3844 = vmatpush1.msra.mxu0 %v1409
        %3845 = vmatprep.subr.mxu0 %v1414
        %3846 = vmatpush1.msra.mxu0 %v1413
        %3847 = vmatprep.subr.mxu0 %v1418
        %3848 = vmatpush1.msra.mxu0 %v1417
        %3849 = vmatprep.subr.mxu0 %v1422
        %3850 = vmatpush1.msra.mxu0 %v1421
        %3851 = vmatprep.subr.mxu0 %v1426
        %3852 = vmatpush1.msra.mxu0 %v1425
        %3853 = vmatprep.subr.mxu0 %v1430
        %3854 = vmatpush1.msra.mxu0 %v1429
        %3855 = vmatprep.subr.mxu0 %v1434
        %3856 = vmatpush1.msra.mxu0 %v1433
        %3857 = vmatprep.subr.mxu0 %v1438
        %3858 = vmatpush1.msra.mxu0 %v1437
        %3859 = vmatprep.subr.mxu0 %v1442
        %3860 = vmatpush1.msra.mxu0 %v1441
        %3861 = vmatprep.subr.mxu0 %v1446
        %3862 = vmatpush1.msra.mxu0 %v1445
        %3863 = vmatprep.subr.mxu0 %v1450
        %3864 = vmatpush1.msra.mxu0 %v1449
        %3865 = vmatprep.subr.mxu0 %v1454
        %3866 = vmatpush1.msra.mxu0 %v1453
        %3867 = vmatprep.subr.mxu0 %v1458
        %3868 = vmatpush1.msra.mxu0 %v1457
        %3869 = vmatprep.subr.mxu0 %v1462
        %3870 = vmatpush1.msra.mxu0 %v1461
        %3871 = vmatprep.subr.mxu0 %v1466
        %3872 = vmatpush1.msra.mxu0 %v1465
        %3873 = vmatprep.subr.mxu0 %v1470
        %3874 = vmatpush1.msra.mxu0 %v1469
        %3875 = vmatprep.subr.mxu0 %v1474
        %3876 = vmatpush1.msra.mxu0 %v1473
        %3877 = vmatprep.subr.mxu0 %v1478
        %3878 = vmatpush1.msra.mxu0 %v1477
        %3879 = vmatprep.mubr.f32.mxu0 %v3772
        %3880 = vmatmul.mubr.f32.gmra.mrb[0].mxu0 %v3770
        %v3881 = vpop.f32.mrb[0].mxu0
        %v3882 = vadd.f32 0.0, %v3881
        %v3883 = vpop.f32.mrb[0].mxu0
        %v3884 = vadd.f32 0.0, %v3883
        %3885 = vdwg.mxu0
        %3886 = vmatprep.subr.mxu0 %v1356
        %3887 = vmatpush1.msra.mxu0 %v1355
        %3888 = vmatprep.subr.mxu0 %v1360
        %3889 = vmatpush1.msra.mxu0 %v1359
        %3890 = vmatprep.subr.mxu0 %v1364
        %3891 = vmatpush1.msra.mxu0 %v1363
        %3892 = vmatprep.subr.mxu0 %v1368
        %3893 = vmatpush1.msra.mxu0 %v1367
        %3894 = vmatprep.subr.mxu0 %v1372
        %3895 = vmatpush1.msra.mxu0 %v1371
        %3896 = vmatprep.subr.mxu0 %v1376
        %3897 = vmatpush1.msra.mxu0 %v1375
        %3898 = vmatprep.subr.mxu0 %v1380
        %3899 = vmatpush1.msra.mxu0 %v1379
        %3900 = vmatprep.subr.mxu0 %v1384
        %3901 = vmatpush1.msra.mxu0 %v1383
        %3902 = vmatprep.subr.mxu0 %v1388
        %3903 = vmatpush1.msra.mxu0 %v1387
        %3904 = vmatprep.subr.mxu0 %v1392
        %3905 = vmatpush1.msra.mxu0 %v1391
        %3906 = vmatprep.subr.mxu0 %v1396
        %3907 = vmatpush1.msra.mxu0 %v1395
        %3908 = vmatprep.subr.mxu0 %v1400
        %3909 = vmatpush1.msra.mxu0 %v1399
        %3910 = vmatprep.subr.mxu0 %v1404
        %3911 = vmatpush1.msra.mxu0 %v1403
        %3912 = vmatprep.subr.mxu0 %v1408
        %3913 = vmatpush1.msra.mxu0 %v1407
        %3914 = vmatprep.subr.mxu0 %v1412
        %3915 = vmatpush1.msra.mxu0 %v1411
        %3916 = vmatprep.subr.mxu0 %v1416
        %3917 = vmatpush1.msra.mxu0 %v1415
        %3918 = vmatprep.subr.mxu0 %v1420
        %3919 = vmatpush1.msra.mxu0 %v1419
        %3920 = vmatprep.subr.mxu0 %v1424
        %3921 = vmatpush1.msra.mxu0 %v1423
        %3922 = vmatprep.subr.mxu0 %v1428
        %3923 = vmatpush1.msra.mxu0 %v1427
        %3924 = vmatprep.subr.mxu0 %v1432
        %3925 = vmatpush1.msra.mxu0 %v1431
        %3926 = vmatprep.subr.mxu0 %v1436
        %3927 = vmatpush1.msra.mxu0 %v1435
        %3928 = vmatprep.subr.mxu0 %v1440
        %3929 = vmatpush1.msra.mxu0 %v1439
        %3930 = vmatprep.subr.mxu0 %v1444
        %3931 = vmatpush1.msra.mxu0 %v1443
        %3932 = vmatprep.subr.mxu0 %v1448
        %3933 = vmatpush1.msra.mxu0 %v1447
        %3934 = vmatprep.subr.mxu0 %v1452
        %3935 = vmatpush1.msra.mxu0 %v1451
        %3936 = vmatprep.subr.mxu0 %v1456
        %3937 = vmatpush1.msra.mxu0 %v1455
        %3938 = vmatprep.subr.mxu0 %v1460
        %3939 = vmatpush1.msra.mxu0 %v1459
        %3940 = vmatprep.subr.mxu0 %v1464
        %3941 = vmatpush1.msra.mxu0 %v1463
        %3942 = vmatprep.subr.mxu0 %v1468
        %3943 = vmatpush1.msra.mxu0 %v1467
        %3944 = vmatprep.subr.mxu0 %v1472
        %3945 = vmatpush1.msra.mxu0 %v1471
        %3946 = vmatprep.subr.mxu0 %v1476
        %3947 = vmatpush1.msra.mxu0 %v1475
        %3948 = vmatprep.subr.mxu0 %v1480
        %3949 = vmatpush1.msra.mxu0 %v1479
        %3950 = vmatprep.mubr.f32.mxu0 %v3772
        %3951 = vmatmul.mubr.f32.gmra.mrb[0].mxu0 %v3770
        %v3952 = vpop.f32.mrb[0].mxu0
        %v3953 = vadd.f32 0.0, %v3952
        %v3954 = vpop.f32.mrb[0].mxu0
        %v3955 = vadd.f32 0.0, %v3954
        %3956 = vdwg.mxu0
        %v3957 = vadd.f32 %v3811, %v3882
        %v3958 = vadd.f32 %v3812, %v3884
        %v3959 = vadd.f32 %v3813, %v3953
        %v3960 = vadd.f32 %v3814, %v3955
        %v3965 = vcombine.low %v3957, %v3958
        %v3966 = vcombine.low %v3959, %v3960
        %v3968 = vunpack.c.l.s4 1983009808
        %v3969 = vunpack.c.0.s8 %v3968
        %v3970 = vlaneseq
        %v3971 = vshrl.u32 %v3970, 7
        %v3972 = vsub.s32 %v3969, %v3971
        %v3973 = vrot.slane %v3965, %v3972
        %v3975 = vunpack.c.l.s4 1983009808
        %v3976 = vunpack.c.0.s8 %v3975
        %v3977 = vlaneseq
        %v3978 = vshrl.u32 %v3977, 7
        %v3979 = vsub.s32 %v3976, %v3978
        %v3980 = vrot.slane %v3966, %v3979
        %v3981 = vcombine.low %v3973, %v3980
        %3983 = vst [vmem:[#allocation4] sm:$0xff] %v3981
        %3984 = vst.msk [vmem:[#allocation2] sm:$0x3] %vm3781, %v3758
        %p3985 = scmp.eq.s32.totalorder %s32, 3
        // Predicated region
        $region73: #{tpu_custom_call.1} parent=55 // pred_check
          %p3986 = pneg %p3985
        $region74: #{tpu_custom_call.1} parent=55 // pred_check_branch
          %3988 = sbr.rel (%p3986) target = $region76
        $region75: #{tpu_custom_call.1} parent=55 // pred_region
          %v3989 = vld [vmem:[#allocation4] sm:$0xff]
          %v3990 = vld [vmem:[#allocation3] sm:$0x3]
          %v3991 = vrcp.pop %v3990
          %v3992 = vmul.f32 1.0, %v3991
          %3994 = vset.pattern.permute.xlu0 0
          %3995 = vperm.xlu0 %3994, %v3992
          %v3996 = vpop.permute.xlu0 %3995
          %v3998 = vunpack.c.l.s4 269488144
          %v3999 = vunpack.c.0.s8 %v3998
          %v4000 = vlaneseq
          %v4001 = vshrl.u32 %v4000, 7
          %v4002 = vsub.s32 %v3999, %v4001
          %v4003 = vrot.slane %v3996, %v4002
          %v4005 = vmul.f32 %v3989, %v4003
          %4006 = vst [vmem:[#allocation12] sm:$0xff] %v4005
          %v4007 = vld [vmem:[%s7] sm:$0xff]
          %v4008 = vmul.f32 %v4005, %v4007
          %v4010 = vcombine.high %v4008, %v4008
          %v4012 = vunpack.c.l.s4 1983009808
          %v4013 = vunpack.c.0.s8 %v4012
          %v4014 = vlaneseq
          %v4015 = vshrl.u32 %v4014, 7
          %v4016 = vsub.s32 %v4013, %v4015
          %v4017 = vrot.slane %v4008, %v4016
          %v4019 = vunpack.c.l.s4 1983009808
          %v4020 = vunpack.c.0.s8 %v4019
          %v4021 = vlaneseq
          %v4022 = vshrl.u32 %v4021, 7
          %v4023 = vsub.s32 %v4020, %v4022
          %v4024 = vrot.slane %v4010, %v4023
          %v4025 = vcombine.high %v4017, %v4017
          %v4026 = vcombine.high %v4024, %v4024
          %v4031 = vsel %vm3752, %v4017, 0.0
          %v4032 = vsel %vm3752, %v4025, 0.0
          %v4033 = vadd.f32 %v4031, %v4032
          %v4034 = vsel %vm3752, %v4024, 0.0
          %v4035 = vadd.f32 %v4033, %v4034
          %v4036 = vsel %vm3752, %v4026, 0.0
          %v4037 = vadd.f32 %v4035, %v4036
          %4038 = vadd.xlane.f32.xlu0 %v4037
          %v4039 = vpop.xlane.xlu0 %4038
          %v4040 = vld [vmem:[%s8] sm:$0x3]
          %v4041 = vadd.f32 %v4039, %v4040
          %4042 = vst.msk [vmem:[%s10] sm:$0x3] %vm3781, %v4041
          %v4043 = vsel %vm3781, %v4041, -inf
          %v4044 = vrot.slane %v4043, 4
          %v4045 = vmax.f32 %v4043, %v4044
          %v4046 = vrot.slane %v4045, 2
          %v4047 = vmax.f32 %v4045, %v4046
          %v4048 = vrot.slane %v4047, 1
          %v4049 = vmax.f32 %v4047, %v4048
          %v4050 = vsub.f32 %v4041, %v4049
          %v4051 = vmul.f32 %v4050, 1.442695
          %v4052 = vpow.pop %v4051
          %v4053 = vsel %vm3781, %v4052, 0.0
          %v4054 = vrot.slane %v4053, 4
          %v4055 = vadd.f32 %v4053, %v4054
          %v4056 = vrot.slane %v4055, 2
          %v4057 = vadd.f32 %v4055, %v4056
          %v4058 = vrot.slane %v4057, 1
          %v4059 = vadd.f32 %v4057, %v4058
          %v4060 = vrcp.pop %v4059
          %v4061 = vmul.f32 %v4052, %v4060
          %4062 = vst.msk [vmem:[%s11] sm:$0x3] %vm3781, %v4061
        $region76: #{tpu_custom_call.1} parent=55 // pred_fallthru
          _
        %s4063 = sand.u32 %s234, 1
        %s4064 = scalar_lea.sflag [#allocation7], %s4063
        %s4065 = sand.u32 %s234, 1
        %s4066 = smul.addr %s4065, 4
        %s4067 = scalar_lea.vmem [#allocation11], %s4066
        // Predicated region
        $region77: #{tpu_custom_call.1} parent=55 // pred_check
          %p4068 = pneg %p244
        $region78: #{tpu_custom_call.1} parent=55 // pred_check_branch
          %4070 = sbr.rel (%p4068) target = $region80
        $region79: #{tpu_custom_call.1} parent=55 // pred_region
          %s4071 = smul.u32 2, %s32
          %s4073 = ssub.s32 64, 64
          %4074 = vsyncadd %s4064, %s4073
          %s4075 = smul.addr %s4071, 32
          %s4076 = scalar_lea.hbm %s9, %s4075
          %s4078 = sshll.u32 %s4067, 4
          %s4079 = int_to_ptr.vmem [resolvable:$true] %s4078
          %4081 = dma.vmem_to_hbm [thread:$0]  %s4079, 64, %s4076, %s4064
        $region80: #{tpu_custom_call.1} parent=55 // pred_fallthru
          _
        // Predicated region
        $region81: #{tpu_custom_call.1} parent=55 // pred_check
          %p4082 = pneg %p265
        $region82: #{tpu_custom_call.1} parent=55 // pred_check_branch
          %4084 = sbr.rel (%p4082) target = $region84
        $region83: #{tpu_custom_call.1} parent=55 // pred_region
          _
        $region84: #{tpu_custom_call.1} parent=55 // pred_fallthru
          _
        // Predicated region
        $region85: #{tpu_custom_call.1} parent=55 // pred_check
          %p4085 = pneg %p286
        $region86: #{tpu_custom_call.1} parent=55 // pred_check_branch
          %4087 = sbr.rel (%p4085) target = $region88
        $region87: #{tpu_custom_call.1} parent=55 // pred_region
          _
        $region88: #{tpu_custom_call.1} parent=55 // pred_fallthru
          _
        // Predicated region
        $region89: #{tpu_custom_call.1} parent=55 // pred_check
          %p4088 = pneg %p307
        $region90: #{tpu_custom_call.1} parent=55 // pred_check_branch
          %4090 = sbr.rel (%p4088) target = $region92
        $region91: #{tpu_custom_call.1} parent=55 // pred_region
          %s4092 = ssub.s32 128, 128
          %4093 = vsyncadd [#allocation13], %s4092
          %s4095 = sshll.u32 [#allocation12], 4
          %s4096 = int_to_ptr.vmem [resolvable:$true] %s4095
          %4098 = dma.vmem_to_hbm [thread:$0]  %s4096, 128, %s12, [#allocation13]
        $region92: #{tpu_custom_call.1} parent=55 // pred_fallthru
          _
        // Predicated region
        $region93: #{tpu_custom_call.1} parent=55 // pred_check
          %p4099 = pneg %p265
        $region94: #{tpu_custom_call.1} parent=55 // pred_check_branch
          %4101 = sbr.rel (%p4099) target = $region96
        $region95: #{tpu_custom_call.1} parent=55 // pred_region
          _
        $region96: #{tpu_custom_call.1} parent=55 // pred_fallthru
          _
        // Predicated region
        $region97: #{tpu_custom_call.1} parent=55 // pred_check
          %p4102 = pneg %p286
        $region98: #{tpu_custom_call.1} parent=55 // pred_check_branch
          %4104 = sbr.rel (%p4102) target = $region100
        $region99: #{tpu_custom_call.1} parent=55 // pred_region
          _
        $region100: #{tpu_custom_call.1} parent=55 // pred_fallthru
          _
        // Predicated region
        $region101: #{tpu_custom_call.1} parent=55 // pred_check
          %p4105 = pneg %p307
        $region102: #{tpu_custom_call.1} parent=55 // pred_check_branch
          %4107 = sbr.rel (%p4105) target = $region104
        $region103: #{tpu_custom_call.1} parent=55 // pred_region
          %4108 = dma.done [#allocation13], 128
        $region104: #{tpu_custom_call.1} parent=55 // pred_fallthru
          _
      $region56: #{tpu_custom_call.1} parent=5 // pred_fallthru
        _
      %p4109 = scmp.le.s32.totalorder 2, %s27
      // Predicated region
      $region105: #{tpu_custom_call.1} parent=5 // pred_check
        %p4110 = pneg %p4109
      $region106: #{tpu_custom_call.1} parent=5 // pred_check_branch
        %4112 = sbr.rel (%p4110) target = $region108
      $region107: #{tpu_custom_call.1} parent=5 // pred_region
        %s4113 = ssub.s32 %s27, 2
        // Predicated region
        $region109: #{tpu_custom_call.1} parent=107 // pred_check
          %p4114 = pneg %p250
        $region110: #{tpu_custom_call.1} parent=107 // pred_check_branch
          %4116 = sbr.rel (%p4114) target = $region112
        $region111: #{tpu_custom_call.1} parent=107 // pred_region
          %s4117 = sand.u32 %s235, 1
          %s4118 = scalar_lea.sflag [#allocation7], %s4117
          %s4119 = sand.u32 %s235, 1
          %s4120 = smul.addr %s4119, 4
          %s4121 = scalar_lea.vmem [#allocation11], %s4120
          %4122 = dma.done %s4118, 64
        $region112: #{tpu_custom_call.1} parent=107 // pred_fallthru
          _
      $region108: #{tpu_custom_call.1} parent=5 // pred_fallthru
        _
    $region6: #{tpu_custom_call.1} parent=1 // loop_footer
      %s31 = sadd.s32 1, %s27
    $region7: #{tpu_custom_call.1} parent=1 // loop_footer_branch
      %26 = sbr.rel target = $region3
    $region8: #{tpu_custom_call.1} parent=1 // loop_exit
      _
    %4123 = vsyncpa [#allocation6], 1
    %s4124 = scalar_lea.sflag [#allocation6], 1
    %4125 = vsyncpa %s4124, 1
    %4126 = vsyncpa [#allocation9], 1
    %4127 = vsyncpa [#allocation7], 1
    %s4128 = scalar_lea.sflag [#allocation7], 1
    %4129 = vsyncpa %s4128, 1
    %4130 = vsyncpa [#allocation13], 1

</llo_original>
